<compile_context>
chip_gen: v5e
topology: v5e:2x2
jax: 0.10.0
libtpu: 0.0.40
codegen_flags: <defaults>
</compile_context>

<pallas_src>
import jax
import jax.numpy as jnp
from jax import lax
from jax.experimental import pallas as pl
from jax.experimental.pallas import tpu as pltpu

LRELU_ALPHA = 0.2
KH = KW = 3


# ---------------------------------------------------------------------------
# Fused block kernel:
#   conv3x3 stride-2 (Cin->C1) + LReLU + conv3x3 stride-1 (C1->C2) + LReLU
#   [+ optional fused 1x1 conv (C2->1) + bias, emitted lane-dense]
# ---------------------------------------------------------------------------
def _make_block_kernel(Cin, C1, C2, HoA, WoA, fuse_head, alpha):
    M = HoA * WoA
    twoCin = 2 * Cin

    def lrelu(v):
        return jnp.where(v >= 0.0, v, alpha * v)

    def kernel(*refs):
        if fuse_head:
            (x_ref, wa_ref, ba_ref, wb_ref, bb_ref,
             wh_ref, bh_ref, o_ref, zp0, zp1, xpb) = refs
        else:
            (x_ref, wa_ref, ba_ref, wb_ref, bb_ref,
             o_ref, zp0, zp1, xpb) = refs

        # ------------------------------------------------------------------
        # Stage the block input into two top/left zero-padded VMEM scratches,
        # split by input-row parity (column pairs live in the minor dim):
        #   zp0[a, b, q*Cin+c] = x[2(a-1),   2(b-1)+q, c]   for a,b >= 1
        #   zp1[a, b, q*Cin+c] = x[2(a-1)+1, 2(b-1)+q, c]
        # Only the 1-wide pad border is zeroed; the interior is fully
        # overwritten every grid step.
        # ------------------------------------------------------------------
        for zp in (zp0, zp1):
            zp[0, :, :] = jnp.zeros((WoA + 1, twoCin), jnp.float32)
            zp[:, 0, :] = jnp.zeros((HoA + 1, twoCin), jnp.float32)
        zp0[1:, 1:, :] = x_ref[0, :, 0:WoA, :].astype(jnp.float32)        # even rows
        zp1[1:, 1:, :] = x_ref[0, :, WoA:2 * WoA, :].astype(jnp.float32)  # odd rows

        # ------------------------------------------------------------------
        # conv A: 3x3 / stride 2 / pad 1, as ONE im2col matmul with
        # K = 12*Cin (one phantom tap per kh gets zero weight rows).  All
        # slices are unit-stride: the stride-2 structure is absorbed by the
        # (row-parity scratch, column-pair minor dim) layout.
        # ------------------------------------------------------------------
        row_sel = ((zp1, 0), (zp0, 1), (zp1, 1))   # kh = 0,1,2 -> (parity, row offset)
        pieces_a = []
        for src, rs in row_sel:
            pieces_a.append(src[rs:rs + HoA, 0:WoA, :])       # pair j-1: (phantom, kw=0)
            pieces_a.append(src[rs:rs + HoA, 1:WoA + 1, :])   # pair j  : (kw=1, kw=2)
        slab_a = (jnp.concatenate(pieces_a, axis=-1)
                  .reshape(M, 12 * Cin).astype(jnp.bfloat16))
        ya = jnp.dot(slab_a, wa_ref[...], preferred_element_type=jnp.float32)
        ya = lrelu(ya + ba_ref[...])

        # ------------------------------------------------------------------
        # conv B: 3x3 / stride 1 / pad 1 on the zero-padded intermediate,
        # full 9-tap im2col -> one matmul with K = 9*C1.
        # ------------------------------------------------------------------
        xpb[0, :, :] = jnp.zeros((WoA + 2, C1), jnp.float32)
        xpb[HoA + 1, :, :] = jnp.zeros((WoA + 2, C1), jnp.float32)
        xpb[:, 0, :] = jnp.zeros((HoA + 2, C1), jnp.float32)
        xpb[:, WoA + 1, :] = jnp.zeros((HoA + 2, C1), jnp.float32)
        xpb[1:1 + HoA, 1:1 + WoA, :] = ya.reshape(HoA, WoA, C1)

        pieces_b = [xpb[kh:kh + HoA, kw:kw + WoA, :]
                    for kh in range(KH) for kw in range(KW)]
        slab_b = (jnp.concatenate(pieces_b, axis=-1)
                  .reshape(M, KH * KW * C1).astype(jnp.bfloat16))
        yb = jnp.dot(slab_b, wb_ref[...], preferred_element_type=jnp.float32)
        yb = lrelu(yb + bb_ref[...])

        if fuse_head:
            # 1x1 conv to one channel = VPU multiply + lane reduction, stored
            # lane-dense as (HoA, WoA) (no last-dim-1 masked stores).
            yb3 = yb.reshape(HoA, WoA, C2)
            head = jnp.sum(yb3 * wh_ref[...].reshape(1, 1, C2), axis=-1)
            o_ref[0] = (head + bh_ref[...]).astype(o_ref.dtype)
        else:
            o_ref[0] = yb.reshape(HoA, WoA, C2).astype(o_ref.dtype)

    return kernel


def _fold_stride2_weight(w_hwio):
    """(3,3,Cin,Cout) HWIO -> (12*Cin, Cout) matching the paired im2col slab.

    Per kh the slab holds the channels of columns {2j-2, 2j-1, 2j, 2j+1};
    column 2j-2 is a phantom tap and gets zero weight rows.
    """
    _, _, cin, cout = w_hwio.shape
    zero = jnp.zeros((cin, cout), w_hwio.dtype)
    rows = []
    for kh in range(KH):
        rows.extend([zero, w_hwio[kh, 0], w_hwio[kh, 1], w_hwio[kh, 2]])
    return jnp.concatenate(rows, axis=0)


def _fused_block(x, wa_hwio, ba, wb_hwio, bb, head=None):
    """x: (N, Hh, Win, 2*Cin) -- the free row-major reshape of an NHWC
    activation (N, 2*Hh, Win, Cin).  Returns:
      blocks 1/2 : (N, Hh, Win//2, C2)  bf16
      block 3    : (N, Hh, Win//2)      f32  (1x1 head fused)
    """
    N, Hh, Win, twoCin = x.shape
    Cin = twoCin // 2
    HoA, WoA = Hh, Win // 2
    C1 = wa_hwio.shape[-1]
    C2 = wb_hwio.shape[-1]
    fuse_head = head is not None

    wa = _fold_stride2_weight(wa_hwio)     # (12*Cin, C1) bf16
    wb = wb_hwio.reshape(-1, C2)           # (9*C1,  C2) bf16

    in_specs = [
        pl.BlockSpec((1, Hh, Win, twoCin), lambda n: (n, 0, 0, 0)),
        pl.BlockSpec((12 * Cin, C1), lambda n: (0, 0)),
        pl.BlockSpec((1, C1), lambda n: (0, 0)),
        pl.BlockSpec((KH * KW * C1, C2), lambda n: (0, 0)),
        pl.BlockSpec((1, C2), lambda n: (0, 0)),
    ]
    inputs = [x, wa, ba, wb, bb]
    if fuse_head:
        wh, bh = head
        in_specs += [pl.BlockSpec((1, C2), lambda n: (0, 0)),
                     pl.BlockSpec((1, 1), lambda n: (0, 0))]
        inputs += [wh, bh]
        out_shape = jax.ShapeDtypeStruct((N, HoA, WoA), jnp.float32)
        out_spec = pl.BlockSpec((1, HoA, WoA), lambda n: (n, 0, 0))
    else:
        out_shape = jax.ShapeDtypeStruct((N, HoA, WoA, C2), jnp.bfloat16)
        out_spec = pl.BlockSpec((1, HoA, WoA, C2), lambda n: (n, 0, 0, 0))

    kernel = _make_block_kernel(Cin, C1, C2, HoA, WoA, fuse_head, LRELU_ALPHA)

    return pl.pallas_call(
        kernel,
        out_shape=out_shape,
        grid=(N,),
        in_specs=in_specs,
        out_specs=out_spec,
        scratch_shapes=[
            pltpu.VMEM((HoA + 1, WoA + 1, 2 * Cin), jnp.float32),  # even-row scratch
            pltpu.VMEM((HoA + 1, WoA + 1, 2 * Cin), jnp.float32),  # odd-row scratch
            pltpu.VMEM((HoA + 2, WoA + 2, C1), jnp.float32),       # padded intermediate
        ],
        compiler_params=pltpu.CompilerParams(
            dimension_semantics=("parallel",),        # batch split across TensorCores
            vmem_limit_bytes=32 * 1024 * 1024),       # headroom above v5e's 16MiB default
    )(*inputs)


# ---------------------------------------------------------------------------
# Parameters (deterministic synthetic init).  Spectral norm = divide by the
# largest singular value of W.view(Cout, -1), estimated by power iteration --
# the weight torch's spectral_norm would feed the conv at eval time.
# ---------------------------------------------------------------------------
def _spectral_normalize(w_oihw, n_iters=8):
    m = w_oihw.reshape(w_oihw.shape[0], -1)
    v = jnp.ones((m.shape[1],), jnp.float32) / jnp.sqrt(float(m.shape[1]))
    u = m @ v
    for _ in range(n_iters):
        u = m @ v
        u = u / (jnp.linalg.norm(u) + 1e-12)
        v = m.T @ u
        v = v / (jnp.linalg.norm(v) + 1e-12)
    sigma = u @ (m @ v)
    return w_oihw / sigma


def _conv_spec_lrelu_params(key, cin, cout, k=3):
    kw_key, kb_key = jax.random.split(key)
    fan_in = float(cin * k * k)
    w = jax.random.normal(kw_key, (cout, cin, k, k), jnp.float32) / jnp.sqrt(fan_in)
    w = _spectral_normalize(w)                              # the "Spec" in ConvSpecLRelu
    w = jnp.transpose(w, (2, 3, 1, 0)).astype(jnp.bfloat16)  # (KH, KW, Cin, Cout) HWIO
    b = 0.01 * jax.random.normal(kb_key, (1, cout), jnp.float32)
    return w, b


def _head_params(key, cin, cout=1):
    kw_key, kb_key = jax.random.split(key)
    w = jax.random.normal(kw_key, (cout, cin), jnp.float32) / jnp.sqrt(float(cin))
    wh = w.reshape(cout, cin)[:1].astype(jnp.float32)        # (1, 128) f32 (VPU head)
    bh = 0.01 * jax.random.normal(kb_key, (1, 1), jnp.float32)
    return wh, bh


def init_params(key, n_channels):
    ks = jax.random.split(key, 7)
    return {
        "b1": _conv_spec_lrelu_params(ks[0], n_channels, 32)
              + _conv_spec_lrelu_params(ks[1], 32, 32),
        "b2": _conv_spec_lrelu_params(ks[2], 32, 64)
              + _conv_spec_lrelu_params(ks[3], 64, 64),
        "b3": _conv_spec_lrelu_params(ks[4], 64, 128)
              + _conv_spec_lrelu_params(ks[5], 128, 128),
        # discriminator.out = Conv2d(128, 1, k=1) -- the module ignores n_classes here.
        "head": _head_params(ks[6], 128, 1),
    }


# ---------------------------------------------------------------------------
# discriminator.forward
# ---------------------------------------------------------------------------
def _pair(t):
    """Free (contiguous) reshape NHWC -> (N, H/2, W, 2C): row parity folded into
    the 3rd-dim halves, column pair folded into the minor dim."""
    n, h, w, c = t.shape
    return t.reshape(n, h // 2, w, 2 * c)


def discriminator_forward(x_nchw, params):
    x = jnp.transpose(x_nchw, (0, 2, 3, 1)).astype(jnp.float32)   # NCHW -> NHWC
    n, h, w, _ = x.shape
    assert h % 8 == 0 and w % 8 == 0, "spatial dims must be divisible by 8"
    x = _fused_block(_pair(x), *params["b1"])                     # (N, H/2, W/2, 32) bf16
    x = _fused_block(_pair(x), *params["b2"])                     # (N, H/4, W/4, 64) bf16
    y = _fused_block(_pair(x), *params["b3"], head=params["head"])  # (N, H/8, W/8) f32
    return y[:, None, :, :]                                       # -> (N, 1, H/8, W/8)


# ---------------------------------------------------------------------------
# Pure-JAX reference (same bf16 rounding points) for a self-check.
# ---------------------------------------------------------------------------
def _reference_forward(x_nchw, params):
    x = jnp.transpose(x_nchw, (0, 2, 3, 1)).astype(jnp.float32)

    def conv(h, w_hwio, b, stride):
        y = lax.conv_general_dilated(
            h.astype(jnp.bfloat16), w_hwio,
            window_strides=(stride, stride), padding=((1, 1), (1, 1)),
            dimension_numbers=("NHWC", "HWIO", "NHWC"),
            preferred_element_type=jnp.float32)
        y = y + b.reshape(1, 1, 1, -1)
        return jnp.where(y >= 0.0, y, LRELU_ALPHA * y)

    for blk in ("b1", "b2", "b3"):
        wa, ba, wb, bb = params[blk]
        x = conv(x, wa, ba, 2)
        x = conv(x, wb, bb, 1)
    wh, bh = params["head"]
    y = jnp.einsum("nhwc,c->nhw", x, wh[0]) + bh[0, 0]
    return y[:, None, :, :]


if __name__ == "__main__":
    key = jax.random.PRNGKey(0)
    pkey, xkey = jax.random.split(key)

    n_channels = 3
    N, H, W = 2, 16, 16

    params = init_params(pkey, n_channels)
    x = jax.random.normal(xkey, (N, n_channels, H, W), jnp.float32)   # NCHW like PyTorch

    y = jax.jit(discriminator_forward)(x, params)
    y = jax.block_until_ready(y)

    assert y.shape == (N, 1, H // 8, W // 8), y.shape
    assert bool(jnp.all(jnp.isfinite(y)))

    y_ref = jax.block_until_ready(jax.jit(_reference_forward)(x, params))
    err = float(jnp.max(jnp.abs(y - y_ref)))
    assert err < 1e-2, f"kernel vs pure-JAX reference mismatch: max abs err = {err}"

    print("KERNEL_OK")
</pallas_src>

<mosaic_0001>
module attributes {stable_mosaic.version = 11 : i64} {
  func.func @kernel(%arg0: i32, %arg1: memref<1x8x16x6xf32, #tpu.memory_space<vmem>>, %arg2: memref<36x32xbf16, #tpu.memory_space<vmem>>, %arg3: memref<1x32xf32, #tpu.memory_space<vmem>>, %arg4: memref<288x32xbf16, #tpu.memory_space<vmem>>, %arg5: memref<1x32xf32, #tpu.memory_space<vmem>>, %arg6: memref<1x8x8x32xbf16, #tpu.memory_space<vmem>>, %arg7: memref<9x9x6xf32, #tpu.memory_space<vmem>>, %arg8: memref<9x9x6xf32, #tpu.memory_space<vmem>>, %arg9: memref<10x10x32xf32, #tpu.memory_space<vmem>>) attributes {dimension_semantics = [#tpu.dimension_semantics<parallel>], iteration_bounds = array<i64: 2>, scalar_prefetch = 0 : i64, scratch_operands = 3 : i64, tpu.core_type = #tpu.core_type<tc>, window_params = [{transform_indices = @transform_0, window_bounds = array<i64: 1, 8, 16, 6>}, {pipeline_mode = #tpu.pipeline_mode<synchronous>, transform_indices = @transform_1, window_bounds = array<i64: 36, 32>}, {pipeline_mode = #tpu.pipeline_mode<synchronous>, transform_indices = @transform_2, window_bounds = array<i64: 1, 32>}, {pipeline_mode = #tpu.pipeline_mode<synchronous>, transform_indices = @transform_3, window_bounds = array<i64: 288, 32>}, {pipeline_mode = #tpu.pipeline_mode<synchronous>, transform_indices = @transform_4, window_bounds = array<i64: 1, 32>}, {transform_indices = @transform_5, window_bounds = array<i64: 1, 8, 8, 32>}]} {
    %cst = arith.constant 0.000000e+00 : f32
    %0 = vector.broadcast %cst : f32 to vector<9x6xf32>
    %c0 = arith.constant 0 : index
    %c0_0 = arith.constant 0 : index
    %c0_1 = arith.constant 0 : index
    %1 = vector.load %arg7[%c0, %c0_0, %c0_1] : memref<9x9x6xf32, #tpu.memory_space<vmem>>, vector<1x9x6xf32>
    %2 = vector.shape_cast %1 : vector<1x9x6xf32> to vector<9x6xf32>
    %3 = vector.shape_cast %0 : vector<9x6xf32> to vector<1x9x6xf32>
    tpu.vector_store %arg7[%c0, %c0_0, %c0_1], %3 {strides = array<i32>} : memref<9x9x6xf32, #tpu.memory_space<vmem>>, vector<1x9x6xf32>,
    %cst_2 = arith.constant 0.000000e+00 : f32
    %4 = vector.broadcast %cst_2 : f32 to vector<9x6xf32>
    %c0_3 = arith.constant 0 : index
    %c0_4 = arith.constant 0 : index
    %c0_5 = arith.constant 0 : index
    %5 = vector.load %arg7[%c0_3, %c0_4, %c0_5] : memref<9x9x6xf32, #tpu.memory_space<vmem>>, vector<9x1x6xf32>
    %6 = vector.shape_cast %5 : vector<9x1x6xf32> to vector<9x6xf32>
    %7 = vector.shape_cast %4 : vector<9x6xf32> to vector<9x1x6xf32>
    tpu.vector_store %arg7[%c0_3, %c0_4, %c0_5], %7 {strides = array<i32>} : memref<9x9x6xf32, #tpu.memory_space<vmem>>, vector<9x1x6xf32>,
    %cst_6 = arith.constant 0.000000e+00 : f32
    %8 = vector.broadcast %cst_6 : f32 to vector<9x6xf32>
    %c0_7 = arith.constant 0 : index
    %c0_8 = arith.constant 0 : index
    %c0_9 = arith.constant 0 : index
    %9 = vector.load %arg8[%c0_7, %c0_8, %c0_9] : memref<9x9x6xf32, #tpu.memory_space<vmem>>, vector<1x9x6xf32>
    %10 = vector.shape_cast %9 : vector<1x9x6xf32> to vector<9x6xf32>
    %11 = vector.shape_cast %8 : vector<9x6xf32> to vector<1x9x6xf32>
    tpu.vector_store %arg8[%c0_7, %c0_8, %c0_9], %11 {strides = array<i32>} : memref<9x9x6xf32, #tpu.memory_space<vmem>>, vector<1x9x6xf32>,
    %cst_10 = arith.constant 0.000000e+00 : f32
    %12 = vector.broadcast %cst_10 : f32 to vector<9x6xf32>
    %c0_11 = arith.constant 0 : index
    %c0_12 = arith.constant 0 : index
    %c0_13 = arith.constant 0 : index
    %13 = vector.load %arg8[%c0_11, %c0_12, %c0_13] : memref<9x9x6xf32, #tpu.memory_space<vmem>>, vector<9x1x6xf32>
    %14 = vector.shape_cast %13 : vector<9x1x6xf32> to vector<9x6xf32>
    %15 = vector.shape_cast %12 : vector<9x6xf32> to vector<9x1x6xf32>
    tpu.vector_store %arg8[%c0_11, %c0_12, %c0_13], %15 {strides = array<i32>} : memref<9x9x6xf32, #tpu.memory_space<vmem>>, vector<9x1x6xf32>,
    %c0_14 = arith.constant 0 : index
    %c0_15 = arith.constant 0 : index
    %c0_16 = arith.constant 0 : index
    %c0_17 = arith.constant 0 : index
    %16 = vector.load %arg1[%c0_14, %c0_15, %c0_16, %c0_17] : memref<1x8x16x6xf32, #tpu.memory_space<vmem>>, vector<1x8x8x6xf32>
    %17 = vector.shape_cast %16 : vector<1x8x8x6xf32> to vector<8x8x6xf32>
    %c1 = arith.constant 1 : index
    %c1_18 = arith.constant 1 : index
    %c0_19 = arith.constant 0 : index
    %18 = vector.load %arg7[%c1, %c1_18, %c0_19] : memref<9x9x6xf32, #tpu.memory_space<vmem>>, vector<8x8x6xf32>
    tpu.vector_store %arg7[%c1, %c1_18, %c0_19], %17 {strides = array<i32>} : memref<9x9x6xf32, #tpu.memory_space<vmem>>, vector<8x8x6xf32>,
    %c0_20 = arith.constant 0 : index
    %c0_21 = arith.constant 0 : index
    %c8 = arith.constant 8 : index
    %c0_22 = arith.constant 0 : index
    %19 = vector.load %arg1[%c0_20, %c0_21, %c8, %c0_22] : memref<1x8x16x6xf32, #tpu.memory_space<vmem>>, vector<1x8x8x6xf32>
    %20 = vector.shape_cast %19 : vector<1x8x8x6xf32> to vector<8x8x6xf32>
    %c1_23 = arith.constant 1 : index
    %c1_24 = arith.constant 1 : index
    %c0_25 = arith.constant 0 : index
    %21 = vector.load %arg8[%c1_23, %c1_24, %c0_25] : memref<9x9x6xf32, #tpu.memory_space<vmem>>, vector<8x8x6xf32>
    tpu.vector_store %arg8[%c1_23, %c1_24, %c0_25], %20 {strides = array<i32>} : memref<9x9x6xf32, #tpu.memory_space<vmem>>, vector<8x8x6xf32>,
    %c0_26 = arith.constant 0 : index
    %c0_27 = arith.constant 0 : index
    %c0_28 = arith.constant 0 : index
    %22 = vector.load %arg8[%c0_26, %c0_27, %c0_28] : memref<9x9x6xf32, #tpu.memory_space<vmem>>, vector<8x8x6xf32>
    %c0_29 = arith.constant 0 : index
    %c1_30 = arith.constant 1 : index
    %c0_31 = arith.constant 0 : index
    %23 = vector.load %arg8[%c0_29, %c1_30, %c0_31] : memref<9x9x6xf32, #tpu.memory_space<vmem>>, vector<8x8x6xf32>
    %c1_32 = arith.constant 1 : index
    %c0_33 = arith.constant 0 : index
    %c0_34 = arith.constant 0 : index
    %24 = vector.load %arg7[%c1_32, %c0_33, %c0_34] : memref<9x9x6xf32, #tpu.memory_space<vmem>>, vector<8x8x6xf32>
    %c1_35 = arith.constant 1 : index
    %c1_36 = arith.constant 1 : index
    %c0_37 = arith.constant 0 : index
    %25 = vector.load %arg7[%c1_35, %c1_36, %c0_37] : memref<9x9x6xf32, #tpu.memory_space<vmem>>, vector<8x8x6xf32>
    %c1_38 = arith.constant 1 : index
    %c0_39 = arith.constant 0 : index
    %c0_40 = arith.constant 0 : index
    %26 = vector.load %arg8[%c1_38, %c0_39, %c0_40] : memref<9x9x6xf32, #tpu.memory_space<vmem>>, vector<8x8x6xf32>
    %c1_41 = arith.constant 1 : index
    %c1_42 = arith.constant 1 : index
    %c0_43 = arith.constant 0 : index
    %27 = vector.load %arg8[%c1_41, %c1_42, %c0_43] : memref<9x9x6xf32, #tpu.memory_space<vmem>>, vector<8x8x6xf32>
    %28 = tpu.concatenate %22, %23, %24, %25, %26, %27 in 2 : vector<8x8x6xf32>, vector<8x8x6xf32>, vector<8x8x6xf32>, vector<8x8x6xf32>, vector<8x8x6xf32>, vector<8x8x6xf32> -> vector<8x8x36xf32>
    %29 = vector.shape_cast %28 : vector<8x8x36xf32> to vector<64x36xf32>
    %30 = arith.truncf %29 : vector<64x36xf32> to vector<64x36xbf16>
    %c0_44 = arith.constant 0 : index
    %c0_45 = arith.constant 0 : index
    %31 = vector.load %arg2[%c0_44, %c0_45] : memref<36x32xbf16, #tpu.memory_space<vmem>>, vector<36x32xbf16>
    %cst_46 = arith.constant dense<0.000000e+00> : vector<64x32xf32>
    %32 = tpu.matmul %30, %31, %cst_46 {dimension_numbers = #tpu.dot_dimension_numbers<[1], [0], [0], [1], [0, 0, 1, 1], [], []>} : vector<64x36xbf16>, vector<36x32xbf16>, vector<64x32xf32> -> vector<64x32xf32>
    %c0_47 = arith.constant 0 : index
    %c0_48 = arith.constant 0 : index
    %33 = vector.load %arg3[%c0_47, %c0_48] : memref<1x32xf32, #tpu.memory_space<vmem>>, vector<1x32xf32>
    %34 = vector.broadcast %33 : vector<1x32xf32> to vector<64x32xf32>
    %35 = arith.addf %32, %34 : vector<64x32xf32>
    %cst_49 = arith.constant 0.000000e+00 : f32
    %36 = vector.broadcast %cst_49 : f32 to vector<64x32xf32>
    %37 = arith.cmpf oge, %35, %36 : vector<64x32xf32>
    %cst_50 = arith.constant 2.000000e-01 : f32
    %38 = vector.broadcast %cst_50 : f32 to vector<64x32xf32>
    %39 = arith.mulf %38, %35 : vector<64x32xf32>
    %40 = arith.select %37, %35, %39 : vector<64x32xi1>, vector<64x32xf32>
    %cst_51 = arith.constant 0.000000e+00 : f32
    %41 = vector.broadcast %cst_51 : f32 to vector<10x32xf32>
    %c0_52 = arith.constant 0 : index
    %c0_53 = arith.constant 0 : index
    %c0_54 = arith.constant 0 : index
    %42 = vector.load %arg9[%c0_52, %c0_53, %c0_54] : memref<10x10x32xf32, #tpu.memory_space<vmem>>, vector<1x10x32xf32>
    %43 = vector.shape_cast %42 : vector<1x10x32xf32> to vector<10x32xf32>
    %44 = vector.shape_cast %41 : vector<10x32xf32> to vector<1x10x32xf32>
    tpu.vector_store %arg9[%c0_52, %c0_53, %c0_54], %44 {strides = array<i32>} : memref<10x10x32xf32, #tpu.memory_space<vmem>>, vector<1x10x32xf32>,
    %cst_55 = arith.constant 0.000000e+00 : f32
    %45 = vector.broadcast %cst_55 : f32 to vector<10x32xf32>
    %c9 = arith.constant 9 : index
    %c0_56 = arith.constant 0 : index
    %c0_57 = arith.constant 0 : index
    %46 = vector.load %arg9[%c9, %c0_56, %c0_57] : memref<10x10x32xf32, #tpu.memory_space<vmem>>, vector<1x10x32xf32>
    %47 = vector.shape_cast %46 : vector<1x10x32xf32> to vector<10x32xf32>
    %48 = vector.shape_cast %45 : vector<10x32xf32> to vector<1x10x32xf32>
    tpu.vector_store %arg9[%c9, %c0_56, %c0_57], %48 {strides = array<i32>} : memref<10x10x32xf32, #tpu.memory_space<vmem>>, vector<1x10x32xf32>,
    %cst_58 = arith.constant 0.000000e+00 : f32
    %49 = vector.broadcast %cst_58 : f32 to vector<10x32xf32>
    %c0_59 = arith.constant 0 : index
    %c0_60 = arith.constant 0 : index
    %c0_61 = arith.constant 0 : index
    %50 = vector.load %arg9[%c0_59, %c0_60, %c0_61] : memref<10x10x32xf32, #tpu.memory_space<vmem>>, vector<10x1x32xf32>
    %51 = vector.shape_cast %50 : vector<10x1x32xf32> to vector<10x32xf32>
    %52 = vector.shape_cast %49 : vector<10x32xf32> to vector<10x1x32xf32>
    tpu.vector_store %arg9[%c0_59, %c0_60, %c0_61], %52 {strides = array<i32>} : memref<10x10x32xf32, #tpu.memory_space<vmem>>, vector<10x1x32xf32>,
    %cst_62 = arith.constant 0.000000e+00 : f32
    %53 = vector.broadcast %cst_62 : f32 to vector<10x32xf32>
    %c0_63 = arith.constant 0 : index
    %c9_64 = arith.constant 9 : index
    %c0_65 = arith.constant 0 : index
    %54 = vector.load %arg9[%c0_63, %c9_64, %c0_65] : memref<10x10x32xf32, #tpu.memory_space<vmem>>, vector<10x1x32xf32>
    %55 = vector.shape_cast %54 : vector<10x1x32xf32> to vector<10x32xf32>
    %56 = vector.shape_cast %53 : vector<10x32xf32> to vector<10x1x32xf32>
    tpu.vector_store %arg9[%c0_63, %c9_64, %c0_65], %56 {strides = array<i32>} : memref<10x10x32xf32, #tpu.memory_space<vmem>>, vector<10x1x32xf32>,
    %57 = vector.shape_cast %40 : vector<64x32xf32> to vector<8x8x32xf32>
    %c1_66 = arith.constant 1 : index
    %c1_67 = arith.constant 1 : index
    %c0_68 = arith.constant 0 : index
    %58 = vector.load %arg9[%c1_66, %c1_67, %c0_68] : memref<10x10x32xf32, #tpu.memory_space<vmem>>, vector<8x8x32xf32>
    tpu.vector_store %arg9[%c1_66, %c1_67, %c0_68], %57 {strides = array<i32>} : memref<10x10x32xf32, #tpu.memory_space<vmem>>, vector<8x8x32xf32>,
    %c0_69 = arith.constant 0 : index
    %c0_70 = arith.constant 0 : index
    %c0_71 = arith.constant 0 : index
    %59 = vector.load %arg9[%c0_69, %c0_70, %c0_71] : memref<10x10x32xf32, #tpu.memory_space<vmem>>, vector<8x8x32xf32>
    %c0_72 = arith.constant 0 : index
    %c1_73 = arith.constant 1 : index
    %c0_74 = arith.constant 0 : index
    %60 = vector.load %arg9[%c0_72, %c1_73, %c0_74] : memref<10x10x32xf32, #tpu.memory_space<vmem>>, vector<8x8x32xf32>
    %c0_75 = arith.constant 0 : index
    %c2 = arith.constant 2 : index
    %c0_76 = arith.constant 0 : index
    %61 = vector.load %arg9[%c0_75, %c2, %c0_76] : memref<10x10x32xf32, #tpu.memory_space<vmem>>, vector<8x8x32xf32>
    %c1_77 = arith.constant 1 : index
    %c0_78 = arith.constant 0 : index
    %c0_79 = arith.constant 0 : index
    %62 = vector.load %arg9[%c1_77, %c0_78, %c0_79] : memref<10x10x32xf32, #tpu.memory_space<vmem>>, vector<8x8x32xf32>
    %c1_80 = arith.constant 1 : index
    %c1_81 = arith.constant 1 : index
    %c0_82 = arith.constant 0 : index
    %63 = vector.load %arg9[%c1_80, %c1_81, %c0_82] : memref<10x10x32xf32, #tpu.memory_space<vmem>>, vector<8x8x32xf32>
    %c1_83 = arith.constant 1 : index
    %c2_84 = arith.constant 2 : index
    %c0_85 = arith.constant 0 : index
    %64 = vector.load %arg9[%c1_83, %c2_84, %c0_85] : memref<10x10x32xf32, #tpu.memory_space<vmem>>, vector<8x8x32xf32>
    %c2_86 = arith.constant 2 : index
    %c0_87 = arith.constant 0 : index
    %c0_88 = arith.constant 0 : index
    %65 = vector.load %arg9[%c2_86, %c0_87, %c0_88] : memref<10x10x32xf32, #tpu.memory_space<vmem>>, vector<8x8x32xf32>
    %c2_89 = arith.constant 2 : index
    %c1_90 = arith.constant 1 : index
    %c0_91 = arith.constant 0 : index
    %66 = vector.load %arg9[%c2_89, %c1_90, %c0_91] : memref<10x10x32xf32, #tpu.memory_space<vmem>>, vector<8x8x32xf32>
    %c2_92 = arith.constant 2 : index
    %c2_93 = arith.constant 2 : index
    %c0_94 = arith.constant 0 : index
    %67 = vector.load %arg9[%c2_92, %c2_93, %c0_94] : memref<10x10x32xf32, #tpu.memory_space<vmem>>, vector<8x8x32xf32>
    %68 = tpu.concatenate %59, %60, %61, %62, %63, %64, %65, %66, %67 in 2 : vector<8x8x32xf32>, vector<8x8x32xf32>, vector<8x8x32xf32>, vector<8x8x32xf32>, vector<8x8x32xf32>, vector<8x8x32xf32>, vector<8x8x32xf32>, vector<8x8x32xf32>, vector<8x8x32xf32> -> vector<8x8x288xf32>
    %69 = vector.shape_cast %68 : vector<8x8x288xf32> to vector<64x288xf32>
    %70 = arith.truncf %69 : vector<64x288xf32> to vector<64x288xbf16>
    %c0_95 = arith.constant 0 : index
    %c0_96 = arith.constant 0 : index
    %71 = vector.load %arg4[%c0_95, %c0_96] : memref<288x32xbf16, #tpu.memory_space<vmem>>, vector<288x32xbf16>
    %cst_97 = arith.constant dense<0.000000e+00> : vector<64x32xf32>
    %72 = tpu.matmul %70, %71, %cst_97 {dimension_numbers = #tpu.dot_dimension_numbers<[1], [0], [0], [1], [0, 0, 1, 1], [], []>} : vector<64x288xbf16>, vector<288x32xbf16>, vector<64x32xf32> -> vector<64x32xf32>
    %c0_98 = arith.constant 0 : index
    %c0_99 = arith.constant 0 : index
    %73 = vector.load %arg5[%c0_98, %c0_99] : memref<1x32xf32, #tpu.memory_space<vmem>>, vector<1x32xf32>
    %74 = vector.broadcast %73 : vector<1x32xf32> to vector<64x32xf32>
    %75 = arith.addf %72, %74 : vector<64x32xf32>
    %cst_100 = arith.constant 0.000000e+00 : f32
    %76 = vector.broadcast %cst_100 : f32 to vector<64x32xf32>
    %77 = arith.cmpf oge, %75, %76 : vector<64x32xf32>
    %cst_101 = arith.constant 2.000000e-01 : f32
    %78 = vector.broadcast %cst_101 : f32 to vector<64x32xf32>
    %79 = arith.mulf %78, %75 : vector<64x32xf32>
    %80 = arith.select %77, %75, %79 : vector<64x32xi1>, vector<64x32xf32>
    %81 = vector.shape_cast %80 : vector<64x32xf32> to vector<8x8x32xf32>
    %82 = arith.truncf %81 : vector<8x8x32xf32> to vector<8x8x32xbf16>
    %c0_102 = arith.constant 0 : index
    %c0_103 = arith.constant 0 : index
    %c0_104 = arith.constant 0 : index
    %c0_105 = arith.constant 0 : index
    %83 = vector.load %arg6[%c0_102, %c0_103, %c0_104, %c0_105] : memref<1x8x8x32xbf16, #tpu.memory_space<vmem>>, vector<1x8x8x32xbf16>
    %84 = vector.shape_cast %83 : vector<1x8x8x32xbf16> to vector<8x8x32xbf16>
    %85 = vector.shape_cast %82 : vector<8x8x32xbf16> to vector<1x8x8x32xbf16>
    tpu.vector_store %arg6[%c0_102, %c0_103, %c0_104, %c0_105], %85 {strides = array<i32>} : memref<1x8x8x32xbf16, #tpu.memory_space<vmem>>, vector<1x8x8x32xbf16>,
    return
  }
  func.func @transform_0(%arg0: i32) -> (i32, i32, i32, i32) {
    %c0_i32 = arith.constant 0 : i32
    %c0_i32_0 = arith.constant 0 : i32
    %c0_i32_1 = arith.constant 0 : i32
    %c0_i32_2 = arith.constant 0 : i32
    return %arg0, %c0_i32, %c0_i32_0, %c0_i32_1 : i32, i32, i32, i32
  }
  func.func @transform_1(%arg0: i32) -> (i32, i32) {
    %c0_i32 = arith.constant 0 : i32
    %c0_i32_0 = arith.constant 0 : i32
    %c0_i32_1 = arith.constant 0 : i32
    return %c0_i32, %c0_i32_0 : i32, i32
  }
  func.func @transform_2(%arg0: i32) -> (i32, i32) {
    %c0_i32 = arith.constant 0 : i32
    %c0_i32_0 = arith.constant 0 : i32
    %c0_i32_1 = arith.constant 0 : i32
    return %c0_i32, %c0_i32_0 : i32, i32
  }
  func.func @transform_3(%arg0: i32) -> (i32, i32) {
    %c0_i32 = arith.constant 0 : i32
    %c0_i32_0 = arith.constant 0 : i32
    %c0_i32_1 = arith.constant 0 : i32
    return %c0_i32, %c0_i32_0 : i32, i32
  }
  func.func @transform_4(%arg0: i32) -> (i32, i32) {
    %c0_i32 = arith.constant 0 : i32
    %c0_i32_0 = arith.constant 0 : i32
    %c0_i32_1 = arith.constant 0 : i32
    return %c0_i32, %c0_i32_0 : i32, i32
  }
  func.func @transform_5(%arg0: i32) -> (i32, i32, i32, i32) {
    %c0_i32 = arith.constant 0 : i32
    %c0_i32_0 = arith.constant 0 : i32
    %c0_i32_1 = arith.constant 0 : i32
    %c0_i32_2 = arith.constant 0 : i32
    return %arg0, %c0_i32, %c0_i32_0, %c0_i32_1 : i32, i32, i32, i32
  }
}

module attributes {stable_mosaic.version = 11 : i64} {
  func.func @kernel(%arg0: i32, %arg1: memref<1x4x8x64xbf16, #tpu.memory_space<vmem>>, %arg2: memref<384x64xbf16, #tpu.memory_space<vmem>>, %arg3: memref<1x64xf32, #tpu.memory_space<vmem>>, %arg4: memref<576x64xbf16, #tpu.memory_space<vmem>>, %arg5: memref<1x64xf32, #tpu.memory_space<vmem>>, %arg6: memref<1x4x4x64xbf16, #tpu.memory_space<vmem>>, %arg7: memref<5x5x64xf32, #tpu.memory_space<vmem>>, %arg8: memref<5x5x64xf32, #tpu.memory_space<vmem>>, %arg9: memref<6x6x64xf32, #tpu.memory_space<vmem>>) attributes {dimension_semantics = [#tpu.dimension_semantics<parallel>], iteration_bounds = array<i64: 2>, scalar_prefetch = 0 : i64, scratch_operands = 3 : i64, tpu.core_type = #tpu.core_type<tc>, window_params = [{transform_indices = @transform_0, window_bounds = array<i64: 1, 4, 8, 64>}, {pipeline_mode = #tpu.pipeline_mode<synchronous>, transform_indices = @transform_1, window_bounds = array<i64: 384, 64>}, {pipeline_mode = #tpu.pipeline_mode<synchronous>, transform_indices = @transform_2, window_bounds = array<i64: 1, 64>}, {pipeline_mode = #tpu.pipeline_mode<synchronous>, transform_indices = @transform_3, window_bounds = array<i64: 576, 64>}, {pipeline_mode = #tpu.pipeline_mode<synchronous>, transform_indices = @transform_4, window_bounds = array<i64: 1, 64>}, {transform_indices = @transform_5, window_bounds = array<i64: 1, 4, 4, 64>}]} {
    %cst = arith.constant 0.000000e+00 : f32
    %0 = vector.broadcast %cst : f32 to vector<5x64xf32>
    %c0 = arith.constant 0 : index
    %c0_0 = arith.constant 0 : index
    %c0_1 = arith.constant 0 : index
    %1 = vector.load %arg7[%c0, %c0_0, %c0_1] : memref<5x5x64xf32, #tpu.memory_space<vmem>>, vector<1x5x64xf32>
    %2 = vector.shape_cast %1 : vector<1x5x64xf32> to vector<5x64xf32>
    %3 = vector.shape_cast %0 : vector<5x64xf32> to vector<1x5x64xf32>
    tpu.vector_store %arg7[%c0, %c0_0, %c0_1], %3 {strides = array<i32>} : memref<5x5x64xf32, #tpu.memory_space<vmem>>, vector<1x5x64xf32>,
    %cst_2 = arith.constant 0.000000e+00 : f32
    %4 = vector.broadcast %cst_2 : f32 to vector<5x64xf32>
    %c0_3 = arith.constant 0 : index
    %c0_4 = arith.constant 0 : index
    %c0_5 = arith.constant 0 : index
    %5 = vector.load %arg7[%c0_3, %c0_4, %c0_5] : memref<5x5x64xf32, #tpu.memory_space<vmem>>, vector<5x1x64xf32>
    %6 = vector.shape_cast %5 : vector<5x1x64xf32> to vector<5x64xf32>
    %7 = vector.shape_cast %4 : vector<5x64xf32> to vector<5x1x64xf32>
    tpu.vector_store %arg7[%c0_3, %c0_4, %c0_5], %7 {strides = array<i32>} : memref<5x5x64xf32, #tpu.memory_space<vmem>>, vector<5x1x64xf32>,
    %cst_6 = arith.constant 0.000000e+00 : f32
    %8 = vector.broadcast %cst_6 : f32 to vector<5x64xf32>
    %c0_7 = arith.constant 0 : index
    %c0_8 = arith.constant 0 : index
    %c0_9 = arith.constant 0 : index
    %9 = vector.load %arg8[%c0_7, %c0_8, %c0_9] : memref<5x5x64xf32, #tpu.memory_space<vmem>>, vector<1x5x64xf32>
    %10 = vector.shape_cast %9 : vector<1x5x64xf32> to vector<5x64xf32>
    %11 = vector.shape_cast %8 : vector<5x64xf32> to vector<1x5x64xf32>
    tpu.vector_store %arg8[%c0_7, %c0_8, %c0_9], %11 {strides = array<i32>} : memref<5x5x64xf32, #tpu.memory_space<vmem>>, vector<1x5x64xf32>,
    %cst_10 = arith.constant 0.000000e+00 : f32
    %12 = vector.broadcast %cst_10 : f32 to vector<5x64xf32>
    %c0_11 = arith.constant 0 : index
    %c0_12 = arith.constant 0 : index
    %c0_13 = arith.constant 0 : index
    %13 = vector.load %arg8[%c0_11, %c0_12, %c0_13] : memref<5x5x64xf32, #tpu.memory_space<vmem>>, vector<5x1x64xf32>
    %14 = vector.shape_cast %13 : vector<5x1x64xf32> to vector<5x64xf32>
    %15 = vector.shape_cast %12 : vector<5x64xf32> to vector<5x1x64xf32>
    tpu.vector_store %arg8[%c0_11, %c0_12, %c0_13], %15 {strides = array<i32>} : memref<5x5x64xf32, #tpu.memory_space<vmem>>, vector<5x1x64xf32>,
    %c0_14 = arith.constant 0 : index
    %c0_15 = arith.constant 0 : index
    %c0_16 = arith.constant 0 : index
    %c0_17 = arith.constant 0 : index
    %16 = vector.load %arg1[%c0_14, %c0_15, %c0_16, %c0_17] : memref<1x4x8x64xbf16, #tpu.memory_space<vmem>>, vector<1x4x4x64xbf16>
    %17 = vector.shape_cast %16 : vector<1x4x4x64xbf16> to vector<4x4x64xbf16>
    %18 = arith.extf %17 : vector<4x4x64xbf16> to vector<4x4x64xf32>
    %c1 = arith.constant 1 : index
    %c1_18 = arith.constant 1 : index
    %c0_19 = arith.constant 0 : index
    %19 = vector.load %arg7[%c1, %c1_18, %c0_19] : memref<5x5x64xf32, #tpu.memory_space<vmem>>, vector<4x4x64xf32>
    tpu.vector_store %arg7[%c1, %c1_18, %c0_19], %18 {strides = array<i32>} : memref<5x5x64xf32, #tpu.memory_space<vmem>>, vector<4x4x64xf32>,
    %c0_20 = arith.constant 0 : index
    %c0_21 = arith.constant 0 : index
    %c4 = arith.constant 4 : index
    %c0_22 = arith.constant 0 : index
    %20 = vector.load %arg1[%c0_20, %c0_21, %c4, %c0_22] : memref<1x4x8x64xbf16, #tpu.memory_space<vmem>>, vector<1x4x4x64xbf16>
    %21 = vector.shape_cast %20 : vector<1x4x4x64xbf16> to vector<4x4x64xbf16>
    %22 = arith.extf %21 : vector<4x4x64xbf16> to vector<4x4x64xf32>
    %c1_23 = arith.constant 1 : index
    %c1_24 = arith.constant 1 : index
    %c0_25 = arith.constant 0 : index
    %23 = vector.load %arg8[%c1_23, %c1_24, %c0_25] : memref<5x5x64xf32, #tpu.memory_space<vmem>>, vector<4x4x64xf32>
    tpu.vector_store %arg8[%c1_23, %c1_24, %c0_25], %22 {strides = array<i32>} : memref<5x5x64xf32, #tpu.memory_space<vmem>>, vector<4x4x64xf32>,
    %c0_26 = arith.constant 0 : index
    %c0_27 = arith.constant 0 : index
    %c0_28 = arith.constant 0 : index
    %24 = vector.load %arg8[%c0_26, %c0_27, %c0_28] : memref<5x5x64xf32, #tpu.memory_space<vmem>>, vector<4x4x64xf32>
    %c0_29 = arith.constant 0 : index
    %c1_30 = arith.constant 1 : index
    %c0_31 = arith.constant 0 : index
    %25 = vector.load %arg8[%c0_29, %c1_30, %c0_31] : memref<5x5x64xf32, #tpu.memory_space<vmem>>, vector<4x4x64xf32>
    %c1_32 = arith.constant 1 : index
    %c0_33 = arith.constant 0 : index
    %c0_34 = arith.constant 0 : index
    %26 = vector.load %arg7[%c1_32, %c0_33, %c0_34] : memref<5x5x64xf32, #tpu.memory_space<vmem>>, vector<4x4x64xf32>
    %c1_35 = arith.constant 1 : index
    %c1_36 = arith.constant 1 : index
    %c0_37 = arith.constant 0 : index
    %27 = vector.load %arg7[%c1_35, %c1_36, %c0_37] : memref<5x5x64xf32, #tpu.memory_space<vmem>>, vector<4x4x64xf32>
    %c1_38 = arith.constant 1 : index
    %c0_39 = arith.constant 0 : index
    %c0_40 = arith.constant 0 : index
    %28 = vector.load %arg8[%c1_38, %c0_39, %c0_40] : memref<5x5x64xf32, #tpu.memory_space<vmem>>, vector<4x4x64xf32>
    %c1_41 = arith.constant 1 : index
    %c1_42 = arith.constant 1 : index
    %c0_43 = arith.constant 0 : index
    %29 = vector.load %arg8[%c1_41, %c1_42, %c0_43] : memref<5x5x64xf32, #tpu.memory_space<vmem>>, vector<4x4x64xf32>
    %30 = tpu.concatenate %24, %25, %26, %27, %28, %29 in 2 : vector<4x4x64xf32>, vector<4x4x64xf32>, vector<4x4x64xf32>, vector<4x4x64xf32>, vector<4x4x64xf32>, vector<4x4x64xf32> -> vector<4x4x384xf32>
    %31 = vector.shape_cast %30 : vector<4x4x384xf32> to vector<16x384xf32>
    %32 = arith.truncf %31 : vector<16x384xf32> to vector<16x384xbf16>
    %c0_44 = arith.constant 0 : index
    %c0_45 = arith.constant 0 : index
    %33 = vector.load %arg2[%c0_44, %c0_45] : memref<384x64xbf16, #tpu.memory_space<vmem>>, vector<384x64xbf16>
    %cst_46 = arith.constant dense<0.000000e+00> : vector<16x64xf32>
    %34 = tpu.matmul %32, %33, %cst_46 {dimension_numbers = #tpu.dot_dimension_numbers<[1], [0], [0], [1], [0, 0, 1, 1], [], []>} : vector<16x384xbf16>, vector<384x64xbf16>, vector<16x64xf32> -> vector<16x64xf32>
    %c0_47 = arith.constant 0 : index
    %c0_48 = arith.constant 0 : index
    %35 = vector.load %arg3[%c0_47, %c0_48] : memref<1x64xf32, #tpu.memory_space<vmem>>, vector<1x64xf32>
    %36 = vector.broadcast %35 : vector<1x64xf32> to vector<16x64xf32>
    %37 = arith.addf %34, %36 : vector<16x64xf32>
    %cst_49 = arith.constant 0.000000e+00 : f32
    %38 = vector.broadcast %cst_49 : f32 to vector<16x64xf32>
    %39 = arith.cmpf oge, %37, %38 : vector<16x64xf32>
    %cst_50 = arith.constant 2.000000e-01 : f32
    %40 = vector.broadcast %cst_50 : f32 to vector<16x64xf32>
    %41 = arith.mulf %40, %37 : vector<16x64xf32>
    %42 = arith.select %39, %37, %41 : vector<16x64xi1>, vector<16x64xf32>
    %cst_51 = arith.constant 0.000000e+00 : f32
    %43 = vector.broadcast %cst_51 : f32 to vector<6x64xf32>
    %c0_52 = arith.constant 0 : index
    %c0_53 = arith.constant 0 : index
    %c0_54 = arith.constant 0 : index
    %44 = vector.load %arg9[%c0_52, %c0_53, %c0_54] : memref<6x6x64xf32, #tpu.memory_space<vmem>>, vector<1x6x64xf32>
    %45 = vector.shape_cast %44 : vector<1x6x64xf32> to vector<6x64xf32>
    %46 = vector.shape_cast %43 : vector<6x64xf32> to vector<1x6x64xf32>
    tpu.vector_store %arg9[%c0_52, %c0_53, %c0_54], %46 {strides = array<i32>} : memref<6x6x64xf32, #tpu.memory_space<vmem>>, vector<1x6x64xf32>,
    %cst_55 = arith.constant 0.000000e+00 : f32
    %47 = vector.broadcast %cst_55 : f32 to vector<6x64xf32>
    %c5 = arith.constant 5 : index
    %c0_56 = arith.constant 0 : index
    %c0_57 = arith.constant 0 : index
    %48 = vector.load %arg9[%c5, %c0_56, %c0_57] : memref<6x6x64xf32, #tpu.memory_space<vmem>>, vector<1x6x64xf32>
    %49 = vector.shape_cast %48 : vector<1x6x64xf32> to vector<6x64xf32>
    %50 = vector.shape_cast %47 : vector<6x64xf32> to vector<1x6x64xf32>
    tpu.vector_store %arg9[%c5, %c0_56, %c0_57], %50 {strides = array<i32>} : memref<6x6x64xf32, #tpu.memory_space<vmem>>, vector<1x6x64xf32>,
    %cst_58 = arith.constant 0.000000e+00 : f32
    %51 = vector.broadcast %cst_58 : f32 to vector<6x64xf32>
    %c0_59 = arith.constant 0 : index
    %c0_60 = arith.constant 0 : index
    %c0_61 = arith.constant 0 : index
    %52 = vector.load %arg9[%c0_59, %c0_60, %c0_61] : memref<6x6x64xf32, #tpu.memory_space<vmem>>, vector<6x1x64xf32>
    %53 = vector.shape_cast %52 : vector<6x1x64xf32> to vector<6x64xf32>
    %54 = vector.shape_cast %51 : vector<6x64xf32> to vector<6x1x64xf32>
    tpu.vector_store %arg9[%c0_59, %c0_60, %c0_61], %54 {strides = array<i32>} : memref<6x6x64xf32, #tpu.memory_space<vmem>>, vector<6x1x64xf32>,
    %cst_62 = arith.constant 0.000000e+00 : f32
    %55 = vector.broadcast %cst_62 : f32 to vector<6x64xf32>
    %c0_63 = arith.constant 0 : index
    %c5_64 = arith.constant 5 : index
    %c0_65 = arith.constant 0 : index
    %56 = vector.load %arg9[%c0_63, %c5_64, %c0_65] : memref<6x6x64xf32, #tpu.memory_space<vmem>>, vector<6x1x64xf32>
    %57 = vector.shape_cast %56 : vector<6x1x64xf32> to vector<6x64xf32>
    %58 = vector.shape_cast %55 : vector<6x64xf32> to vector<6x1x64xf32>
    tpu.vector_store %arg9[%c0_63, %c5_64, %c0_65], %58 {strides = array<i32>} : memref<6x6x64xf32, #tpu.memory_space<vmem>>, vector<6x1x64xf32>,
    %59 = vector.shape_cast %42 : vector<16x64xf32> to vector<4x4x64xf32>
    %c1_66 = arith.constant 1 : index
    %c1_67 = arith.constant 1 : index
    %c0_68 = arith.constant 0 : index
    %60 = vector.load %arg9[%c1_66, %c1_67, %c0_68] : memref<6x6x64xf32, #tpu.memory_space<vmem>>, vector<4x4x64xf32>
    tpu.vector_store %arg9[%c1_66, %c1_67, %c0_68], %59 {strides = array<i32>} : memref<6x6x64xf32, #tpu.memory_space<vmem>>, vector<4x4x64xf32>,
    %c0_69 = arith.constant 0 : index
    %c0_70 = arith.constant 0 : index
    %c0_71 = arith.constant 0 : index
    %61 = vector.load %arg9[%c0_69, %c0_70, %c0_71] : memref<6x6x64xf32, #tpu.memory_space<vmem>>, vector<4x4x64xf32>
    %c0_72 = arith.constant 0 : index
    %c1_73 = arith.constant 1 : index
    %c0_74 = arith.constant 0 : index
    %62 = vector.load %arg9[%c0_72, %c1_73, %c0_74] : memref<6x6x64xf32, #tpu.memory_space<vmem>>, vector<4x4x64xf32>
    %c0_75 = arith.constant 0 : index
    %c2 = arith.constant 2 : index
    %c0_76 = arith.constant 0 : index
    %63 = vector.load %arg9[%c0_75, %c2, %c0_76] : memref<6x6x64xf32, #tpu.memory_space<vmem>>, vector<4x4x64xf32>
    %c1_77 = arith.constant 1 : index
    %c0_78 = arith.constant 0 : index
    %c0_79 = arith.constant 0 : index
    %64 = vector.load %arg9[%c1_77, %c0_78, %c0_79] : memref<6x6x64xf32, #tpu.memory_space<vmem>>, vector<4x4x64xf32>
    %c1_80 = arith.constant 1 : index
    %c1_81 = arith.constant 1 : index
    %c0_82 = arith.constant 0 : index
    %65 = vector.load %arg9[%c1_80, %c1_81, %c0_82] : memref<6x6x64xf32, #tpu.memory_space<vmem>>, vector<4x4x64xf32>
    %c1_83 = arith.constant 1 : index
    %c2_84 = arith.constant 2 : index
    %c0_85 = arith.constant 0 : index
    %66 = vector.load %arg9[%c1_83, %c2_84, %c0_85] : memref<6x6x64xf32, #tpu.memory_space<vmem>>, vector<4x4x64xf32>
    %c2_86 = arith.constant 2 : index
    %c0_87 = arith.constant 0 : index
    %c0_88 = arith.constant 0 : index
    %67 = vector.load %arg9[%c2_86, %c0_87, %c0_88] : memref<6x6x64xf32, #tpu.memory_space<vmem>>, vector<4x4x64xf32>
    %c2_89 = arith.constant 2 : index
    %c1_90 = arith.constant 1 : index
    %c0_91 = arith.constant 0 : index
    %68 = vector.load %arg9[%c2_89, %c1_90, %c0_91] : memref<6x6x64xf32, #tpu.memory_space<vmem>>, vector<4x4x64xf32>
    %c2_92 = arith.constant 2 : index
    %c2_93 = arith.constant 2 : index
    %c0_94 = arith.constant 0 : index
    %69 = vector.load %arg9[%c2_92, %c2_93, %c0_94] : memref<6x6x64xf32, #tpu.memory_space<vmem>>, vector<4x4x64xf32>
    %70 = tpu.concatenate %61, %62, %63, %64, %65, %66, %67, %68, %69 in 2 : vector<4x4x64xf32>, vector<4x4x64xf32>, vector<4x4x64xf32>, vector<4x4x64xf32>, vector<4x4x64xf32>, vector<4x4x64xf32>, vector<4x4x64xf32>, vector<4x4x64xf32>, vector<4x4x64xf32> -> vector<4x4x576xf32>
    %71 = vector.shape_cast %70 : vector<4x4x576xf32> to vector<16x576xf32>
    %72 = arith.truncf %71 : vector<16x576xf32> to vector<16x576xbf16>
    %c0_95 = arith.constant 0 : index
    %c0_96 = arith.constant 0 : index
    %73 = vector.load %arg4[%c0_95, %c0_96] : memref<576x64xbf16, #tpu.memory_space<vmem>>, vector<576x64xbf16>
    %cst_97 = arith.constant dense<0.000000e+00> : vector<16x64xf32>
    %74 = tpu.matmul %72, %73, %cst_97 {dimension_numbers = #tpu.dot_dimension_numbers<[1], [0], [0], [1], [0, 0, 1, 1], [], []>} : vector<16x576xbf16>, vector<576x64xbf16>, vector<16x64xf32> -> vector<16x64xf32>
    %c0_98 = arith.constant 0 : index
    %c0_99 = arith.constant 0 : index
    %75 = vector.load %arg5[%c0_98, %c0_99] : memref<1x64xf32, #tpu.memory_space<vmem>>, vector<1x64xf32>
    %76 = vector.broadcast %75 : vector<1x64xf32> to vector<16x64xf32>
    %77 = arith.addf %74, %76 : vector<16x64xf32>
    %cst_100 = arith.constant 0.000000e+00 : f32
    %78 = vector.broadcast %cst_100 : f32 to vector<16x64xf32>
    %79 = arith.cmpf oge, %77, %78 : vector<16x64xf32>
    %cst_101 = arith.constant 2.000000e-01 : f32
    %80 = vector.broadcast %cst_101 : f32 to vector<16x64xf32>
    %81 = arith.mulf %80, %77 : vector<16x64xf32>
    %82 = arith.select %79, %77, %81 : vector<16x64xi1>, vector<16x64xf32>
    %83 = vector.shape_cast %82 : vector<16x64xf32> to vector<4x4x64xf32>
    %84 = arith.truncf %83 : vector<4x4x64xf32> to vector<4x4x64xbf16>
    %c0_102 = arith.constant 0 : index
    %c0_103 = arith.constant 0 : index
    %c0_104 = arith.constant 0 : index
    %c0_105 = arith.constant 0 : index
    %85 = vector.load %arg6[%c0_102, %c0_103, %c0_104, %c0_105] : memref<1x4x4x64xbf16, #tpu.memory_space<vmem>>, vector<1x4x4x64xbf16>
    %86 = vector.shape_cast %85 : vector<1x4x4x64xbf16> to vector<4x4x64xbf16>
    %87 = vector.shape_cast %84 : vector<4x4x64xbf16> to vector<1x4x4x64xbf16>
    tpu.vector_store %arg6[%c0_102, %c0_103, %c0_104, %c0_105], %87 {strides = array<i32>} : memref<1x4x4x64xbf16, #tpu.memory_space<vmem>>, vector<1x4x4x64xbf16>,
    return
  }
  func.func @transform_0(%arg0: i32) -> (i32, i32, i32, i32) {
    %c0_i32 = arith.constant 0 : i32
    %c0_i32_0 = arith.constant 0 : i32
    %c0_i32_1 = arith.constant 0 : i32
    %c0_i32_2 = arith.constant 0 : i32
    return %arg0, %c0_i32, %c0_i32_0, %c0_i32_1 : i32, i32, i32, i32
  }
  func.func @transform_1(%arg0: i32) -> (i32, i32) {
    %c0_i32 = arith.constant 0 : i32
    %c0_i32_0 = arith.constant 0 : i32
    %c0_i32_1 = arith.constant 0 : i32
    return %c0_i32, %c0_i32_0 : i32, i32
  }
  func.func @transform_2(%arg0: i32) -> (i32, i32) {
    %c0_i32 = arith.constant 0 : i32
    %c0_i32_0 = arith.constant 0 : i32
    %c0_i32_1 = arith.constant 0 : i32
    return %c0_i32, %c0_i32_0 : i32, i32
  }
  func.func @transform_3(%arg0: i32) -> (i32, i32) {
    %c0_i32 = arith.constant 0 : i32
    %c0_i32_0 = arith.constant 0 : i32
    %c0_i32_1 = arith.constant 0 : i32
    return %c0_i32, %c0_i32_0 : i32, i32
  }
  func.func @transform_4(%arg0: i32) -> (i32, i32) {
    %c0_i32 = arith.constant 0 : i32
    %c0_i32_0 = arith.constant 0 : i32
    %c0_i32_1 = arith.constant 0 : i32
    return %c0_i32, %c0_i32_0 : i32, i32
  }
  func.func @transform_5(%arg0: i32) -> (i32, i32, i32, i32) {
    %c0_i32 = arith.constant 0 : i32
    %c0_i32_0 = arith.constant 0 : i32
    %c0_i32_1 = arith.constant 0 : i32
    %c0_i32_2 = arith.constant 0 : i32
    return %arg0, %c0_i32, %c0_i32_0, %c0_i32_1 : i32, i32, i32, i32
  }
}

module attributes {stable_mosaic.version = 11 : i64} {
  func.func @kernel(%arg0: i32, %arg1: memref<1x2x4x128xbf16, #tpu.memory_space<vmem>>, %arg2: memref<768x128xbf16, #tpu.memory_space<vmem>>, %arg3: memref<1x128xf32, #tpu.memory_space<vmem>>, %arg4: memref<1152x128xbf16, #tpu.memory_space<vmem>>, %arg5: memref<1x128xf32, #tpu.memory_space<vmem>>, %arg6: memref<1x128xf32, #tpu.memory_space<vmem>>, %arg7: memref<1x1xf32, #tpu.memory_space<vmem>>, %arg8: memref<1x2x2xf32, #tpu.memory_space<vmem>>, %arg9: memref<3x3x128xf32, #tpu.memory_space<vmem>>, %arg10: memref<3x3x128xf32, #tpu.memory_space<vmem>>, %arg11: memref<4x4x128xf32, #tpu.memory_space<vmem>>) attributes {dimension_semantics = [#tpu.dimension_semantics<parallel>], iteration_bounds = array<i64: 2>, scalar_prefetch = 0 : i64, scratch_operands = 3 : i64, tpu.core_type = #tpu.core_type<tc>, window_params = [{transform_indices = @transform_0, window_bounds = array<i64: 1, 2, 4, 128>}, {pipeline_mode = #tpu.pipeline_mode<synchronous>, transform_indices = @transform_1, window_bounds = array<i64: 768, 128>}, {pipeline_mode = #tpu.pipeline_mode<synchronous>, transform_indices = @transform_2, window_bounds = array<i64: 1, 128>}, {pipeline_mode = #tpu.pipeline_mode<synchronous>, transform_indices = @transform_3, window_bounds = array<i64: 1152, 128>}, {pipeline_mode = #tpu.pipeline_mode<synchronous>, transform_indices = @transform_4, window_bounds = array<i64: 1, 128>}, {pipeline_mode = #tpu.pipeline_mode<synchronous>, transform_indices = @transform_5, window_bounds = array<i64: 1, 128>}, {pipeline_mode = #tpu.pipeline_mode<synchronous>, transform_indices = @transform_6, window_bounds = array<i64: 1, 1>}, {transform_indices = @transform_7, window_bounds = array<i64: 1, 2, 2>}]} {
    %cst = arith.constant 0.000000e+00 : f32
    %0 = vector.broadcast %cst : f32 to vector<3x128xf32>
    %c0 = arith.constant 0 : index
    %c0_0 = arith.constant 0 : index
    %c0_1 = arith.constant 0 : index
    %1 = vector.load %arg9[%c0, %c0_0, %c0_1] : memref<3x3x128xf32, #tpu.memory_space<vmem>>, vector<1x3x128xf32>
    %2 = vector.shape_cast %1 : vector<1x3x128xf32> to vector<3x128xf32>
    %3 = vector.shape_cast %0 : vector<3x128xf32> to vector<1x3x128xf32>
    tpu.vector_store %arg9[%c0, %c0_0, %c0_1], %3 {strides = array<i32>} : memref<3x3x128xf32, #tpu.memory_space<vmem>>, vector<1x3x128xf32>,
    %cst_2 = arith.constant 0.000000e+00 : f32
    %4 = vector.broadcast %cst_2 : f32 to vector<3x128xf32>
    %c0_3 = arith.constant 0 : index
    %c0_4 = arith.constant 0 : index
    %c0_5 = arith.constant 0 : index
    %5 = vector.load %arg9[%c0_3, %c0_4, %c0_5] : memref<3x3x128xf32, #tpu.memory_space<vmem>>, vector<3x1x128xf32>
    %6 = vector.shape_cast %5 : vector<3x1x128xf32> to vector<3x128xf32>
    %7 = vector.shape_cast %4 : vector<3x128xf32> to vector<3x1x128xf32>
    tpu.vector_store %arg9[%c0_3, %c0_4, %c0_5], %7 {strides = array<i32>} : memref<3x3x128xf32, #tpu.memory_space<vmem>>, vector<3x1x128xf32>,
    %cst_6 = arith.constant 0.000000e+00 : f32
    %8 = vector.broadcast %cst_6 : f32 to vector<3x128xf32>
    %c0_7 = arith.constant 0 : index
    %c0_8 = arith.constant 0 : index
    %c0_9 = arith.constant 0 : index
    %9 = vector.load %arg10[%c0_7, %c0_8, %c0_9] : memref<3x3x128xf32, #tpu.memory_space<vmem>>, vector<1x3x128xf32>
    %10 = vector.shape_cast %9 : vector<1x3x128xf32> to vector<3x128xf32>
    %11 = vector.shape_cast %8 : vector<3x128xf32> to vector<1x3x128xf32>
    tpu.vector_store %arg10[%c0_7, %c0_8, %c0_9], %11 {strides = array<i32>} : memref<3x3x128xf32, #tpu.memory_space<vmem>>, vector<1x3x128xf32>,
    %cst_10 = arith.constant 0.000000e+00 : f32
    %12 = vector.broadcast %cst_10 : f32 to vector<3x128xf32>
    %c0_11 = arith.constant 0 : index
    %c0_12 = arith.constant 0 : index
    %c0_13 = arith.constant 0 : index
    %13 = vector.load %arg10[%c0_11, %c0_12, %c0_13] : memref<3x3x128xf32, #tpu.memory_space<vmem>>, vector<3x1x128xf32>
    %14 = vector.shape_cast %13 : vector<3x1x128xf32> to vector<3x128xf32>
    %15 = vector.shape_cast %12 : vector<3x128xf32> to vector<3x1x128xf32>
    tpu.vector_store %arg10[%c0_11, %c0_12, %c0_13], %15 {strides = array<i32>} : memref<3x3x128xf32, #tpu.memory_space<vmem>>, vector<3x1x128xf32>,
    %c0_14 = arith.constant 0 : index
    %c0_15 = arith.constant 0 : index
    %c0_16 = arith.constant 0 : index
    %c0_17 = arith.constant 0 : index
    %16 = vector.load %arg1[%c0_14, %c0_15, %c0_16, %c0_17] : memref<1x2x4x128xbf16, #tpu.memory_space<vmem>>, vector<1x2x2x128xbf16>
    %17 = vector.shape_cast %16 : vector<1x2x2x128xbf16> to vector<2x2x128xbf16>
    %18 = arith.extf %17 : vector<2x2x128xbf16> to vector<2x2x128xf32>
    %c1 = arith.constant 1 : index
    %c1_18 = arith.constant 1 : index
    %c0_19 = arith.constant 0 : index
    %19 = vector.load %arg9[%c1, %c1_18, %c0_19] : memref<3x3x128xf32, #tpu.memory_space<vmem>>, vector<2x2x128xf32>
    tpu.vector_store %arg9[%c1, %c1_18, %c0_19], %18 {strides = array<i32>} : memref<3x3x128xf32, #tpu.memory_space<vmem>>, vector<2x2x128xf32>,
    %c0_20 = arith.constant 0 : index
    %c0_21 = arith.constant 0 : index
    %c2 = arith.constant 2 : index
    %c0_22 = arith.constant 0 : index
    %20 = vector.load %arg1[%c0_20, %c0_21, %c2, %c0_22] : memref<1x2x4x128xbf16, #tpu.memory_space<vmem>>, vector<1x2x2x128xbf16>
    %21 = vector.shape_cast %20 : vector<1x2x2x128xbf16> to vector<2x2x128xbf16>
    %22 = arith.extf %21 : vector<2x2x128xbf16> to vector<2x2x128xf32>
    %c1_23 = arith.constant 1 : index
    %c1_24 = arith.constant 1 : index
    %c0_25 = arith.constant 0 : index
    %23 = vector.load %arg10[%c1_23, %c1_24, %c0_25] : memref<3x3x128xf32, #tpu.memory_space<vmem>>, vector<2x2x128xf32>
    tpu.vector_store %arg10[%c1_23, %c1_24, %c0_25], %22 {strides = array<i32>} : memref<3x3x128xf32, #tpu.memory_space<vmem>>, vector<2x2x128xf32>,
    %c0_26 = arith.constant 0 : index
    %c0_27 = arith.constant 0 : index
    %c0_28 = arith.constant 0 : index
    %24 = vector.load %arg10[%c0_26, %c0_27, %c0_28] : memref<3x3x128xf32, #tpu.memory_space<vmem>>, vector<2x2x128xf32>
    %c0_29 = arith.constant 0 : index
    %c1_30 = arith.constant 1 : index
    %c0_31 = arith.constant 0 : index
    %25 = vector.load %arg10[%c0_29, %c1_30, %c0_31] : memref<3x3x128xf32, #tpu.memory_space<vmem>>, vector<2x2x128xf32>
    %c1_32 = arith.constant 1 : index
    %c0_33 = arith.constant 0 : index
    %c0_34 = arith.constant 0 : index
    %26 = vector.load %arg9[%c1_32, %c0_33, %c0_34] : memref<3x3x128xf32, #tpu.memory_space<vmem>>, vector<2x2x128xf32>
    %c1_35 = arith.constant 1 : index
    %c1_36 = arith.constant 1 : index
    %c0_37 = arith.constant 0 : index
    %27 = vector.load %arg9[%c1_35, %c1_36, %c0_37] : memref<3x3x128xf32, #tpu.memory_space<vmem>>, vector<2x2x128xf32>
    %c1_38 = arith.constant 1 : index
    %c0_39 = arith.constant 0 : index
    %c0_40 = arith.constant 0 : index
    %28 = vector.load %arg10[%c1_38, %c0_39, %c0_40] : memref<3x3x128xf32, #tpu.memory_space<vmem>>, vector<2x2x128xf32>
    %c1_41 = arith.constant 1 : index
    %c1_42 = arith.constant 1 : index
    %c0_43 = arith.constant 0 : index
    %29 = vector.load %arg10[%c1_41, %c1_42, %c0_43] : memref<3x3x128xf32, #tpu.memory_space<vmem>>, vector<2x2x128xf32>
    %30 = tpu.concatenate %24, %25, %26, %27, %28, %29 in 2 : vector<2x2x128xf32>, vector<2x2x128xf32>, vector<2x2x128xf32>, vector<2x2x128xf32>, vector<2x2x128xf32>, vector<2x2x128xf32> -> vector<2x2x768xf32>
    %31 = vector.shape_cast %30 : vector<2x2x768xf32> to vector<4x768xf32>
    %32 = arith.truncf %31 : vector<4x768xf32> to vector<4x768xbf16>
    %c0_44 = arith.constant 0 : index
    %c0_45 = arith.constant 0 : index
    %33 = vector.load %arg2[%c0_44, %c0_45] : memref<768x128xbf16, #tpu.memory_space<vmem>>, vector<768x128xbf16>
    %cst_46 = arith.constant dense<0.000000e+00> : vector<4x128xf32>
    %34 = tpu.matmul %32, %33, %cst_46 {dimension_numbers = #tpu.dot_dimension_numbers<[1], [0], [0], [1], [0, 0, 1, 1], [], []>} : vector<4x768xbf16>, vector<768x128xbf16>, vector<4x128xf32> -> vector<4x128xf32>
    %c0_47 = arith.constant 0 : index
    %c0_48 = arith.constant 0 : index
    %35 = vector.load %arg3[%c0_47, %c0_48] : memref<1x128xf32, #tpu.memory_space<vmem>>, vector<1x128xf32>
    %36 = vector.broadcast %35 : vector<1x128xf32> to vector<4x128xf32>
    %37 = arith.addf %34, %36 : vector<4x128xf32>
    %cst_49 = arith.constant 0.000000e+00 : f32
    %38 = vector.broadcast %cst_49 : f32 to vector<4x128xf32>
    %39 = arith.cmpf oge, %37, %38 : vector<4x128xf32>
    %cst_50 = arith.constant 2.000000e-01 : f32
    %40 = vector.broadcast %cst_50 : f32 to vector<4x128xf32>
    %41 = arith.mulf %40, %37 : vector<4x128xf32>
    %42 = arith.select %39, %37, %41 : vector<4x128xi1>, vector<4x128xf32>
    %cst_51 = arith.constant 0.000000e+00 : f32
    %43 = vector.broadcast %cst_51 : f32 to vector<4x128xf32>
    %c0_52 = arith.constant 0 : index
    %c0_53 = arith.constant 0 : index
    %c0_54 = arith.constant 0 : index
    %44 = vector.load %arg11[%c0_52, %c0_53, %c0_54] : memref<4x4x128xf32, #tpu.memory_space<vmem>>, vector<1x4x128xf32>
    %45 = vector.shape_cast %44 : vector<1x4x128xf32> to vector<4x128xf32>
    %46 = vector.shape_cast %43 : vector<4x128xf32> to vector<1x4x128xf32>
    tpu.vector_store %arg11[%c0_52, %c0_53, %c0_54], %46 {strides = array<i32>} : memref<4x4x128xf32, #tpu.memory_space<vmem>>, vector<1x4x128xf32>,
    %cst_55 = arith.constant 0.000000e+00 : f32
    %47 = vector.broadcast %cst_55 : f32 to vector<4x128xf32>
    %c3 = arith.constant 3 : index
    %c0_56 = arith.constant 0 : index
    %c0_57 = arith.constant 0 : index
    %48 = vector.load %arg11[%c3, %c0_56, %c0_57] : memref<4x4x128xf32, #tpu.memory_space<vmem>>, vector<1x4x128xf32>
    %49 = vector.shape_cast %48 : vector<1x4x128xf32> to vector<4x128xf32>
    %50 = vector.shape_cast %47 : vector<4x128xf32> to vector<1x4x128xf32>
    tpu.vector_store %arg11[%c3, %c0_56, %c0_57], %50 {strides = array<i32>} : memref<4x4x128xf32, #tpu.memory_space<vmem>>, vector<1x4x128xf32>,
    %cst_58 = arith.constant 0.000000e+00 : f32
    %51 = vector.broadcast %cst_58 : f32 to vector<4x128xf32>
    %c0_59 = arith.constant 0 : index
    %c0_60 = arith.constant 0 : index
    %c0_61 = arith.constant 0 : index
    %52 = vector.load %arg11[%c0_59, %c0_60, %c0_61] : memref<4x4x128xf32, #tpu.memory_space<vmem>>, vector<4x1x128xf32>
    %53 = vector.shape_cast %52 : vector<4x1x128xf32> to vector<4x128xf32>
    %54 = vector.shape_cast %51 : vector<4x128xf32> to vector<4x1x128xf32>
    tpu.vector_store %arg11[%c0_59, %c0_60, %c0_61], %54 {strides = array<i32>} : memref<4x4x128xf32, #tpu.memory_space<vmem>>, vector<4x1x128xf32>,
    %cst_62 = arith.constant 0.000000e+00 : f32
    %55 = vector.broadcast %cst_62 : f32 to vector<4x128xf32>
    %c0_63 = arith.constant 0 : index
    %c3_64 = arith.constant 3 : index
    %c0_65 = arith.constant 0 : index
    %56 = vector.load %arg11[%c0_63, %c3_64, %c0_65] : memref<4x4x128xf32, #tpu.memory_space<vmem>>, vector<4x1x128xf32>
    %57 = vector.shape_cast %56 : vector<4x1x128xf32> to vector<4x128xf32>
    %58 = vector.shape_cast %55 : vector<4x128xf32> to vector<4x1x128xf32>
    tpu.vector_store %arg11[%c0_63, %c3_64, %c0_65], %58 {strides = array<i32>} : memref<4x4x128xf32, #tpu.memory_space<vmem>>, vector<4x1x128xf32>,
    %59 = vector.shape_cast %42 : vector<4x128xf32> to vector<2x2x128xf32>
    %c1_66 = arith.constant 1 : index
    %c1_67 = arith.constant 1 : index
    %c0_68 = arith.constant 0 : index
    %60 = vector.load %arg11[%c1_66, %c1_67, %c0_68] : memref<4x4x128xf32, #tpu.memory_space<vmem>>, vector<2x2x128xf32>
    tpu.vector_store %arg11[%c1_66, %c1_67, %c0_68], %59 {strides = array<i32>} : memref<4x4x128xf32, #tpu.memory_space<vmem>>, vector<2x2x128xf32>,
    %c0_69 = arith.constant 0 : index
    %c0_70 = arith.constant 0 : index
    %c0_71 = arith.constant 0 : index
    %61 = vector.load %arg11[%c0_69, %c0_70, %c0_71] : memref<4x4x128xf32, #tpu.memory_space<vmem>>, vector<2x2x128xf32>
    %c0_72 = arith.constant 0 : index
    %c1_73 = arith.constant 1 : index
    %c0_74 = arith.constant 0 : index
    %62 = vector.load %arg11[%c0_72, %c1_73, %c0_74] : memref<4x4x128xf32, #tpu.memory_space<vmem>>, vector<2x2x128xf32>
    %c0_75 = arith.constant 0 : index
    %c2_76 = arith.constant 2 : index
    %c0_77 = arith.constant 0 : index
    %63 = vector.load %arg11[%c0_75, %c2_76, %c0_77] : memref<4x4x128xf32, #tpu.memory_space<vmem>>, vector<2x2x128xf32>
    %c1_78 = arith.constant 1 : index
    %c0_79 = arith.constant 0 : index
    %c0_80 = arith.constant 0 : index
    %64 = vector.load %arg11[%c1_78, %c0_79, %c0_80] : memref<4x4x128xf32, #tpu.memory_space<vmem>>, vector<2x2x128xf32>
    %c1_81 = arith.constant 1 : index
    %c1_82 = arith.constant 1 : index
    %c0_83 = arith.constant 0 : index
    %65 = vector.load %arg11[%c1_81, %c1_82, %c0_83] : memref<4x4x128xf32, #tpu.memory_space<vmem>>, vector<2x2x128xf32>
    %c1_84 = arith.constant 1 : index
    %c2_85 = arith.constant 2 : index
    %c0_86 = arith.constant 0 : index
    %66 = vector.load %arg11[%c1_84, %c2_85, %c0_86] : memref<4x4x128xf32, #tpu.memory_space<vmem>>, vector<2x2x128xf32>
    %c2_87 = arith.constant 2 : index
    %c0_88 = arith.constant 0 : index
    %c0_89 = arith.constant 0 : index
    %67 = vector.load %arg11[%c2_87, %c0_88, %c0_89] : memref<4x4x128xf32, #tpu.memory_space<vmem>>, vector<2x2x128xf32>
    %c2_90 = arith.constant 2 : index
    %c1_91 = arith.constant 1 : index
    %c0_92 = arith.constant 0 : index
    %68 = vector.load %arg11[%c2_90, %c1_91, %c0_92] : memref<4x4x128xf32, #tpu.memory_space<vmem>>, vector<2x2x128xf32>
    %c2_93 = arith.constant 2 : index
    %c2_94 = arith.constant 2 : index
    %c0_95 = arith.constant 0 : index
    %69 = vector.load %arg11[%c2_93, %c2_94, %c0_95] : memref<4x4x128xf32, #tpu.memory_space<vmem>>, vector<2x2x128xf32>
    %70 = tpu.concatenate %61, %62, %63, %64, %65, %66, %67, %68, %69 in 2 : vector<2x2x128xf32>, vector<2x2x128xf32>, vector<2x2x128xf32>, vector<2x2x128xf32>, vector<2x2x128xf32>, vector<2x2x128xf32>, vector<2x2x128xf32>, vector<2x2x128xf32>, vector<2x2x128xf32> -> vector<2x2x1152xf32>
    %71 = vector.shape_cast %70 : vector<2x2x1152xf32> to vector<4x1152xf32>
    %72 = arith.truncf %71 : vector<4x1152xf32> to vector<4x1152xbf16>
    %c0_96 = arith.constant 0 : index
    %c0_97 = arith.constant 0 : index
    %73 = vector.load %arg4[%c0_96, %c0_97] : memref<1152x128xbf16, #tpu.memory_space<vmem>>, vector<1152x128xbf16>
    %cst_98 = arith.constant dense<0.000000e+00> : vector<4x128xf32>
    %74 = tpu.matmul %72, %73, %cst_98 {dimension_numbers = #tpu.dot_dimension_numbers<[1], [0], [0], [1], [0, 0, 1, 1], [], []>} : vector<4x1152xbf16>, vector<1152x128xbf16>, vector<4x128xf32> -> vector<4x128xf32>
    %c0_99 = arith.constant 0 : index
    %c0_100 = arith.constant 0 : index
    %75 = vector.load %arg5[%c0_99, %c0_100] : memref<1x128xf32, #tpu.memory_space<vmem>>, vector<1x128xf32>
    %76 = vector.broadcast %75 : vector<1x128xf32> to vector<4x128xf32>
    %77 = arith.addf %74, %76 : vector<4x128xf32>
    %cst_101 = arith.constant 0.000000e+00 : f32
    %78 = vector.broadcast %cst_101 : f32 to vector<4x128xf32>
    %79 = arith.cmpf oge, %77, %78 : vector<4x128xf32>
    %cst_102 = arith.constant 2.000000e-01 : f32
    %80 = vector.broadcast %cst_102 : f32 to vector<4x128xf32>
    %81 = arith.mulf %80, %77 : vector<4x128xf32>
    %82 = arith.select %79, %77, %81 : vector<4x128xi1>, vector<4x128xf32>
    %83 = vector.shape_cast %82 : vector<4x128xf32> to vector<2x2x128xf32>
    %c0_103 = arith.constant 0 : index
    %c0_104 = arith.constant 0 : index
    %84 = vector.load %arg6[%c0_103, %c0_104] : memref<1x128xf32, #tpu.memory_space<vmem>>, vector<1x128xf32>
    %85 = vector.shape_cast %84 : vector<1x128xf32> to vector<1x1x128xf32>
    %86 = vector.broadcast %85 : vector<1x1x128xf32> to vector<2x2x128xf32>
    %87 = arith.mulf %83, %86 : vector<2x2x128xf32>
    %cst_105 = arith.constant dense<0.000000e+00> : vector<2x2xf32>
    %88 = vector.multi_reduction <add>, %87, %cst_105 [2] : vector<2x2x128xf32> to vector<2x2xf32>
    %c0_106 = arith.constant 0 : index
    %c0_107 = arith.constant 0 : index
    %89 = vector.load %arg7[%c0_106, %c0_107] : memref<1x1xf32, #tpu.memory_space<vmem>>, vector<1x1xf32>
    %90 = vector.broadcast %89 : vector<1x1xf32> to vector<2x2xf32>
    %91 = arith.addf %88, %90 : vector<2x2xf32>
    %c0_108 = arith.constant 0 : index
    %c0_109 = arith.constant 0 : index
    %c0_110 = arith.constant 0 : index
    %92 = vector.load %arg8[%c0_108, %c0_109, %c0_110] : memref<1x2x2xf32, #tpu.memory_space<vmem>>, vector<1x2x2xf32>
    %93 = vector.shape_cast %92 : vector<1x2x2xf32> to vector<2x2xf32>
    %94 = vector.shape_cast %91 : vector<2x2xf32> to vector<1x2x2xf32>
    tpu.vector_store %arg8[%c0_108, %c0_109, %c0_110], %94 {strides = array<i32>} : memref<1x2x2xf32, #tpu.memory_space<vmem>>, vector<1x2x2xf32>,
    return
  }
  func.func @transform_0(%arg0: i32) -> (i32, i32, i32, i32) {
    %c0_i32 = arith.constant 0 : i32
    %c0_i32_0 = arith.constant 0 : i32
    %c0_i32_1 = arith.constant 0 : i32
    %c0_i32_2 = arith.constant 0 : i32
    return %arg0, %c0_i32, %c0_i32_0, %c0_i32_1 : i32, i32, i32, i32
  }
  func.func @transform_1(%arg0: i32) -> (i32, i32) {
    %c0_i32 = arith.constant 0 : i32
    %c0_i32_0 = arith.constant 0 : i32
    %c0_i32_1 = arith.constant 0 : i32
    return %c0_i32, %c0_i32_0 : i32, i32
  }
  func.func @transform_2(%arg0: i32) -> (i32, i32) {
    %c0_i32 = arith.constant 0 : i32
    %c0_i32_0 = arith.constant 0 : i32
    %c0_i32_1 = arith.constant 0 : i32
    return %c0_i32, %c0_i32_0 : i32, i32
  }
  func.func @transform_3(%arg0: i32) -> (i32, i32) {
    %c0_i32 = arith.constant 0 : i32
    %c0_i32_0 = arith.constant 0 : i32
    %c0_i32_1 = arith.constant 0 : i32
    return %c0_i32, %c0_i32_0 : i32, i32
  }
  func.func @transform_4(%arg0: i32) -> (i32, i32) {
    %c0_i32 = arith.constant 0 : i32
    %c0_i32_0 = arith.constant 0 : i32
    %c0_i32_1 = arith.constant 0 : i32
    return %c0_i32, %c0_i32_0 : i32, i32
  }
  func.func @transform_5(%arg0: i32) -> (i32, i32) {
    %c0_i32 = arith.constant 0 : i32
    %c0_i32_0 = arith.constant 0 : i32
    %c0_i32_1 = arith.constant 0 : i32
    return %c0_i32, %c0_i32_0 : i32, i32
  }
  func.func @transform_6(%arg0: i32) -> (i32, i32) {
    %c0_i32 = arith.constant 0 : i32
    %c0_i32_0 = arith.constant 0 : i32
    %c0_i32_1 = arith.constant 0 : i32
    return %c0_i32, %c0_i32_0 : i32, i32
  }
  func.func @transform_7(%arg0: i32) -> (i32, i32, i32) {
    %c0_i32 = arith.constant 0 : i32
    %c0_i32_0 = arith.constant 0 : i32
    %c0_i32_1 = arith.constant 0 : i32
    return %arg0, %c0_i32, %c0_i32_0 : i32, i32, i32
  }
}

</mosaic_0001>

<llo_original>
// kernel: discriminator_forward.3
$region0: #{discriminator_forward.3}
  #allocation0 [shape = 'u32[]', space=smem, size = 0x4, offset = 0x4, fixed_abs, tag = 'smem constant byte address 0x4 - core index']
  #allocation1 [shape = 'u32[72,128]{1,0:T(1,128)}', space=vmem, size = 0x9000, scoped, tag = 'internal scratch']
  #allocation2 [shape = 'f32[9,9,6]{2,1,0:T(8,128)}', space=vmem, size = 0x12000, scoped, tag = 'scratch operand']
  #allocation3 [shape = 'f32[9,9,6]{2,1,0:T(8,128)}', space=vmem, size = 0x12000, scoped, tag = 'scratch operand']
  #allocation4 [shape = 'f32[10,10,32]{2,1,0:T(8,128)}', space=vmem, size = 0x14000, scoped, tag = 'scratch operand']
  %s0 = inlined_call_operand.vmem [shape: f32[2,8,16,6], index: 0, kind: input, shape index: {}]
  %s1 = inlined_call_operand.vmem [shape: bf16[36,32], index: 1, kind: input, shape index: {}]
  %s2 = inlined_call_operand.vmem [shape: f32[1,32], index: 2, kind: input, shape index: {}]
  %s3 = inlined_call_operand.vmem [shape: bf16[288,32], index: 3, kind: input, shape index: {}]
  %s4 = inlined_call_operand.vmem [shape: f32[1,32], index: 4, kind: input, shape index: {}]
  %s5 = inlined_call_operand.vmem [shape: bf16[2,8,8,32], index: 5, kind: output, shape index: {}]
  %s6 = sld [smem:[#allocation0]]
  $region53: #{discriminator_forward.3} parent=0
    _
  %s8 = ssub.s32 1, %s6
  %s9 = scalar_select 0, %s8, %s6
  loop: start=0, step=1, limit=4
  $region2: #{discriminator_forward.3} parent=0 // loop_pre_header
    _
  $region3: #{discriminator_forward.3} parent=0 // loop_header
    %s11 = sphi 0, %s15
    %p12 = scmp.ge.s32.totalorder %s11, 4
    %s21 = sphi 0, %s23
    %s24 = sphi 0, %s21
    %s25 = sphi 0, %s24
    %s41 = sphi 0, %s25
    %s45 = sphi 0, %s45
    %s47 = sphi 0, %s45
    %s48 = sphi 0, %s47
    %s62 = sphi 0, %s48
    %s66 = sphi 0, %s66
    %s68 = sphi 0, %s66
    %s69 = sphi 0, %s68
    %s83 = sphi 0, %s69
    %s87 = sphi 0, %s87
    %s89 = sphi 0, %s87
    %s90 = sphi 0, %s89
    %s104 = sphi 0, %s90
    %s108 = sphi 0, %s108
    %s110 = sphi 0, %s108
    %s111 = sphi 0, %s110
    %s125 = sphi 0, %s111
    %s131 = sphi 0, %s133
    %s134 = sphi 0, %s131
    %s135 = sphi 0, %s134
    %s151 = sphi 0, %s135
  $region4: #{discriminator_forward.3} parent=0 // loop_header_branch
    %14 = sbr.rel (%p12) target = $region8
  $region5: #{discriminator_forward.3} parent=0 // loop_body
    %s16 = ssub.s32 %s11, 1
    %s17 = ssub.s32 %s11, 2
    %s18 = sadd.s32 %s11, 1
    %s19 = ssub.s32 %s11, %s18
    %p20 = scmp.eq.s32.totalorder %s19, 0
    %s22 = sadd.s32 %s21, 1
    %s23 = scalar_select %p20, %s21, %s22
    %p26 = pneg %p20
    %p27 = scmp.eq.s32.totalorder %s11, 1
    %p28 = por %p26, %p27
    %p29 = scmp.ne.s32.totalorder %s21, %s24
    %p30 = scmp.eq.s32.totalorder %s11, 0
    %p31 = por %p29, %p30
    %p32 = scmp.ne.s32.totalorder %s21, %s24
    %p33 = scmp.eq.s32.totalorder %s16, 1
    %p34 = por %p32, %p33
    %p35 = scmp.ne.s32.totalorder %s24, %s25
    %p36 = scmp.eq.s32.totalorder %s16, 0
    %p37 = por %p35, %p36
    %p38 = scmp.ne.s32.totalorder %s24, %s25
    %p39 = scmp.eq.s32.totalorder %s17, 1
    %p40 = por %p38, %p39
    %p42 = scmp.ne.s32.totalorder %s25, %s41
    %p43 = scmp.eq.s32.totalorder %s17, 0
    %p44 = por %p42, %p43
    %s46 = sadd.s32 %s45, 1
    %p49 = scmp.eq.s32.totalorder %s11, 1
    %p50 = scmp.ne.s32.totalorder %s45, %s47
    %p51 = scmp.eq.s32.totalorder %s11, 0
    %p52 = por %p50, %p51
    %p53 = scmp.ne.s32.totalorder %s45, %s47
    %p54 = scmp.eq.s32.totalorder %s16, 1
    %p55 = por %p53, %p54
    %p56 = scmp.ne.s32.totalorder %s47, %s48
    %p57 = scmp.eq.s32.totalorder %s16, 0
    %p58 = por %p56, %p57
    %p59 = scmp.ne.s32.totalorder %s47, %s48
    %p60 = scmp.eq.s32.totalorder %s17, 1
    %p61 = por %p59, %p60
    %p63 = scmp.ne.s32.totalorder %s48, %s62
    %p64 = scmp.eq.s32.totalorder %s17, 0
    %p65 = por %p63, %p64
    %s67 = sadd.s32 %s66, 1
    %p70 = scmp.eq.s32.totalorder %s11, 1
    %p71 = scmp.ne.s32.totalorder %s66, %s68
    %p72 = scmp.eq.s32.totalorder %s11, 0
    %p73 = por %p71, %p72
    %p74 = scmp.ne.s32.totalorder %s66, %s68
    %p75 = scmp.eq.s32.totalorder %s16, 1
    %p76 = por %p74, %p75
    %p77 = scmp.ne.s32.totalorder %s68, %s69
    %p78 = scmp.eq.s32.totalorder %s16, 0
    %p79 = por %p77, %p78
    %p80 = scmp.ne.s32.totalorder %s68, %s69
    %p81 = scmp.eq.s32.totalorder %s17, 1
    %p82 = por %p80, %p81
    %p84 = scmp.ne.s32.totalorder %s69, %s83
    %p85 = scmp.eq.s32.totalorder %s17, 0
    %p86 = por %p84, %p85
    %s88 = sadd.s32 %s87, 1
    %p91 = scmp.eq.s32.totalorder %s11, 1
    %p92 = scmp.ne.s32.totalorder %s87, %s89
    %p93 = scmp.eq.s32.totalorder %s11, 0
    %p94 = por %p92, %p93
    %p95 = scmp.ne.s32.totalorder %s87, %s89
    %p96 = scmp.eq.s32.totalorder %s16, 1
    %p97 = por %p95, %p96
    %p98 = scmp.ne.s32.totalorder %s89, %s90
    %p99 = scmp.eq.s32.totalorder %s16, 0
    %p100 = por %p98, %p99
    %p101 = scmp.ne.s32.totalorder %s89, %s90
    %p102 = scmp.eq.s32.totalorder %s17, 1
    %p103 = por %p101, %p102
    %p105 = scmp.ne.s32.totalorder %s90, %s104
    %p106 = scmp.eq.s32.totalorder %s17, 0
    %p107 = por %p105, %p106
    %s109 = sadd.s32 %s108, 1
    %p112 = scmp.eq.s32.totalorder %s11, 1
    %p113 = scmp.ne.s32.totalorder %s108, %s110
    %p114 = scmp.eq.s32.totalorder %s11, 0
    %p115 = por %p113, %p114
    %p116 = scmp.ne.s32.totalorder %s108, %s110
    %p117 = scmp.eq.s32.totalorder %s16, 1
    %p118 = por %p116, %p117
    %p119 = scmp.ne.s32.totalorder %s110, %s111
    %p120 = scmp.eq.s32.totalorder %s16, 0
    %p121 = por %p119, %p120
    %p122 = scmp.ne.s32.totalorder %s110, %s111
    %p123 = scmp.eq.s32.totalorder %s17, 1
    %p124 = por %p122, %p123
    %p126 = scmp.ne.s32.totalorder %s111, %s125
    %p127 = scmp.eq.s32.totalorder %s17, 0
    %p128 = por %p126, %p127
    %s129 = ssub.s32 %s11, %s18
    %p130 = scmp.eq.s32.totalorder %s129, 0
    %s132 = sadd.s32 %s131, 1
    %s133 = scalar_select %p130, %s131, %s132
    %p136 = pneg %p130
    %p137 = scmp.eq.s32.totalorder %s11, 1
    %p138 = por %p136, %p137
    %p139 = scmp.ne.s32.totalorder %s131, %s134
    %p140 = scmp.eq.s32.totalorder %s11, 0
    %p141 = por %p139, %p140
    %p142 = scmp.ne.s32.totalorder %s131, %s134
    %p143 = scmp.eq.s32.totalorder %s16, 1
    %p144 = por %p142, %p143
    %p145 = scmp.ne.s32.totalorder %s134, %s135
    %p146 = scmp.eq.s32.totalorder %s16, 0
    %p147 = por %p145, %p146
    %p148 = scmp.ne.s32.totalorder %s134, %s135
    %p149 = scmp.eq.s32.totalorder %s17, 1
    %p150 = por %p148, %p149
    %p152 = scmp.ne.s32.totalorder %s135, %s151
    %p153 = scmp.eq.s32.totalorder %s17, 0
    %p154 = por %p152, %p153
    %p155 = scmp.le.s32.totalorder 1, %s11
    %p156 = scmp.lt.s32.totalorder %s11, 3
    %p157 = pnand %p155, %p156
    %p158 = pneg %p157
    // Predicated region
    $region9: #{discriminator_forward.3} parent=5 // pred_check
      _
    $region10: #{discriminator_forward.3} parent=5 // pred_check_branch
      %160 = sbr.rel (%p157) target = $region12
    $region11: #{discriminator_forward.3} parent=5 // pred_region
      %s161 = ssub.s32 %s11, 1
      // Predicated region
      $region13: #{discriminator_forward.3} parent=11 // pred_check
        %p162 = pneg %p58
      $region14: #{discriminator_forward.3} parent=11 // pred_check_branch
        %164 = sbr.rel (%p162) target = $region16
      $region15: #{discriminator_forward.3} parent=11 // pred_region
        _
      $region16: #{discriminator_forward.3} parent=11 // pred_fallthru
        _
      // Predicated region
      $region17: #{discriminator_forward.3} parent=11 // pred_check
        %p165 = pneg %p79
      $region18: #{discriminator_forward.3} parent=11 // pred_check_branch
        %167 = sbr.rel (%p165) target = $region20
      $region19: #{discriminator_forward.3} parent=11 // pred_region
        _
      $region20: #{discriminator_forward.3} parent=11 // pred_fallthru
        _
      // Predicated region
      $region21: #{discriminator_forward.3} parent=11 // pred_check
        %p168 = pneg %p100
      $region22: #{discriminator_forward.3} parent=11 // pred_check_branch
        %170 = sbr.rel (%p168) target = $region24
      $region23: #{discriminator_forward.3} parent=11 // pred_region
        _
      $region24: #{discriminator_forward.3} parent=11 // pred_fallthru
        _
      // Predicated region
      $region25: #{discriminator_forward.3} parent=11 // pred_check
        %p171 = pneg %p121
      $region26: #{discriminator_forward.3} parent=11 // pred_check_branch
        %173 = sbr.rel (%p171) target = $region28
      $region27: #{discriminator_forward.3} parent=11 // pred_region
        _
      $region28: #{discriminator_forward.3} parent=11 // pred_fallthru
        _
    $region12: #{discriminator_forward.3} parent=5 // pred_fallthru
      _
    %p174 = scmp.lt.s32.totalorder %s11, 2
    // Predicated region
    $region29: #{discriminator_forward.3} parent=5 // pred_check
      %p175 = pneg %p174
    $region30: #{discriminator_forward.3} parent=5 // pred_check_branch
      %177 = sbr.rel (%p175) target = $region32
    $region31: #{discriminator_forward.3} parent=5 // pred_region
      // Predicated region
      $region33: #{discriminator_forward.3} parent=31 // pred_check
        %p178 = pneg %p31
      $region34: #{discriminator_forward.3} parent=31 // pred_check_branch
        %180 = sbr.rel (%p178) target = $region36
      $region35: #{discriminator_forward.3} parent=31 // pred_region
        %p181 = scmp.lt.s32.totalorder %s11, 1
        %s182 = scalar_select %p181, %s11, 1
        %s183 = smul.addr %s182, 16
        %s184 = smul.addr %s183, 8
        %s185 = scalar_lea.vmem %s0, %s184
      $region36: #{discriminator_forward.3} parent=31 // pred_fallthru
        _
    $region32: #{discriminator_forward.3} parent=5 // pred_fallthru
      _
    %p186 = scmp.le.s32.totalorder 1, %s11
    %p187 = scmp.lt.s32.totalorder %s11, 3
    %p188 = pnand %p186, %p187
    %p189 = pneg %p188
    // Predicated region
    $region37: #{discriminator_forward.3} parent=5 // pred_check
      _
    $region38: #{discriminator_forward.3} parent=5 // pred_check_branch
      %191 = sbr.rel (%p188) target = $region40
    $region39: #{discriminator_forward.3} parent=5 // pred_region
      %s192 = ssub.s32 %s11, 1
      %p193 = scmp.lt.s32.totalorder %s16, 1
      %s194 = scalar_select %p193, %s16, 1
      %s195 = smul.addr %s194, 16
      %s196 = smul.addr %s195, 8
      %s197 = scalar_lea.vmem %s0, %s196
      %p198 = pneg %p37
      %p199 = pneg %p34
      %p200 = pneg %p58
      %p201 = pneg %p55
      %p202 = pneg %p79
      %p203 = pneg %p76
      %p204 = pneg %p100
      %p205 = pneg %p97
      %p206 = pneg %p121
      %p207 = pneg %p118
      %p208 = pneg %p147
      %p209 = pneg %p144
      %p210 = scmp.lt.s32.totalorder %s16, 1
      %s211 = scalar_select %p210, %s16, 1
      %s212 = smul.addr %s211, 8
      %s213 = smul.addr %s212, 4
      %s214 = scalar_lea.vmem %s5, %s213
      %p215 = scmp.lt.s32.totalorder %s16, 1
      %s216 = scalar_select %p215, %s16, 1
      %s217 = smul.addr %s216, 16
      %s218 = smul.addr %s217, 8
      %s219 = scalar_lea.vmem %s0, %s218
      %p220 = scmp.lt.s32.totalorder %s16, 1
      %s221 = scalar_select %p220, %s16, 1
      %s222 = smul.addr %s221, 8
      %s223 = smul.addr %s222, 4
      %s224 = scalar_lea.vmem %s5, %s223
      %vm226 = vcmask 48128
      %227 = vst.msk [vmem:[#allocation2] sm:$0xff] %vm226, 0.0
      %vm228 = vcmask 40960
      %229 = vst.msk [vmem:[#allocation2 + $0x8] sm:$0x1] %vm228, 0.0
      %230 = vst.msk [vmem:[#allocation2] sm:$0x1] %vm228, 0.0
      %231 = vst.msk [vmem:[#allocation2 + $0x10] sm:$0x1] %vm228, 0.0
      %232 = vst.msk [vmem:[#allocation2 + $0x20] sm:$0x1] %vm228, 0.0
      %233 = vst.msk [vmem:[#allocation2 + $0x30] sm:$0x1] %vm228, 0.0
      %234 = vst.msk [vmem:[#allocation2 + $0x40] sm:$0x1] %vm228, 0.0
      %235 = vst.msk [vmem:[#allocation2 + $0x50] sm:$0x1] %vm228, 0.0
      %236 = vst.msk [vmem:[#allocation2 + $0x60] sm:$0x1] %vm228, 0.0
      %237 = vst.msk [vmem:[#allocation2 + $0x70] sm:$0x1] %vm228, 0.0
      %238 = vst.msk [vmem:[#allocation2 + $0x80] sm:$0x1] %vm228, 0.0
      %239 = vst.msk [vmem:[#allocation3] sm:$0xff] %vm226, 0.0
      %240 = vst.msk [vmem:[#allocation3 + $0x8] sm:$0x1] %vm228, 0.0
      %241 = vst.msk [vmem:[#allocation3] sm:$0x1] %vm228, 0.0
      %242 = vst.msk [vmem:[#allocation3 + $0x10] sm:$0x1] %vm228, 0.0
      %243 = vst.msk [vmem:[#allocation3 + $0x20] sm:$0x1] %vm228, 0.0
      %244 = vst.msk [vmem:[#allocation3 + $0x30] sm:$0x1] %vm228, 0.0
      %245 = vst.msk [vmem:[#allocation3 + $0x40] sm:$0x1] %vm228, 0.0
      %246 = vst.msk [vmem:[#allocation3 + $0x50] sm:$0x1] %vm228, 0.0
      %247 = vst.msk [vmem:[#allocation3 + $0x60] sm:$0x1] %vm228, 0.0
      %248 = vst.msk [vmem:[#allocation3 + $0x70] sm:$0x1] %vm228, 0.0
      %249 = vst.msk [vmem:[#allocation3 + $0x80] sm:$0x1] %vm228, 0.0
      %v250 = vld [vmem:[%s219] sm:$0xff]
      %v251 = vld [vmem:[%s219 + $0x10] sm:$0xff]
      %v252 = vld [vmem:[%s219 + $0x20] sm:$0xff]
      %v253 = vld [vmem:[%s219 + $0x30] sm:$0xff]
      %v254 = vld [vmem:[%s219 + $0x40] sm:$0xff]
      %v255 = vld [vmem:[%s219 + $0x50] sm:$0xff]
      %v256 = vld [vmem:[%s219 + $0x60] sm:$0xff]
      %v257 = vld [vmem:[%s219 + $0x70] sm:$0xff]
      %s258 = scalar_lea.vmem [#allocation2], 16
      %259 = vst.msk [vmem:[%s258 + $0x1] sm:$0xff] %vm226, %v250
      %260 = vst.msk [vmem:[%s258 + $0x11] sm:$0xff] %vm226, %v251
      %261 = vst.msk [vmem:[%s258 + $0x21] sm:$0xff] %vm226, %v252
      %262 = vst.msk [vmem:[%s258 + $0x31] sm:$0xff] %vm226, %v253
      %263 = vst.msk [vmem:[%s258 + $0x41] sm:$0xff] %vm226, %v254
      %264 = vst.msk [vmem:[%s258 + $0x51] sm:$0xff] %vm226, %v255
      %265 = vst.msk [vmem:[%s258 + $0x61] sm:$0xff] %vm226, %v256
      %266 = vst.msk [vmem:[%s258 + $0x71] sm:$0xff] %vm226, %v257
      %v267 = vld [vmem:[%s219 + $0x8] sm:$0xff]
      %v268 = vld [vmem:[%s219 + $0x18] sm:$0xff]
      %v269 = vld [vmem:[%s219 + $0x28] sm:$0xff]
      %v270 = vld [vmem:[%s219 + $0x38] sm:$0xff]
      %v271 = vld [vmem:[%s219 + $0x48] sm:$0xff]
      %v272 = vld [vmem:[%s219 + $0x58] sm:$0xff]
      %v273 = vld [vmem:[%s219 + $0x68] sm:$0xff]
      %v274 = vld [vmem:[%s219 + $0x78] sm:$0xff]
      %s275 = scalar_lea.vmem [#allocation3], 16
      %276 = vst.msk [vmem:[%s275 + $0x1] sm:$0xff] %vm226, %v267
      %277 = vst.msk [vmem:[%s275 + $0x11] sm:$0xff] %vm226, %v268
      %278 = vst.msk [vmem:[%s275 + $0x21] sm:$0xff] %vm226, %v269
      %279 = vst.msk [vmem:[%s275 + $0x31] sm:$0xff] %vm226, %v270
      %280 = vst.msk [vmem:[%s275 + $0x41] sm:$0xff] %vm226, %v271
      %281 = vst.msk [vmem:[%s275 + $0x51] sm:$0xff] %vm226, %v272
      %282 = vst.msk [vmem:[%s275 + $0x61] sm:$0xff] %vm226, %v273
      %283 = vst.msk [vmem:[%s275 + $0x71] sm:$0xff] %vm226, %v274
      %v284 = vld [vmem:[#allocation3] sm:$0xff]
      %v285 = vld [vmem:[#allocation3 + $0x10] sm:$0xff]
      %v286 = vld [vmem:[#allocation3 + $0x20] sm:$0xff]
      %v287 = vld [vmem:[#allocation3 + $0x30] sm:$0xff]
      %v288 = vld [vmem:[#allocation3 + $0x40] sm:$0xff]
      %v289 = vld [vmem:[#allocation3 + $0x50] sm:$0xff]
      %v290 = vld [vmem:[#allocation3 + $0x60] sm:$0xff]
      %v291 = vld [vmem:[#allocation3 + $0x70] sm:$0xff]
      %v292 = vld [vmem:[#allocation3 + $0x1] sm:$0xff]
      %v293 = vld [vmem:[#allocation3 + $0x11] sm:$0xff]
      %v294 = vld [vmem:[#allocation3 + $0x21] sm:$0xff]
      %v295 = vld [vmem:[#allocation3 + $0x31] sm:$0xff]
      %v296 = vld [vmem:[#allocation3 + $0x41] sm:$0xff]
      %v297 = vld [vmem:[#allocation3 + $0x51] sm:$0xff]
      %v298 = vld [vmem:[#allocation3 + $0x61] sm:$0xff]
      %v299 = vld [vmem:[#allocation3 + $0x71] sm:$0xff]
      %v300 = vld [vmem:[%s258] sm:$0xff]
      %v301 = vld [vmem:[%s258 + $0x10] sm:$0xff]
      %v302 = vld [vmem:[%s258 + $0x20] sm:$0xff]
      %v303 = vld [vmem:[%s258 + $0x30] sm:$0xff]
      %v304 = vld [vmem:[%s258 + $0x40] sm:$0xff]
      %v305 = vld [vmem:[%s258 + $0x50] sm:$0xff]
      %v306 = vld [vmem:[%s258 + $0x60] sm:$0xff]
      %v307 = vld [vmem:[%s258 + $0x70] sm:$0xff]
      %v308 = vld [vmem:[%s258 + $0x1] sm:$0xff]
      %v309 = vld [vmem:[%s258 + $0x11] sm:$0xff]
      %v310 = vld [vmem:[%s258 + $0x21] sm:$0xff]
      %v311 = vld [vmem:[%s258 + $0x31] sm:$0xff]
      %v312 = vld [vmem:[%s258 + $0x41] sm:$0xff]
      %v313 = vld [vmem:[%s258 + $0x51] sm:$0xff]
      %v314 = vld [vmem:[%s258 + $0x61] sm:$0xff]
      %v315 = vld [vmem:[%s258 + $0x71] sm:$0xff]
      %v316 = vld [vmem:[%s275] sm:$0xff]
      %v317 = vld [vmem:[%s275 + $0x10] sm:$0xff]
      %v318 = vld [vmem:[%s275 + $0x20] sm:$0xff]
      %v319 = vld [vmem:[%s275 + $0x30] sm:$0xff]
      %v320 = vld [vmem:[%s275 + $0x40] sm:$0xff]
      %v321 = vld [vmem:[%s275 + $0x50] sm:$0xff]
      %v322 = vld [vmem:[%s275 + $0x60] sm:$0xff]
      %v323 = vld [vmem:[%s275 + $0x70] sm:$0xff]
      %v324 = vld [vmem:[%s275 + $0x1] sm:$0xff]
      %v325 = vld [vmem:[%s275 + $0x11] sm:$0xff]
      %v326 = vld [vmem:[%s275 + $0x21] sm:$0xff]
      %v327 = vld [vmem:[%s275 + $0x31] sm:$0xff]
      %v328 = vld [vmem:[%s275 + $0x41] sm:$0xff]
      %v329 = vld [vmem:[%s275 + $0x51] sm:$0xff]
      %v330 = vld [vmem:[%s275 + $0x61] sm:$0xff]
      %v331 = vld [vmem:[%s275 + $0x71] sm:$0xff]
      %340 = vrot.lane.b32.xlu0 %v292, 6
      %v341 = vpop.permute.xlu0 %340
      %342 = vrot.lane.b32.xlu0 %v293, 6
      %v343 = vpop.permute.xlu0 %342
      %344 = vrot.lane.b32.xlu0 %v294, 6
      %v345 = vpop.permute.xlu0 %344
      %346 = vrot.lane.b32.xlu0 %v295, 6
      %v347 = vpop.permute.xlu0 %346
      %348 = vrot.lane.b32.xlu0 %v296, 6
      %v349 = vpop.permute.xlu0 %348
      %350 = vrot.lane.b32.xlu0 %v297, 6
      %v351 = vpop.permute.xlu0 %350
      %352 = vrot.lane.b32.xlu0 %v298, 6
      %v353 = vpop.permute.xlu0 %352
      %354 = vrot.lane.b32.xlu0 %v299, 6
      %v355 = vpop.permute.xlu0 %354
      %372 = vrot.lane.b32.xlu0 %v300, 12
      %v373 = vpop.permute.xlu0 %372
      %374 = vrot.lane.b32.xlu0 %v301, 12
      %v375 = vpop.permute.xlu0 %374
      %376 = vrot.lane.b32.xlu0 %v302, 12
      %v377 = vpop.permute.xlu0 %376
      %378 = vrot.lane.b32.xlu0 %v303, 12
      %v379 = vpop.permute.xlu0 %378
      %380 = vrot.lane.b32.xlu0 %v304, 12
      %v381 = vpop.permute.xlu0 %380
      %382 = vrot.lane.b32.xlu0 %v305, 12
      %v383 = vpop.permute.xlu0 %382
      %384 = vrot.lane.b32.xlu0 %v306, 12
      %v385 = vpop.permute.xlu0 %384
      %386 = vrot.lane.b32.xlu0 %v307, 12
      %v387 = vpop.permute.xlu0 %386
      %404 = vrot.lane.b32.xlu0 %v308, 18
      %v405 = vpop.permute.xlu0 %404
      %406 = vrot.lane.b32.xlu0 %v309, 18
      %v407 = vpop.permute.xlu0 %406
      %408 = vrot.lane.b32.xlu0 %v310, 18
      %v409 = vpop.permute.xlu0 %408
      %410 = vrot.lane.b32.xlu0 %v311, 18
      %v411 = vpop.permute.xlu0 %410
      %412 = vrot.lane.b32.xlu0 %v312, 18
      %v413 = vpop.permute.xlu0 %412
      %414 = vrot.lane.b32.xlu0 %v313, 18
      %v415 = vpop.permute.xlu0 %414
      %416 = vrot.lane.b32.xlu0 %v314, 18
      %v417 = vpop.permute.xlu0 %416
      %418 = vrot.lane.b32.xlu0 %v315, 18
      %v419 = vpop.permute.xlu0 %418
      %436 = vrot.lane.b32.xlu0 %v316, 24
      %v437 = vpop.permute.xlu0 %436
      %438 = vrot.lane.b32.xlu0 %v317, 24
      %v439 = vpop.permute.xlu0 %438
      %440 = vrot.lane.b32.xlu0 %v318, 24
      %v441 = vpop.permute.xlu0 %440
      %442 = vrot.lane.b32.xlu0 %v319, 24
      %v443 = vpop.permute.xlu0 %442
      %444 = vrot.lane.b32.xlu0 %v320, 24
      %v445 = vpop.permute.xlu0 %444
      %446 = vrot.lane.b32.xlu0 %v321, 24
      %v447 = vpop.permute.xlu0 %446
      %448 = vrot.lane.b32.xlu0 %v322, 24
      %v449 = vpop.permute.xlu0 %448
      %450 = vrot.lane.b32.xlu0 %v323, 24
      %v451 = vpop.permute.xlu0 %450
      %468 = vrot.lane.b32.xlu0 %v324, 30
      %v469 = vpop.permute.xlu0 %468
      %470 = vrot.lane.b32.xlu0 %v325, 30
      %v471 = vpop.permute.xlu0 %470
      %472 = vrot.lane.b32.xlu0 %v326, 30
      %v473 = vpop.permute.xlu0 %472
      %474 = vrot.lane.b32.xlu0 %v327, 30
      %v475 = vpop.permute.xlu0 %474
      %476 = vrot.lane.b32.xlu0 %v328, 30
      %v477 = vpop.permute.xlu0 %476
      %478 = vrot.lane.b32.xlu0 %v329, 30
      %v479 = vpop.permute.xlu0 %478
      %480 = vrot.lane.b32.xlu0 %v330, 30
      %v481 = vpop.permute.xlu0 %480
      %482 = vrot.lane.b32.xlu0 %v331, 30
      %v483 = vpop.permute.xlu0 %482
      %v492 = vsel %vm226, %v284, %v341
      %v493 = vsel %vm226, %v285, %v343
      %v494 = vsel %vm226, %v286, %v345
      %v495 = vsel %vm226, %v287, %v347
      %v496 = vsel %vm226, %v288, %v349
      %v497 = vsel %vm226, %v289, %v351
      %v498 = vsel %vm226, %v290, %v353
      %v499 = vsel %vm226, %v291, %v355
      %vm500 = vcmask 97280
      %v501 = vsel %vm500, %v492, %v373
      %v502 = vsel %vm500, %v493, %v375
      %v503 = vsel %vm500, %v494, %v377
      %v504 = vsel %vm500, %v495, %v379
      %v505 = vsel %vm500, %v496, %v381
      %v506 = vsel %vm500, %v497, %v383
      %v507 = vsel %vm500, %v498, %v385
      %v508 = vsel %vm500, %v499, %v387
      %vm509 = vcmask 146432
      %v510 = vsel %vm509, %v501, %v405
      %v511 = vsel %vm509, %v502, %v407
      %v512 = vsel %vm509, %v503, %v409
      %v513 = vsel %vm509, %v504, %v411
      %v514 = vsel %vm509, %v505, %v413
      %v515 = vsel %vm509, %v506, %v415
      %v516 = vsel %vm509, %v507, %v417
      %v517 = vsel %vm509, %v508, %v419
      %vm518 = vcmask 195584
      %v519 = vsel %vm518, %v510, %v437
      %v520 = vsel %vm518, %v511, %v439
      %v521 = vsel %vm518, %v512, %v441
      %v522 = vsel %vm518, %v513, %v443
      %v523 = vsel %vm518, %v514, %v445
      %v524 = vsel %vm518, %v515, %v447
      %v525 = vsel %vm518, %v516, %v449
      %v526 = vsel %vm518, %v517, %v451
      %vm527 = vcmask 244736
      %v528 = vsel %vm527, %v519, %v469
      %v529 = vsel %vm527, %v520, %v471
      %v530 = vsel %vm527, %v521, %v473
      %v531 = vsel %vm527, %v522, %v475
      %v532 = vsel %vm527, %v523, %v477
      %v533 = vsel %vm527, %v524, %v479
      %v534 = vsel %vm527, %v525, %v481
      %v535 = vsel %vm527, %v526, %v483
      %v536 = vpack.c.bf16 %v529, %v528
      %v537 = vpack.c.bf16 %v531, %v530
      %v538 = vpack.c.bf16 %v533, %v532
      %v539 = vpack.c.bf16 %v535, %v534
      %v540 = vld [vmem:[%s1] sm:$0xf]
      %v541 = vld [vmem:[%s1 + $0x4] sm:$0xf]
      %v542 = vld [vmem:[%s1 + $0x8] sm:$0xf]
      %v543 = vld [vmem:[%s1 + $0xc] sm:$0xf]
      %v544 = vld [vmem:[%s1 + $0x10] sm:$0x3]
      %v545 = vld [vmem:[%s2] sm:$0x1]
      %v547 = vperm.slane %v545, 0
      %v554 = vunpack.c.l.b16 %v540
      %v555 = vunpack.c.l.b16 %v541
      %v556 = vunpack.c.l.b16 %v542
      %v557 = vunpack.c.l.b16 %v543
      %v558 = vunpack.c.l.b16 %v544
      %v559 = vpack.c.b16 %v555, %v554
      %v560 = vpack.c.b16 %v557, %v556
      %v561 = vpack.c.b16 %v558, %v558
      %vm564 = vcmask 293888
      %v566 = vsel %vm564, %v536, 0
      %v569 = vsel %vm564, %v537, 0
      %v572 = vsel %vm564, %v538, 0
      %v575 = vsel %vm564, %v539, 0
      %vm577 = vcmask 1041408
      %v579 = vsel %vm577, %v561, 0
      %581 = vmatpush.bf16.msra.mxu0 0
      %582 = vmatpush.bf16.msra.mxu0 0
      %583 = vmatpush.bf16.msra.mxu0 0
      %584 = vmatpush.bf16.msra.mxu0 0
      %585 = vmatpush.bf16.msra.mxu0 0
      %586 = vmatpush.bf16.msra.mxu0 %v579
      %587 = vmatpush.bf16.msra.mxu0 %v560
      %588 = vmatpush.bf16.msra.mxu0 %v559
      %589 = vmatmul.bf16.gmra.mxu0 %v566
      %v590 = vpop.f32.mrf.mxu0
      %v591 = vadd.f32 %v547, %v590
      %v592 = vpop.f32.mrf.mxu0
      %v593 = vadd.f32 %v547, %v592
      %594 = vmatmul.bf16.gmra.mxu0 %v569
      %v595 = vpop.f32.mrf.mxu0
      %v596 = vadd.f32 %v547, %v595
      %v597 = vpop.f32.mrf.mxu0
      %v598 = vadd.f32 %v547, %v597
      %599 = vmatmul.bf16.gmra.mxu0 %v572
      %v600 = vpop.f32.mrf.mxu0
      %v601 = vadd.f32 %v547, %v600
      %v602 = vpop.f32.mrf.mxu0
      %v603 = vadd.f32 %v547, %v602
      %604 = vmatmul.bf16.gmra.mxu0 %v575
      %v605 = vpop.f32.mrf.mxu0
      %v606 = vadd.f32 %v547, %v605
      %v607 = vpop.f32.mrf.mxu0
      %v608 = vadd.f32 %v547, %v607
      %609 = vdwg.mxu0
      %vm610 = vcmp.ge.f32.partialorder %v591, 0.0
      %vm611 = vcmp.ge.f32.partialorder %v593, 0.0
      %vm612 = vcmp.ge.f32.partialorder %v596, 0.0
      %vm613 = vcmp.ge.f32.partialorder %v598, 0.0
      %vm614 = vcmp.ge.f32.partialorder %v601, 0.0
      %vm615 = vcmp.ge.f32.partialorder %v603, 0.0
      %vm616 = vcmp.ge.f32.partialorder %v606, 0.0
      %vm617 = vcmp.ge.f32.partialorder %v608, 0.0
      %v618 = vmul.f32 %v591, 0.2
      %v619 = vmul.f32 %v593, 0.2
      %v620 = vmul.f32 %v596, 0.2
      %v621 = vmul.f32 %v598, 0.2
      %v622 = vmul.f32 %v601, 0.2
      %v623 = vmul.f32 %v603, 0.2
      %v624 = vmul.f32 %v606, 0.2
      %v625 = vmul.f32 %v608, 0.2
      %v626 = vsel %vm610, %v591, %v618
      %v627 = vsel %vm611, %v593, %v619
      %v628 = vsel %vm612, %v596, %v620
      %v629 = vsel %vm613, %v598, %v621
      %v630 = vsel %vm614, %v601, %v622
      %v631 = vsel %vm615, %v603, %v623
      %v632 = vsel %vm616, %v606, %v624
      %v633 = vsel %vm617, %v608, %v625
      %vm634 = vcmask 261120
      %635 = vst.msk [vmem:[#allocation4] sm:$0xff] %vm634, 0.0
      %vm636 = vcmask 254976
      %637 = vst.msk [vmem:[#allocation4 + $0x8] sm:$0x3] %vm636, 0.0
      %s638 = scalar_lea.vmem [#allocation4], 144
      %639 = vst.msk [vmem:[%s638] sm:$0xff] %vm634, 0.0
      %640 = vst.msk [vmem:[%s638 + $0x8] sm:$0x3] %vm636, 0.0
      %vm641 = vcmask 253952
      %642 = vst.msk [vmem:[#allocation4] sm:$0x1] %vm641, 0.0
      %643 = vst.msk [vmem:[#allocation4 + $0x10] sm:$0x1] %vm641, 0.0
      %644 = vst.msk [vmem:[#allocation4 + $0x20] sm:$0x1] %vm641, 0.0
      %645 = vst.msk [vmem:[#allocation4 + $0x30] sm:$0x1] %vm641, 0.0
      %646 = vst.msk [vmem:[#allocation4 + $0x40] sm:$0x1] %vm641, 0.0
      %647 = vst.msk [vmem:[#allocation4 + $0x50] sm:$0x1] %vm641, 0.0
      %648 = vst.msk [vmem:[#allocation4 + $0x60] sm:$0x1] %vm641, 0.0
      %649 = vst.msk [vmem:[#allocation4 + $0x70] sm:$0x1] %vm641, 0.0
      %650 = vst.msk [vmem:[#allocation4 + $0x80] sm:$0x1] %vm641, 0.0
      %651 = vst.msk [vmem:[#allocation4 + $0x90] sm:$0x1] %vm641, 0.0
      %652 = vst.msk [vmem:[#allocation4 + $0x9] sm:$0x1] %vm641, 0.0
      %653 = vst.msk [vmem:[#allocation4 + $0x19] sm:$0x1] %vm641, 0.0
      %654 = vst.msk [vmem:[#allocation4 + $0x29] sm:$0x1] %vm641, 0.0
      %655 = vst.msk [vmem:[#allocation4 + $0x39] sm:$0x1] %vm641, 0.0
      %656 = vst.msk [vmem:[#allocation4 + $0x49] sm:$0x1] %vm641, 0.0
      %657 = vst.msk [vmem:[#allocation4 + $0x59] sm:$0x1] %vm641, 0.0
      %658 = vst.msk [vmem:[#allocation4 + $0x69] sm:$0x1] %vm641, 0.0
      %659 = vst.msk [vmem:[#allocation4 + $0x79] sm:$0x1] %vm641, 0.0
      %660 = vst.msk [vmem:[#allocation4 + $0x89] sm:$0x1] %vm641, 0.0
      %661 = vst.msk [vmem:[#allocation4 + $0x99] sm:$0x1] %vm641, 0.0
      %s662 = scalar_lea.vmem [#allocation4], 16
      %663 = vst.msk [vmem:[%s662 + $0x1] sm:$0xff] %vm634, %v626
      %664 = vst.msk [vmem:[%s662 + $0x11] sm:$0xff] %vm634, %v627
      %665 = vst.msk [vmem:[%s662 + $0x21] sm:$0xff] %vm634, %v628
      %666 = vst.msk [vmem:[%s662 + $0x31] sm:$0xff] %vm634, %v629
      %667 = vst.msk [vmem:[%s662 + $0x41] sm:$0xff] %vm634, %v630
      %668 = vst.msk [vmem:[%s662 + $0x51] sm:$0xff] %vm634, %v631
      %669 = vst.msk [vmem:[%s662 + $0x61] sm:$0xff] %vm634, %v632
      %670 = vst.msk [vmem:[%s662 + $0x71] sm:$0xff] %vm634, %v633
      %v671 = vld [vmem:[#allocation4] sm:$0xff]
      %v672 = vld [vmem:[#allocation4 + $0x10] sm:$0xff]
      %v673 = vld [vmem:[#allocation4 + $0x20] sm:$0xff]
      %v674 = vld [vmem:[#allocation4 + $0x30] sm:$0xff]
      %v675 = vld [vmem:[#allocation4 + $0x40] sm:$0xff]
      %v676 = vld [vmem:[#allocation4 + $0x50] sm:$0xff]
      %v677 = vld [vmem:[#allocation4 + $0x60] sm:$0xff]
      %v678 = vld [vmem:[#allocation4 + $0x70] sm:$0xff]
      %v679 = vld [vmem:[#allocation4 + $0x1] sm:$0xff]
      %v680 = vld [vmem:[#allocation4 + $0x11] sm:$0xff]
      %v681 = vld [vmem:[#allocation4 + $0x21] sm:$0xff]
      %v682 = vld [vmem:[#allocation4 + $0x31] sm:$0xff]
      %v683 = vld [vmem:[#allocation4 + $0x41] sm:$0xff]
      %v684 = vld [vmem:[#allocation4 + $0x51] sm:$0xff]
      %v685 = vld [vmem:[#allocation4 + $0x61] sm:$0xff]
      %v686 = vld [vmem:[#allocation4 + $0x71] sm:$0xff]
      %v687 = vld [vmem:[#allocation4 + $0x2] sm:$0xff]
      %v688 = vld [vmem:[#allocation4 + $0x12] sm:$0xff]
      %v689 = vld [vmem:[#allocation4 + $0x22] sm:$0xff]
      %v690 = vld [vmem:[#allocation4 + $0x32] sm:$0xff]
      %v691 = vld [vmem:[#allocation4 + $0x42] sm:$0xff]
      %v692 = vld [vmem:[#allocation4 + $0x52] sm:$0xff]
      %v693 = vld [vmem:[#allocation4 + $0x62] sm:$0xff]
      %v694 = vld [vmem:[#allocation4 + $0x72] sm:$0xff]
      %v695 = vld [vmem:[%s662] sm:$0xff]
      %v696 = vld [vmem:[%s662 + $0x10] sm:$0xff]
      %v697 = vld [vmem:[%s662 + $0x20] sm:$0xff]
      %v698 = vld [vmem:[%s662 + $0x30] sm:$0xff]
      %v699 = vld [vmem:[%s662 + $0x40] sm:$0xff]
      %v700 = vld [vmem:[%s662 + $0x50] sm:$0xff]
      %v701 = vld [vmem:[%s662 + $0x60] sm:$0xff]
      %v702 = vld [vmem:[%s662 + $0x70] sm:$0xff]
      %v703 = vld [vmem:[%s662 + $0x1] sm:$0xff]
      %v704 = vld [vmem:[%s662 + $0x11] sm:$0xff]
      %v705 = vld [vmem:[%s662 + $0x21] sm:$0xff]
      %v706 = vld [vmem:[%s662 + $0x31] sm:$0xff]
      %v707 = vld [vmem:[%s662 + $0x41] sm:$0xff]
      %v708 = vld [vmem:[%s662 + $0x51] sm:$0xff]
      %v709 = vld [vmem:[%s662 + $0x61] sm:$0xff]
      %v710 = vld [vmem:[%s662 + $0x71] sm:$0xff]
      %v711 = vld [vmem:[%s662 + $0x2] sm:$0xff]
      %v712 = vld [vmem:[%s662 + $0x12] sm:$0xff]
      %v713 = vld [vmem:[%s662 + $0x22] sm:$0xff]
      %v714 = vld [vmem:[%s662 + $0x32] sm:$0xff]
      %v715 = vld [vmem:[%s662 + $0x42] sm:$0xff]
      %v716 = vld [vmem:[%s662 + $0x52] sm:$0xff]
      %v717 = vld [vmem:[%s662 + $0x62] sm:$0xff]
      %v718 = vld [vmem:[%s662 + $0x72] sm:$0xff]
      %s719 = scalar_lea.vmem [#allocation4], 32
      %v720 = vld [vmem:[%s719] sm:$0xff]
      %v721 = vld [vmem:[%s719 + $0x10] sm:$0xff]
      %v722 = vld [vmem:[%s719 + $0x20] sm:$0xff]
      %v723 = vld [vmem:[%s719 + $0x30] sm:$0xff]
      %v724 = vld [vmem:[%s719 + $0x40] sm:$0xff]
      %v725 = vld [vmem:[%s719 + $0x50] sm:$0xff]
      %v726 = vld [vmem:[%s719 + $0x60] sm:$0xff]
      %v727 = vld [vmem:[%s719 + $0x70] sm:$0xff]
      %v728 = vld [vmem:[%s719 + $0x1] sm:$0xff]
      %v729 = vld [vmem:[%s719 + $0x11] sm:$0xff]
      %v730 = vld [vmem:[%s719 + $0x21] sm:$0xff]
      %v731 = vld [vmem:[%s719 + $0x31] sm:$0xff]
      %v732 = vld [vmem:[%s719 + $0x41] sm:$0xff]
      %v733 = vld [vmem:[%s719 + $0x51] sm:$0xff]
      %v734 = vld [vmem:[%s719 + $0x61] sm:$0xff]
      %v735 = vld [vmem:[%s719 + $0x71] sm:$0xff]
      %v736 = vld [vmem:[%s719 + $0x2] sm:$0xff]
      %v737 = vld [vmem:[%s719 + $0x12] sm:$0xff]
      %v738 = vld [vmem:[%s719 + $0x22] sm:$0xff]
      %v739 = vld [vmem:[%s719 + $0x32] sm:$0xff]
      %v740 = vld [vmem:[%s719 + $0x42] sm:$0xff]
      %v741 = vld [vmem:[%s719 + $0x52] sm:$0xff]
      %v742 = vld [vmem:[%s719 + $0x62] sm:$0xff]
      %v743 = vld [vmem:[%s719 + $0x72] sm:$0xff]
      %752 = vrot.lane.b32.xlu0 %v679, 32
      %v753 = vpop.permute.xlu0 %752
      %754 = vrot.lane.b32.xlu0 %v680, 32
      %v755 = vpop.permute.xlu0 %754
      %756 = vrot.lane.b32.xlu0 %v681, 32
      %v757 = vpop.permute.xlu0 %756
      %758 = vrot.lane.b32.xlu0 %v682, 32
      %v759 = vpop.permute.xlu0 %758
      %760 = vrot.lane.b32.xlu0 %v683, 32
      %v761 = vpop.permute.xlu0 %760
      %762 = vrot.lane.b32.xlu0 %v684, 32
      %v763 = vpop.permute.xlu0 %762
      %764 = vrot.lane.b32.xlu0 %v685, 32
      %v765 = vpop.permute.xlu0 %764
      %766 = vrot.lane.b32.xlu0 %v686, 32
      %v767 = vpop.permute.xlu0 %766
      %784 = vrot.lane.b32.xlu0 %v687, 64
      %v785 = vpop.permute.xlu0 %784
      %786 = vrot.lane.b32.xlu0 %v688, 64
      %v787 = vpop.permute.xlu0 %786
      %788 = vrot.lane.b32.xlu0 %v689, 64
      %v789 = vpop.permute.xlu0 %788
      %790 = vrot.lane.b32.xlu0 %v690, 64
      %v791 = vpop.permute.xlu0 %790
      %792 = vrot.lane.b32.xlu0 %v691, 64
      %v793 = vpop.permute.xlu0 %792
      %794 = vrot.lane.b32.xlu0 %v692, 64
      %v795 = vpop.permute.xlu0 %794
      %796 = vrot.lane.b32.xlu0 %v693, 64
      %v797 = vpop.permute.xlu0 %796
      %798 = vrot.lane.b32.xlu0 %v694, 64
      %v799 = vpop.permute.xlu0 %798
      %816 = vrot.lane.b32.xlu0 %v695, 96
      %v817 = vpop.permute.xlu0 %816
      %818 = vrot.lane.b32.xlu0 %v696, 96
      %v819 = vpop.permute.xlu0 %818
      %820 = vrot.lane.b32.xlu0 %v697, 96
      %v821 = vpop.permute.xlu0 %820
      %822 = vrot.lane.b32.xlu0 %v698, 96
      %v823 = vpop.permute.xlu0 %822
      %824 = vrot.lane.b32.xlu0 %v699, 96
      %v825 = vpop.permute.xlu0 %824
      %826 = vrot.lane.b32.xlu0 %v700, 96
      %v827 = vpop.permute.xlu0 %826
      %828 = vrot.lane.b32.xlu0 %v701, 96
      %v829 = vpop.permute.xlu0 %828
      %830 = vrot.lane.b32.xlu0 %v702, 96
      %v831 = vpop.permute.xlu0 %830
      %848 = vrot.lane.b32.xlu0 %v711, 32
      %v849 = vpop.permute.xlu0 %848
      %850 = vrot.lane.b32.xlu0 %v712, 32
      %v851 = vpop.permute.xlu0 %850
      %852 = vrot.lane.b32.xlu0 %v713, 32
      %v853 = vpop.permute.xlu0 %852
      %854 = vrot.lane.b32.xlu0 %v714, 32
      %v855 = vpop.permute.xlu0 %854
      %856 = vrot.lane.b32.xlu0 %v715, 32
      %v857 = vpop.permute.xlu0 %856
      %858 = vrot.lane.b32.xlu0 %v716, 32
      %v859 = vpop.permute.xlu0 %858
      %860 = vrot.lane.b32.xlu0 %v717, 32
      %v861 = vpop.permute.xlu0 %860
      %862 = vrot.lane.b32.xlu0 %v718, 32
      %v863 = vpop.permute.xlu0 %862
      %880 = vrot.lane.b32.xlu0 %v720, 64
      %v881 = vpop.permute.xlu0 %880
      %882 = vrot.lane.b32.xlu0 %v721, 64
      %v883 = vpop.permute.xlu0 %882
      %884 = vrot.lane.b32.xlu0 %v722, 64
      %v885 = vpop.permute.xlu0 %884
      %886 = vrot.lane.b32.xlu0 %v723, 64
      %v887 = vpop.permute.xlu0 %886
      %888 = vrot.lane.b32.xlu0 %v724, 64
      %v889 = vpop.permute.xlu0 %888
      %890 = vrot.lane.b32.xlu0 %v725, 64
      %v891 = vpop.permute.xlu0 %890
      %892 = vrot.lane.b32.xlu0 %v726, 64
      %v893 = vpop.permute.xlu0 %892
      %894 = vrot.lane.b32.xlu0 %v727, 64
      %v895 = vpop.permute.xlu0 %894
      %912 = vrot.lane.b32.xlu0 %v728, 96
      %v913 = vpop.permute.xlu0 %912
      %914 = vrot.lane.b32.xlu0 %v729, 96
      %v915 = vpop.permute.xlu0 %914
      %916 = vrot.lane.b32.xlu0 %v730, 96
      %v917 = vpop.permute.xlu0 %916
      %918 = vrot.lane.b32.xlu0 %v731, 96
      %v919 = vpop.permute.xlu0 %918
      %920 = vrot.lane.b32.xlu0 %v732, 96
      %v921 = vpop.permute.xlu0 %920
      %922 = vrot.lane.b32.xlu0 %v733, 96
      %v923 = vpop.permute.xlu0 %922
      %924 = vrot.lane.b32.xlu0 %v734, 96
      %v925 = vpop.permute.xlu0 %924
      %926 = vrot.lane.b32.xlu0 %v735, 96
      %v927 = vpop.permute.xlu0 %926
      %v936 = vsel %vm634, %v671, %v753
      %v937 = vsel %vm634, %v672, %v755
      %v938 = vsel %vm634, %v673, %v757
      %v939 = vsel %vm634, %v674, %v759
      %v940 = vsel %vm634, %v675, %v761
      %v941 = vsel %vm634, %v676, %v763
      %v942 = vsel %vm634, %v677, %v765
      %v943 = vsel %vm634, %v678, %v767
      %vm944 = vcmask 523264
      %v945 = vsel %vm944, %v936, %v785
      %v946 = vsel %vm944, %v937, %v787
      %v947 = vsel %vm944, %v938, %v789
      %v948 = vsel %vm944, %v939, %v791
      %v949 = vsel %vm944, %v940, %v793
      %v950 = vsel %vm944, %v941, %v795
      %v951 = vsel %vm944, %v942, %v797
      %v952 = vsel %vm944, %v943, %v799
      %vm953 = vcmask 785408
      %v954 = vsel %vm953, %v945, %v817
      %v955 = vsel %vm953, %v946, %v819
      %v956 = vsel %vm953, %v947, %v821
      %v957 = vsel %vm953, %v948, %v823
      %v958 = vsel %vm953, %v949, %v825
      %v959 = vsel %vm953, %v950, %v827
      %v960 = vsel %vm953, %v951, %v829
      %v961 = vsel %vm953, %v952, %v831
      %v962 = vsel %vm634, %v703, %v849
      %v963 = vsel %vm634, %v704, %v851
      %v964 = vsel %vm634, %v705, %v853
      %v965 = vsel %vm634, %v706, %v855
      %v966 = vsel %vm634, %v707, %v857
      %v967 = vsel %vm634, %v708, %v859
      %v968 = vsel %vm634, %v709, %v861
      %v969 = vsel %vm634, %v710, %v863
      %v970 = vsel %vm944, %v962, %v881
      %v971 = vsel %vm944, %v963, %v883
      %v972 = vsel %vm944, %v964, %v885
      %v973 = vsel %vm944, %v965, %v887
      %v974 = vsel %vm944, %v966, %v889
      %v975 = vsel %vm944, %v967, %v891
      %v976 = vsel %vm944, %v968, %v893
      %v977 = vsel %vm944, %v969, %v895
      %v978 = vsel %vm953, %v970, %v913
      %v979 = vsel %vm953, %v971, %v915
      %v980 = vsel %vm953, %v972, %v917
      %v981 = vsel %vm953, %v973, %v919
      %v982 = vsel %vm953, %v974, %v921
      %v983 = vsel %vm953, %v975, %v923
      %v984 = vsel %vm953, %v976, %v925
      %v985 = vsel %vm953, %v977, %v927
      %v986 = vpack.c.bf16 %v955, %v954
      %v987 = vpack.c.bf16 %v979, %v978
      %v988 = vpack.c.bf16 %v737, %v736
      %v989 = vpack.c.bf16 %v957, %v956
      %v990 = vpack.c.bf16 %v981, %v980
      %v991 = vpack.c.bf16 %v739, %v738
      %v992 = vpack.c.bf16 %v959, %v958
      %v993 = vpack.c.bf16 %v983, %v982
      %v994 = vpack.c.bf16 %v741, %v740
      %v995 = vpack.c.bf16 %v961, %v960
      %v996 = vpack.c.bf16 %v985, %v984
      %v997 = vpack.c.bf16 %v743, %v742
      %v998 = vld [vmem:[%s3] sm:$0xf]
      %v999 = vld [vmem:[%s3 + $0x4] sm:$0xf]
      %v1000 = vld [vmem:[%s3 + $0x8] sm:$0xf]
      %v1001 = vld [vmem:[%s3 + $0xc] sm:$0xf]
      %v1002 = vld [vmem:[%s3 + $0x10] sm:$0xf]
      %v1003 = vld [vmem:[%s3 + $0x14] sm:$0xf]
      %v1004 = vld [vmem:[%s3 + $0x18] sm:$0xf]
      %v1005 = vld [vmem:[%s3 + $0x1c] sm:$0xf]
      %v1006 = vld [vmem:[%s3 + $0x20] sm:$0xf]
      %v1007 = vld [vmem:[%s3 + $0x24] sm:$0xf]
      %v1008 = vld [vmem:[%s3 + $0x28] sm:$0xf]
      %v1009 = vld [vmem:[%s3 + $0x2c] sm:$0xf]
      %v1010 = vld [vmem:[%s3 + $0x30] sm:$0xf]
      %v1011 = vld [vmem:[%s3 + $0x34] sm:$0xf]
      %v1012 = vld [vmem:[%s3 + $0x38] sm:$0xf]
      %v1013 = vld [vmem:[%s3 + $0x3c] sm:$0xf]
      %v1014 = vld [vmem:[%s3 + $0x40] sm:$0xf]
      %v1015 = vld [vmem:[%s3 + $0x44] sm:$0xf]
      %v1016 = vld [vmem:[%s3 + $0x48] sm:$0xf]
      %v1017 = vld [vmem:[%s3 + $0x4c] sm:$0xf]
      %v1018 = vld [vmem:[%s3 + $0x50] sm:$0xf]
      %v1019 = vld [vmem:[%s3 + $0x54] sm:$0xf]
      %v1020 = vld [vmem:[%s3 + $0x58] sm:$0xf]
      %v1021 = vld [vmem:[%s3 + $0x5c] sm:$0xf]
      %v1022 = vld [vmem:[%s3 + $0x60] sm:$0xf]
      %v1023 = vld [vmem:[%s3 + $0x64] sm:$0xf]
      %v1024 = vld [vmem:[%s3 + $0x68] sm:$0xf]
      %v1025 = vld [vmem:[%s3 + $0x6c] sm:$0xf]
      %v1026 = vld [vmem:[%s3 + $0x70] sm:$0xf]
      %v1027 = vld [vmem:[%s3 + $0x74] sm:$0xf]
      %v1028 = vld [vmem:[%s3 + $0x78] sm:$0xf]
      %v1029 = vld [vmem:[%s3 + $0x7c] sm:$0xf]
      %v1030 = vld [vmem:[%s3 + $0x80] sm:$0xf]
      %v1031 = vld [vmem:[%s3 + $0x84] sm:$0xf]
      %v1032 = vld [vmem:[%s3 + $0x88] sm:$0xf]
      %v1033 = vld [vmem:[%s3 + $0x8c] sm:$0xf]
      %v1034 = vld [vmem:[%s4] sm:$0x1]
      %v1036 = vperm.slane %v1034, 0
      %v1074 = vunpack.c.l.b16 %v998
      %v1075 = vunpack.c.l.b16 %v999
      %v1076 = vunpack.c.l.b16 %v1000
      %v1077 = vunpack.c.l.b16 %v1001
      %v1078 = vunpack.c.l.b16 %v1002
      %v1079 = vunpack.c.l.b16 %v1003
      %v1080 = vunpack.c.l.b16 %v1004
      %v1081 = vunpack.c.l.b16 %v1005
      %v1082 = vunpack.c.l.b16 %v1006
      %v1083 = vunpack.c.l.b16 %v1007
      %v1084 = vunpack.c.l.b16 %v1008
      %v1085 = vunpack.c.l.b16 %v1009
      %v1086 = vunpack.c.l.b16 %v1010
      %v1087 = vunpack.c.l.b16 %v1011
      %v1088 = vunpack.c.l.b16 %v1012
      %v1089 = vunpack.c.l.b16 %v1013
      %v1090 = vunpack.c.l.b16 %v1014
      %v1091 = vunpack.c.l.b16 %v1015
      %v1092 = vunpack.c.l.b16 %v1016
      %v1093 = vunpack.c.l.b16 %v1017
      %v1094 = vunpack.c.l.b16 %v1018
      %v1095 = vunpack.c.l.b16 %v1019
      %v1096 = vunpack.c.l.b16 %v1020
      %v1097 = vunpack.c.l.b16 %v1021
      %v1098 = vunpack.c.l.b16 %v1022
      %v1099 = vunpack.c.l.b16 %v1023
      %v1100 = vunpack.c.l.b16 %v1024
      %v1101 = vunpack.c.l.b16 %v1025
      %v1102 = vunpack.c.l.b16 %v1026
      %v1103 = vunpack.c.l.b16 %v1027
      %v1104 = vunpack.c.l.b16 %v1028
      %v1105 = vunpack.c.l.b16 %v1029
      %v1106 = vunpack.c.l.b16 %v1030
      %v1107 = vunpack.c.l.b16 %v1031
      %v1108 = vunpack.c.l.b16 %v1032
      %v1109 = vunpack.c.l.b16 %v1033
      %v1110 = vpack.c.b16 %v1075, %v1074
      %v1111 = vpack.c.b16 %v1077, %v1076
      %v1112 = vpack.c.b16 %v1079, %v1078
      %v1113 = vpack.c.b16 %v1081, %v1080
      %v1114 = vpack.c.b16 %v1083, %v1082
      %v1115 = vpack.c.b16 %v1085, %v1084
      %v1116 = vpack.c.b16 %v1087, %v1086
      %v1117 = vpack.c.b16 %v1089, %v1088
      %v1118 = vpack.c.b16 %v1091, %v1090
      %v1119 = vpack.c.b16 %v1093, %v1092
      %v1120 = vpack.c.b16 %v1095, %v1094
      %v1121 = vpack.c.b16 %v1097, %v1096
      %v1122 = vpack.c.b16 %v1099, %v1098
      %v1123 = vpack.c.b16 %v1101, %v1100
      %v1124 = vpack.c.b16 %v1103, %v1102
      %v1125 = vpack.c.b16 %v1105, %v1104
      %v1126 = vpack.c.b16 %v1107, %v1106
      %v1127 = vpack.c.b16 %v1109, %v1108
      %v1147 = vsel %vm634, %v988, 0
      %v1150 = vsel %vm634, %v991, 0
      %v1153 = vsel %vm634, %v994, 0
      %v1156 = vsel %vm634, %v997, 0
      %1158 = vmatpush.bf16.msra.mxu0 %v1117
      %1159 = vmatpush.bf16.msra.mxu0 %v1116
      %1160 = vmatpush.bf16.msra.mxu0 %v1115
      %1161 = vmatpush.bf16.msra.mxu0 %v1114
      %1162 = vmatpush.bf16.msra.mxu0 %v1113
      %1163 = vmatpush.bf16.msra.mxu0 %v1112
      %1164 = vmatpush.bf16.msra.mxu0 %v1111
      %1165 = vmatpush.bf16.msra.mxu0 %v1110
      %1166 = vmatmul.bf16.gmra.mxu0 %v986
      %v1167 = vpop.f32.mrf.mxu0
      %v1168 = vadd.f32 %v1036, %v1167
      %v1169 = vpop.f32.mrf.mxu0
      %v1170 = vadd.f32 %v1036, %v1169
      %1171 = vmatmul.bf16.gmra.mxu0 %v989
      %v1172 = vpop.f32.mrf.mxu0
      %v1173 = vadd.f32 %v1036, %v1172
      %v1174 = vpop.f32.mrf.mxu0
      %v1175 = vadd.f32 %v1036, %v1174
      %1176 = vmatmul.bf16.gmra.mxu0 %v992
      %v1177 = vpop.f32.mrf.mxu0
      %v1178 = vadd.f32 %v1036, %v1177
      %v1179 = vpop.f32.mrf.mxu0
      %v1180 = vadd.f32 %v1036, %v1179
      %1181 = vmatmul.bf16.gmra.mxu0 %v995
      %v1182 = vpop.f32.mrf.mxu0
      %v1183 = vadd.f32 %v1036, %v1182
      %v1184 = vpop.f32.mrf.mxu0
      %v1185 = vadd.f32 %v1036, %v1184
      %1186 = vdwg.mxu0
      %1187 = vmatpush.bf16.msra.mxu0 %v1125
      %1188 = vmatpush.bf16.msra.mxu0 %v1124
      %1189 = vmatpush.bf16.msra.mxu0 %v1123
      %1190 = vmatpush.bf16.msra.mxu0 %v1122
      %1191 = vmatpush.bf16.msra.mxu0 %v1121
      %1192 = vmatpush.bf16.msra.mxu0 %v1120
      %1193 = vmatpush.bf16.msra.mxu0 %v1119
      %1194 = vmatpush.bf16.msra.mxu0 %v1118
      %1195 = vmatmul.bf16.gmra.mxu0 %v987
      %v1196 = vpop.f32.mrf.mxu0
      %v1197 = vadd.f32 %v1168, %v1196
      %v1198 = vpop.f32.mrf.mxu0
      %v1199 = vadd.f32 %v1170, %v1198
      %1200 = vmatmul.bf16.gmra.mxu0 %v990
      %v1201 = vpop.f32.mrf.mxu0
      %v1202 = vadd.f32 %v1173, %v1201
      %v1203 = vpop.f32.mrf.mxu0
      %v1204 = vadd.f32 %v1175, %v1203
      %1205 = vmatmul.bf16.gmra.mxu0 %v993
      %v1206 = vpop.f32.mrf.mxu0
      %v1207 = vadd.f32 %v1178, %v1206
      %v1208 = vpop.f32.mrf.mxu0
      %v1209 = vadd.f32 %v1180, %v1208
      %1210 = vmatmul.bf16.gmra.mxu0 %v996
      %v1211 = vpop.f32.mrf.mxu0
      %v1212 = vadd.f32 %v1183, %v1211
      %v1213 = vpop.f32.mrf.mxu0
      %v1214 = vadd.f32 %v1185, %v1213
      %1215 = vdwg.mxu0
      %1216 = vmatpush.bf16.msra.mxu0 0
      %1217 = vmatpush.bf16.msra.mxu0 0
      %1218 = vmatpush.bf16.msra.mxu0 0
      %1219 = vmatpush.bf16.msra.mxu0 0
      %1220 = vmatpush.bf16.msra.mxu0 0
      %1221 = vmatpush.bf16.msra.mxu0 0
      %1222 = vmatpush.bf16.msra.mxu0 %v1127
      %1223 = vmatpush.bf16.msra.mxu0 %v1126
      %1224 = vmatmul.bf16.gmra.mxu0 %v1147
      %v1225 = vpop.f32.mrf.mxu0
      %v1226 = vadd.f32 %v1197, %v1225
      %v1227 = vpop.f32.mrf.mxu0
      %v1228 = vadd.f32 %v1199, %v1227
      %1229 = vmatmul.bf16.gmra.mxu0 %v1150
      %v1230 = vpop.f32.mrf.mxu0
      %v1231 = vadd.f32 %v1202, %v1230
      %v1232 = vpop.f32.mrf.mxu0
      %v1233 = vadd.f32 %v1204, %v1232
      %1234 = vmatmul.bf16.gmra.mxu0 %v1153
      %v1235 = vpop.f32.mrf.mxu0
      %v1236 = vadd.f32 %v1207, %v1235
      %v1237 = vpop.f32.mrf.mxu0
      %v1238 = vadd.f32 %v1209, %v1237
      %1239 = vmatmul.bf16.gmra.mxu0 %v1156
      %v1240 = vpop.f32.mrf.mxu0
      %v1241 = vadd.f32 %v1212, %v1240
      %v1242 = vpop.f32.mrf.mxu0
      %v1243 = vadd.f32 %v1214, %v1242
      %1244 = vdwg.mxu0
      %vm1245 = vcmp.ge.f32.partialorder %v1226, 0.0
      %vm1246 = vcmp.ge.f32.partialorder %v1228, 0.0
      %vm1247 = vcmp.ge.f32.partialorder %v1231, 0.0
      %vm1248 = vcmp.ge.f32.partialorder %v1233, 0.0
      %vm1249 = vcmp.ge.f32.partialorder %v1236, 0.0
      %vm1250 = vcmp.ge.f32.partialorder %v1238, 0.0
      %vm1251 = vcmp.ge.f32.partialorder %v1241, 0.0
      %vm1252 = vcmp.ge.f32.partialorder %v1243, 0.0
      %v1253 = vmul.f32 %v1226, 0.2
      %v1254 = vmul.f32 %v1228, 0.2
      %v1255 = vmul.f32 %v1231, 0.2
      %v1256 = vmul.f32 %v1233, 0.2
      %v1257 = vmul.f32 %v1236, 0.2
      %v1258 = vmul.f32 %v1238, 0.2
      %v1259 = vmul.f32 %v1241, 0.2
      %v1260 = vmul.f32 %v1243, 0.2
      %v1261 = vsel %vm1245, %v1226, %v1253
      %v1262 = vsel %vm1246, %v1228, %v1254
      %v1263 = vsel %vm1247, %v1231, %v1255
      %v1264 = vsel %vm1248, %v1233, %v1256
      %v1265 = vsel %vm1249, %v1236, %v1257
      %v1266 = vsel %vm1250, %v1238, %v1258
      %v1267 = vsel %vm1251, %v1241, %v1259
      %v1268 = vsel %vm1252, %v1243, %v1260
      %v1269 = vpack.c.bf16 %v1261, %v1261
      %v1270 = vpack.c.bf16 %v1262, %v1262
      %v1271 = vpack.c.bf16 %v1263, %v1263
      %v1272 = vpack.c.bf16 %v1264, %v1264
      %v1273 = vpack.c.bf16 %v1265, %v1265
      %v1274 = vpack.c.bf16 %v1266, %v1266
      %v1275 = vpack.c.bf16 %v1267, %v1267
      %v1276 = vpack.c.bf16 %v1268, %v1268
      %vm1277 = vcmask 257024
      %1278 = vst.msk [vmem:[%s224] sm:$0xf] %vm1277, %v1269
      %1279 = vst.msk [vmem:[%s224 + $0x4] sm:$0xf] %vm1277, %v1270
      %1280 = vst.msk [vmem:[%s224 + $0x8] sm:$0xf] %vm1277, %v1271
      %1281 = vst.msk [vmem:[%s224 + $0xc] sm:$0xf] %vm1277, %v1272
      %1282 = vst.msk [vmem:[%s224 + $0x10] sm:$0xf] %vm1277, %v1273
      %1283 = vst.msk [vmem:[%s224 + $0x14] sm:$0xf] %vm1277, %v1274
      %1284 = vst.msk [vmem:[%s224 + $0x18] sm:$0xf] %vm1277, %v1275
      %1285 = vst.msk [vmem:[%s224 + $0x1c] sm:$0xf] %vm1277, %v1276
      %p1286 = scmp.lt.s32.totalorder %s16, 1
      %s1287 = scalar_select %p1286, %s16, 1
      %s1288 = smul.addr %s1287, 8
      %s1289 = smul.addr %s1288, 4
      %s1290 = scalar_lea.vmem %s5, %s1289
      // Predicated region
      $region41: #{discriminator_forward.3} parent=39 // pred_check
        %p1291 = pneg %p144
      $region42: #{discriminator_forward.3} parent=39 // pred_check_branch
        %1293 = sbr.rel (%p1291) target = $region44
      $region43: #{discriminator_forward.3} parent=39 // pred_region
        _
      $region44: #{discriminator_forward.3} parent=39 // pred_fallthru
        _
    $region40: #{discriminator_forward.3} parent=5 // pred_fallthru
      _
    %p1294 = scmp.le.s32.totalorder 2, %s11
    // Predicated region
    $region45: #{discriminator_forward.3} parent=5 // pred_check
      %p1295 = pneg %p1294
    $region46: #{discriminator_forward.3} parent=5 // pred_check_branch
      %1297 = sbr.rel (%p1295) target = $region48
    $region47: #{discriminator_forward.3} parent=5 // pred_region
      %s1298 = ssub.s32 %s11, 2
      // Predicated region
      $region49: #{discriminator_forward.3} parent=47 // pred_check
        %p1299 = pneg %p150
      $region50: #{discriminator_forward.3} parent=47 // pred_check_branch
        %1301 = sbr.rel (%p1299) target = $region52
      $region51: #{discriminator_forward.3} parent=47 // pred_region
        %p1302 = scmp.lt.s32.totalorder %s17, 1
        %s1303 = scalar_select %p1302, %s17, 1
        %s1304 = smul.addr %s1303, 8
        %s1305 = smul.addr %s1304, 4
        %s1306 = scalar_lea.vmem %s5, %s1305
      $region52: #{discriminator_forward.3} parent=47 // pred_fallthru
        _
    $region48: #{discriminator_forward.3} parent=5 // pred_fallthru
      _
  $region6: #{discriminator_forward.3} parent=0 // loop_footer
    %s15 = sadd.s32 1, %s11
  $region7: #{discriminator_forward.3} parent=0 // loop_footer_branch
    %10 = sbr.rel target = $region3
  $region8: #{discriminator_forward.3} parent=0 // loop_exit
    _

// kernel: discriminator_forward.4
$region0: #{discriminator_forward.4}
  #allocation0 [shape = 'u32[]', space=smem, size = 0x4, offset = 0x4, fixed_abs, tag = 'smem constant byte address 0x4 - core index']
  #allocation1 [shape = 'u32[72,128]{1,0:T(1,128)}', space=vmem, size = 0x9000, scoped, tag = 'internal scratch']
  #allocation2 [shape = 'f32[5,5,64]{2,1,0:T(8,128)}', space=vmem, size = 0x5000, scoped, tag = 'scratch operand']
  #allocation3 [shape = 'f32[5,5,64]{2,1,0:T(8,128)}', space=vmem, size = 0x5000, scoped, tag = 'scratch operand']
  #allocation4 [shape = 'f32[6,6,64]{2,1,0:T(8,128)}', space=vmem, size = 0x6000, scoped, tag = 'scratch operand']
  %s0 = inlined_call_operand.vmem [shape: bf16[2,4,8,64], index: 0, kind: input, shape index: {}]
  %s1 = inlined_call_operand.vmem [shape: bf16[384,64], index: 1, kind: input, shape index: {}]
  %s2 = inlined_call_operand.vmem [shape: f32[1,64], index: 2, kind: input, shape index: {}]
  %s3 = inlined_call_operand.vmem [shape: bf16[576,64], index: 3, kind: input, shape index: {}]
  %s4 = inlined_call_operand.vmem [shape: f32[1,64], index: 4, kind: input, shape index: {}]
  %s5 = inlined_call_operand.vmem [shape: bf16[2,4,4,64], index: 5, kind: output, shape index: {}]
  %s6 = sld [smem:[#allocation0]]
  $region53: #{discriminator_forward.4} parent=0
    _
  %s8 = ssub.s32 1, %s6
  %s9 = scalar_select 0, %s8, %s6
  loop: start=0, step=1, limit=4
  $region2: #{discriminator_forward.4} parent=0 // loop_pre_header
    _
  $region3: #{discriminator_forward.4} parent=0 // loop_header
    %s11 = sphi 0, %s15
    %p12 = scmp.ge.s32.totalorder %s11, 4
    %s21 = sphi 0, %s23
    %s24 = sphi 0, %s21
    %s25 = sphi 0, %s24
    %s41 = sphi 0, %s25
    %s45 = sphi 0, %s45
    %s47 = sphi 0, %s45
    %s48 = sphi 0, %s47
    %s62 = sphi 0, %s48
    %s66 = sphi 0, %s66
    %s68 = sphi 0, %s66
    %s69 = sphi 0, %s68
    %s83 = sphi 0, %s69
    %s87 = sphi 0, %s87
    %s89 = sphi 0, %s87
    %s90 = sphi 0, %s89
    %s104 = sphi 0, %s90
    %s108 = sphi 0, %s108
    %s110 = sphi 0, %s108
    %s111 = sphi 0, %s110
    %s125 = sphi 0, %s111
    %s131 = sphi 0, %s133
    %s134 = sphi 0, %s131
    %s135 = sphi 0, %s134
    %s151 = sphi 0, %s135
  $region4: #{discriminator_forward.4} parent=0 // loop_header_branch
    %14 = sbr.rel (%p12) target = $region8
  $region5: #{discriminator_forward.4} parent=0 // loop_body
    %s16 = ssub.s32 %s11, 1
    %s17 = ssub.s32 %s11, 2
    %s18 = sadd.s32 %s11, 1
    %s19 = ssub.s32 %s11, %s18
    %p20 = scmp.eq.s32.totalorder %s19, 0
    %s22 = sadd.s32 %s21, 1
    %s23 = scalar_select %p20, %s21, %s22
    %p26 = pneg %p20
    %p27 = scmp.eq.s32.totalorder %s11, 1
    %p28 = por %p26, %p27
    %p29 = scmp.ne.s32.totalorder %s21, %s24
    %p30 = scmp.eq.s32.totalorder %s11, 0
    %p31 = por %p29, %p30
    %p32 = scmp.ne.s32.totalorder %s21, %s24
    %p33 = scmp.eq.s32.totalorder %s16, 1
    %p34 = por %p32, %p33
    %p35 = scmp.ne.s32.totalorder %s24, %s25
    %p36 = scmp.eq.s32.totalorder %s16, 0
    %p37 = por %p35, %p36
    %p38 = scmp.ne.s32.totalorder %s24, %s25
    %p39 = scmp.eq.s32.totalorder %s17, 1
    %p40 = por %p38, %p39
    %p42 = scmp.ne.s32.totalorder %s25, %s41
    %p43 = scmp.eq.s32.totalorder %s17, 0
    %p44 = por %p42, %p43
    %s46 = sadd.s32 %s45, 1
    %p49 = scmp.eq.s32.totalorder %s11, 1
    %p50 = scmp.ne.s32.totalorder %s45, %s47
    %p51 = scmp.eq.s32.totalorder %s11, 0
    %p52 = por %p50, %p51
    %p53 = scmp.ne.s32.totalorder %s45, %s47
    %p54 = scmp.eq.s32.totalorder %s16, 1
    %p55 = por %p53, %p54
    %p56 = scmp.ne.s32.totalorder %s47, %s48
    %p57 = scmp.eq.s32.totalorder %s16, 0
    %p58 = por %p56, %p57
    %p59 = scmp.ne.s32.totalorder %s47, %s48
    %p60 = scmp.eq.s32.totalorder %s17, 1
    %p61 = por %p59, %p60
    %p63 = scmp.ne.s32.totalorder %s48, %s62
    %p64 = scmp.eq.s32.totalorder %s17, 0
    %p65 = por %p63, %p64
    %s67 = sadd.s32 %s66, 1
    %p70 = scmp.eq.s32.totalorder %s11, 1
    %p71 = scmp.ne.s32.totalorder %s66, %s68
    %p72 = scmp.eq.s32.totalorder %s11, 0
    %p73 = por %p71, %p72
    %p74 = scmp.ne.s32.totalorder %s66, %s68
    %p75 = scmp.eq.s32.totalorder %s16, 1
    %p76 = por %p74, %p75
    %p77 = scmp.ne.s32.totalorder %s68, %s69
    %p78 = scmp.eq.s32.totalorder %s16, 0
    %p79 = por %p77, %p78
    %p80 = scmp.ne.s32.totalorder %s68, %s69
    %p81 = scmp.eq.s32.totalorder %s17, 1
    %p82 = por %p80, %p81
    %p84 = scmp.ne.s32.totalorder %s69, %s83
    %p85 = scmp.eq.s32.totalorder %s17, 0
    %p86 = por %p84, %p85
    %s88 = sadd.s32 %s87, 1
    %p91 = scmp.eq.s32.totalorder %s11, 1
    %p92 = scmp.ne.s32.totalorder %s87, %s89
    %p93 = scmp.eq.s32.totalorder %s11, 0
    %p94 = por %p92, %p93
    %p95 = scmp.ne.s32.totalorder %s87, %s89
    %p96 = scmp.eq.s32.totalorder %s16, 1
    %p97 = por %p95, %p96
    %p98 = scmp.ne.s32.totalorder %s89, %s90
    %p99 = scmp.eq.s32.totalorder %s16, 0
    %p100 = por %p98, %p99
    %p101 = scmp.ne.s32.totalorder %s89, %s90
    %p102 = scmp.eq.s32.totalorder %s17, 1
    %p103 = por %p101, %p102
    %p105 = scmp.ne.s32.totalorder %s90, %s104
    %p106 = scmp.eq.s32.totalorder %s17, 0
    %p107 = por %p105, %p106
    %s109 = sadd.s32 %s108, 1
    %p112 = scmp.eq.s32.totalorder %s11, 1
    %p113 = scmp.ne.s32.totalorder %s108, %s110
    %p114 = scmp.eq.s32.totalorder %s11, 0
    %p115 = por %p113, %p114
    %p116 = scmp.ne.s32.totalorder %s108, %s110
    %p117 = scmp.eq.s32.totalorder %s16, 1
    %p118 = por %p116, %p117
    %p119 = scmp.ne.s32.totalorder %s110, %s111
    %p120 = scmp.eq.s32.totalorder %s16, 0
    %p121 = por %p119, %p120
    %p122 = scmp.ne.s32.totalorder %s110, %s111
    %p123 = scmp.eq.s32.totalorder %s17, 1
    %p124 = por %p122, %p123
    %p126 = scmp.ne.s32.totalorder %s111, %s125
    %p127 = scmp.eq.s32.totalorder %s17, 0
    %p128 = por %p126, %p127
    %s129 = ssub.s32 %s11, %s18
    %p130 = scmp.eq.s32.totalorder %s129, 0
    %s132 = sadd.s32 %s131, 1
    %s133 = scalar_select %p130, %s131, %s132
    %p136 = pneg %p130
    %p137 = scmp.eq.s32.totalorder %s11, 1
    %p138 = por %p136, %p137
    %p139 = scmp.ne.s32.totalorder %s131, %s134
    %p140 = scmp.eq.s32.totalorder %s11, 0
    %p141 = por %p139, %p140
    %p142 = scmp.ne.s32.totalorder %s131, %s134
    %p143 = scmp.eq.s32.totalorder %s16, 1
    %p144 = por %p142, %p143
    %p145 = scmp.ne.s32.totalorder %s134, %s135
    %p146 = scmp.eq.s32.totalorder %s16, 0
    %p147 = por %p145, %p146
    %p148 = scmp.ne.s32.totalorder %s134, %s135
    %p149 = scmp.eq.s32.totalorder %s17, 1
    %p150 = por %p148, %p149
    %p152 = scmp.ne.s32.totalorder %s135, %s151
    %p153 = scmp.eq.s32.totalorder %s17, 0
    %p154 = por %p152, %p153
    %p155 = scmp.le.s32.totalorder 1, %s11
    %p156 = scmp.lt.s32.totalorder %s11, 3
    %p157 = pnand %p155, %p156
    %p158 = pneg %p157
    // Predicated region
    $region9: #{discriminator_forward.4} parent=5 // pred_check
      _
    $region10: #{discriminator_forward.4} parent=5 // pred_check_branch
      %160 = sbr.rel (%p157) target = $region12
    $region11: #{discriminator_forward.4} parent=5 // pred_region
      %s161 = ssub.s32 %s11, 1
      // Predicated region
      $region13: #{discriminator_forward.4} parent=11 // pred_check
        %p162 = pneg %p58
      $region14: #{discriminator_forward.4} parent=11 // pred_check_branch
        %164 = sbr.rel (%p162) target = $region16
      $region15: #{discriminator_forward.4} parent=11 // pred_region
        _
      $region16: #{discriminator_forward.4} parent=11 // pred_fallthru
        _
      // Predicated region
      $region17: #{discriminator_forward.4} parent=11 // pred_check
        %p165 = pneg %p79
      $region18: #{discriminator_forward.4} parent=11 // pred_check_branch
        %167 = sbr.rel (%p165) target = $region20
      $region19: #{discriminator_forward.4} parent=11 // pred_region
        _
      $region20: #{discriminator_forward.4} parent=11 // pred_fallthru
        _
      // Predicated region
      $region21: #{discriminator_forward.4} parent=11 // pred_check
        %p168 = pneg %p100
      $region22: #{discriminator_forward.4} parent=11 // pred_check_branch
        %170 = sbr.rel (%p168) target = $region24
      $region23: #{discriminator_forward.4} parent=11 // pred_region
        _
      $region24: #{discriminator_forward.4} parent=11 // pred_fallthru
        _
      // Predicated region
      $region25: #{discriminator_forward.4} parent=11 // pred_check
        %p171 = pneg %p121
      $region26: #{discriminator_forward.4} parent=11 // pred_check_branch
        %173 = sbr.rel (%p171) target = $region28
      $region27: #{discriminator_forward.4} parent=11 // pred_region
        _
      $region28: #{discriminator_forward.4} parent=11 // pred_fallthru
        _
    $region12: #{discriminator_forward.4} parent=5 // pred_fallthru
      _
    %p174 = scmp.lt.s32.totalorder %s11, 2
    // Predicated region
    $region29: #{discriminator_forward.4} parent=5 // pred_check
      %p175 = pneg %p174
    $region30: #{discriminator_forward.4} parent=5 // pred_check_branch
      %177 = sbr.rel (%p175) target = $region32
    $region31: #{discriminator_forward.4} parent=5 // pred_region
      // Predicated region
      $region33: #{discriminator_forward.4} parent=31 // pred_check
        %p178 = pneg %p31
      $region34: #{discriminator_forward.4} parent=31 // pred_check_branch
        %180 = sbr.rel (%p178) target = $region36
      $region35: #{discriminator_forward.4} parent=31 // pred_region
        %p181 = scmp.lt.s32.totalorder %s11, 1
        %s182 = scalar_select %p181, %s11, 1
        %s183 = smul.addr %s182, 4
        %s184 = smul.addr %s183, 4
        %s185 = scalar_lea.vmem %s0, %s184
      $region36: #{discriminator_forward.4} parent=31 // pred_fallthru
        _
    $region32: #{discriminator_forward.4} parent=5 // pred_fallthru
      _
    %p186 = scmp.le.s32.totalorder 1, %s11
    %p187 = scmp.lt.s32.totalorder %s11, 3
    %p188 = pnand %p186, %p187
    %p189 = pneg %p188
    // Predicated region
    $region37: #{discriminator_forward.4} parent=5 // pred_check
      _
    $region38: #{discriminator_forward.4} parent=5 // pred_check_branch
      %191 = sbr.rel (%p188) target = $region40
    $region39: #{discriminator_forward.4} parent=5 // pred_region
      %s192 = ssub.s32 %s11, 1
      %p193 = scmp.lt.s32.totalorder %s16, 1
      %s194 = scalar_select %p193, %s16, 1
      %s195 = smul.addr %s194, 4
      %s196 = smul.addr %s195, 4
      %s197 = scalar_lea.vmem %s0, %s196
      %p198 = pneg %p37
      %p199 = pneg %p34
      %p200 = pneg %p58
      %p201 = pneg %p55
      %p202 = pneg %p79
      %p203 = pneg %p76
      %p204 = pneg %p100
      %p205 = pneg %p97
      %p206 = pneg %p121
      %p207 = pneg %p118
      %p208 = pneg %p147
      %p209 = pneg %p144
      %p210 = scmp.lt.s32.totalorder %s16, 1
      %s211 = scalar_select %p210, %s16, 1
      %s212 = smul.addr %s211, 4
      %s213 = smul.addr %s212, 2
      %s214 = scalar_lea.vmem %s5, %s213
      %p215 = scmp.lt.s32.totalorder %s16, 1
      %s216 = scalar_select %p215, %s16, 1
      %s217 = smul.addr %s216, 4
      %s218 = smul.addr %s217, 4
      %s219 = scalar_lea.vmem %s0, %s218
      %p220 = scmp.lt.s32.totalorder %s16, 1
      %s221 = scalar_select %p220, %s16, 1
      %s222 = smul.addr %s221, 4
      %s223 = smul.addr %s222, 2
      %s224 = scalar_lea.vmem %s5, %s223
      %vm226 = vcmask 520192
      %227 = vst.msk [vmem:[#allocation2] sm:$0x1f] %vm226, 0.0
      %vm228 = vcmask 516096
      %229 = vst.msk [vmem:[#allocation2] sm:$0x1] %vm228, 0.0
      %230 = vst.msk [vmem:[#allocation2 + $0x8] sm:$0x1] %vm228, 0.0
      %231 = vst.msk [vmem:[#allocation2 + $0x10] sm:$0x1] %vm228, 0.0
      %232 = vst.msk [vmem:[#allocation2 + $0x18] sm:$0x1] %vm228, 0.0
      %233 = vst.msk [vmem:[#allocation2 + $0x20] sm:$0x1] %vm228, 0.0
      %234 = vst.msk [vmem:[#allocation3] sm:$0x1f] %vm226, 0.0
      %235 = vst.msk [vmem:[#allocation3] sm:$0x1] %vm228, 0.0
      %236 = vst.msk [vmem:[#allocation3 + $0x8] sm:$0x1] %vm228, 0.0
      %237 = vst.msk [vmem:[#allocation3 + $0x10] sm:$0x1] %vm228, 0.0
      %238 = vst.msk [vmem:[#allocation3 + $0x18] sm:$0x1] %vm228, 0.0
      %239 = vst.msk [vmem:[#allocation3 + $0x20] sm:$0x1] %vm228, 0.0
      %v240 = vld [vmem:[%s219] sm:$0x3]
      %v241 = vld [vmem:[%s219 + $0x4] sm:$0x3]
      %v242 = vld [vmem:[%s219 + $0x8] sm:$0x3]
      %v243 = vld [vmem:[%s219 + $0xc] sm:$0x3]
      %v244 = vunpack.c.l.bf16 %v240
      %v245 = vunpack.c.l.bf16 %v241
      %v246 = vunpack.c.l.bf16 %v242
      %v247 = vunpack.c.l.bf16 %v243
      %s248 = scalar_lea.vmem [#allocation2], 8
      %vm249 = vcmask 519168
      %250 = vst.msk [vmem:[%s248 + $0x1] sm:$0xf] %vm249, %v244
      %251 = vst.msk [vmem:[%s248 + $0x9] sm:$0xf] %vm249, %v245
      %252 = vst.msk [vmem:[%s248 + $0x11] sm:$0xf] %vm249, %v246
      %253 = vst.msk [vmem:[%s248 + $0x19] sm:$0xf] %vm249, %v247
      %v254 = vld [vmem:[%s219] sm:$0xc]
      %v255 = vld [vmem:[%s219 + $0x4] sm:$0xc]
      %v256 = vld [vmem:[%s219 + $0x8] sm:$0xc]
      %v257 = vld [vmem:[%s219 + $0xc] sm:$0xc]
      %v258 = vunpack.c.l.bf16 %v254
      %v259 = vunpack.c.l.bf16 %v255
      %v260 = vunpack.c.l.bf16 %v256
      %v261 = vunpack.c.l.bf16 %v257
      %s262 = scalar_lea.vmem [#allocation3], 8
      %vm263 = vcmask 523268
      %264 = vst.msk [vmem:[%s262 - $0x3] sm:$0xf0] %vm263, %v258
      %265 = vst.msk [vmem:[%s262 + $0x5] sm:$0xf0] %vm263, %v259
      %266 = vst.msk [vmem:[%s262 + $0xd] sm:$0xf0] %vm263, %v260
      %267 = vst.msk [vmem:[%s262 + $0x15] sm:$0xf0] %vm263, %v261
      %v268 = vld [vmem:[#allocation3] sm:$0xf]
      %v269 = vld [vmem:[#allocation3 + $0x8] sm:$0xf]
      %v270 = vld [vmem:[#allocation3 + $0x10] sm:$0xf]
      %v271 = vld [vmem:[#allocation3 + $0x18] sm:$0xf]
      %v272 = vld [vmem:[#allocation3 + $0x1] sm:$0xf]
      %v273 = vld [vmem:[#allocation3 + $0x9] sm:$0xf]
      %v274 = vld [vmem:[#allocation3 + $0x11] sm:$0xf]
      %v275 = vld [vmem:[#allocation3 + $0x19] sm:$0xf]
      %v276 = vld [vmem:[%s248] sm:$0xf]
      %v277 = vld [vmem:[%s248 + $0x8] sm:$0xf]
      %v278 = vld [vmem:[%s248 + $0x10] sm:$0xf]
      %v279 = vld [vmem:[%s248 + $0x18] sm:$0xf]
      %v280 = vld [vmem:[%s248 + $0x1] sm:$0xf]
      %v281 = vld [vmem:[%s248 + $0x9] sm:$0xf]
      %v282 = vld [vmem:[%s248 + $0x11] sm:$0xf]
      %v283 = vld [vmem:[%s248 + $0x19] sm:$0xf]
      %v284 = vld [vmem:[%s262] sm:$0xf]
      %v285 = vld [vmem:[%s262 + $0x8] sm:$0xf]
      %v286 = vld [vmem:[%s262 + $0x10] sm:$0xf]
      %v287 = vld [vmem:[%s262 + $0x18] sm:$0xf]
      %v288 = vld [vmem:[%s262 + $0x1] sm:$0xf]
      %v289 = vld [vmem:[%s262 + $0x9] sm:$0xf]
      %v290 = vld [vmem:[%s262 + $0x11] sm:$0xf]
      %v291 = vld [vmem:[%s262 + $0x19] sm:$0xf]
      %296 = vrot.lane.b32.xlu0 %v272, 64
      %v297 = vpop.permute.xlu0 %296
      %298 = vrot.lane.b32.xlu0 %v273, 64
      %v299 = vpop.permute.xlu0 %298
      %300 = vrot.lane.b32.xlu0 %v274, 64
      %v301 = vpop.permute.xlu0 %300
      %302 = vrot.lane.b32.xlu0 %v275, 64
      %v303 = vpop.permute.xlu0 %302
      %312 = vrot.lane.b32.xlu0 %v280, 64
      %v313 = vpop.permute.xlu0 %312
      %314 = vrot.lane.b32.xlu0 %v281, 64
      %v315 = vpop.permute.xlu0 %314
      %316 = vrot.lane.b32.xlu0 %v282, 64
      %v317 = vpop.permute.xlu0 %316
      %318 = vrot.lane.b32.xlu0 %v283, 64
      %v319 = vpop.permute.xlu0 %318
      %328 = vrot.lane.b32.xlu0 %v288, 64
      %v329 = vpop.permute.xlu0 %328
      %330 = vrot.lane.b32.xlu0 %v289, 64
      %v331 = vpop.permute.xlu0 %330
      %332 = vrot.lane.b32.xlu0 %v290, 64
      %v333 = vpop.permute.xlu0 %332
      %334 = vrot.lane.b32.xlu0 %v291, 64
      %v335 = vpop.permute.xlu0 %334
      %vm340 = vcmask 523264
      %v341 = vsel %vm340, %v268, %v297
      %v342 = vsel %vm340, %v269, %v299
      %v343 = vsel %vm340, %v270, %v301
      %v344 = vsel %vm340, %v271, %v303
      %v345 = vsel %vm340, %v276, %v313
      %v346 = vsel %vm340, %v277, %v315
      %v347 = vsel %vm340, %v278, %v317
      %v348 = vsel %vm340, %v279, %v319
      %v349 = vsel %vm340, %v284, %v329
      %v350 = vsel %vm340, %v285, %v331
      %v351 = vsel %vm340, %v286, %v333
      %v352 = vsel %vm340, %v287, %v335
      %v365 = vrot.slane %v345, 4
      %v366 = vrot.slane %v346, 4
      %v367 = vrot.slane %v347, 4
      %v368 = vrot.slane %v348, 4
      %vm369 = vcmask 1043456
      %v370 = vsel %vm369, %v341, %v365
      %v371 = vsel %vm369, %v342, %v366
      %v372 = vsel %vm369, %v343, %v367
      %v373 = vsel %vm369, %v344, %v368
      %374 = vst [vmem:[#allocation1] ss:$2 sm:$0xff] %v370
      %s375 = scalar_lea.vmem [#allocation1], 1
      %376 = vst [vmem:[%s375] ss:$2 sm:$0xff] %v371
      %s377 = scalar_lea.vmem [#allocation1], 16
      %378 = vst [vmem:[%s377] ss:$2 sm:$0xff] %v349
      %s379 = scalar_lea.vmem [#allocation1], 17
      %380 = vst [vmem:[%s379] ss:$2 sm:$0xff] %v350
      %s381 = scalar_lea.vmem [#allocation1], 32
      %382 = vst [vmem:[%s381] ss:$2 sm:$0xff] %v372
      %s383 = scalar_lea.vmem [#allocation1], 33
      %384 = vst [vmem:[%s383] ss:$2 sm:$0xff] %v373
      %s385 = scalar_lea.vmem [#allocation1], 48
      %386 = vst [vmem:[%s385] ss:$2 sm:$0xff] %v351
      %s387 = scalar_lea.vmem [#allocation1], 49
      %388 = vst [vmem:[%s387] ss:$2 sm:$0xff] %v352
      %v389 = vld.sshfl [vmem:[#allocation1] sm:$0xff pattern:$0x75316420]
      %v390 = vld.sshfl [vmem:[#allocation1 + $0x8] sm:$0xff pattern:$0x75316420]
      %v391 = vld.sshfl [vmem:[#allocation1 + $0x10] sm:$0xff pattern:$0x75316420]
      %v392 = vld.sshfl [vmem:[#allocation1 + $0x20] sm:$0xff pattern:$0x75316420]
      %v393 = vld.sshfl [vmem:[#allocation1 + $0x28] sm:$0xff pattern:$0x75316420]
      %v394 = vld.sshfl [vmem:[#allocation1 + $0x30] sm:$0xff pattern:$0x75316420]
      %v401 = vpack.c.bf16 %v392, %v389
      %v402 = vpack.c.bf16 %v393, %v390
      %v403 = vpack.c.bf16 %v394, %v391
      %v404 = vld [vmem:[%s1] sm:$0xf]
      %v405 = vld [vmem:[%s1 + $0x4] sm:$0xf]
      %v406 = vld [vmem:[%s1 + $0x8] sm:$0xf]
      %v407 = vld [vmem:[%s1 + $0xc] sm:$0xf]
      %v408 = vld [vmem:[%s1 + $0x10] sm:$0xf]
      %v409 = vld [vmem:[%s1 + $0x14] sm:$0xf]
      %v410 = vld [vmem:[%s1 + $0x18] sm:$0xf]
      %v411 = vld [vmem:[%s1 + $0x1c] sm:$0xf]
      %v412 = vld [vmem:[%s1 + $0x20] sm:$0xf]
      %v413 = vld [vmem:[%s1 + $0x24] sm:$0xf]
      %v414 = vld [vmem:[%s1 + $0x28] sm:$0xf]
      %v415 = vld [vmem:[%s1 + $0x2c] sm:$0xf]
      %v416 = vld [vmem:[%s1 + $0x30] sm:$0xf]
      %v417 = vld [vmem:[%s1 + $0x34] sm:$0xf]
      %v418 = vld [vmem:[%s1 + $0x38] sm:$0xf]
      %v419 = vld [vmem:[%s1 + $0x3c] sm:$0xf]
      %v420 = vld [vmem:[%s1 + $0x40] sm:$0xf]
      %v421 = vld [vmem:[%s1 + $0x44] sm:$0xf]
      %v422 = vld [vmem:[%s1 + $0x48] sm:$0xf]
      %v423 = vld [vmem:[%s1 + $0x4c] sm:$0xf]
      %v424 = vld [vmem:[%s1 + $0x50] sm:$0xf]
      %v425 = vld [vmem:[%s1 + $0x54] sm:$0xf]
      %v426 = vld [vmem:[%s1 + $0x58] sm:$0xf]
      %v427 = vld [vmem:[%s1 + $0x5c] sm:$0xf]
      %v428 = vld [vmem:[%s1 + $0x60] sm:$0xf]
      %v429 = vld [vmem:[%s1 + $0x64] sm:$0xf]
      %v430 = vld [vmem:[%s1 + $0x68] sm:$0xf]
      %v431 = vld [vmem:[%s1 + $0x6c] sm:$0xf]
      %v432 = vld [vmem:[%s1 + $0x70] sm:$0xf]
      %v433 = vld [vmem:[%s1 + $0x74] sm:$0xf]
      %v434 = vld [vmem:[%s1 + $0x78] sm:$0xf]
      %v435 = vld [vmem:[%s1 + $0x7c] sm:$0xf]
      %v436 = vld [vmem:[%s1 + $0x80] sm:$0xf]
      %v437 = vld [vmem:[%s1 + $0x84] sm:$0xf]
      %v438 = vld [vmem:[%s1 + $0x88] sm:$0xf]
      %v439 = vld [vmem:[%s1 + $0x8c] sm:$0xf]
      %v440 = vld [vmem:[%s1 + $0x90] sm:$0xf]
      %v441 = vld [vmem:[%s1 + $0x94] sm:$0xf]
      %v442 = vld [vmem:[%s1 + $0x98] sm:$0xf]
      %v443 = vld [vmem:[%s1 + $0x9c] sm:$0xf]
      %v444 = vld [vmem:[%s1 + $0xa0] sm:$0xf]
      %v445 = vld [vmem:[%s1 + $0xa4] sm:$0xf]
      %v446 = vld [vmem:[%s1 + $0xa8] sm:$0xf]
      %v447 = vld [vmem:[%s1 + $0xac] sm:$0xf]
      %v448 = vld [vmem:[%s1 + $0xb0] sm:$0xf]
      %v449 = vld [vmem:[%s1 + $0xb4] sm:$0xf]
      %v450 = vld [vmem:[%s1 + $0xb8] sm:$0xf]
      %v451 = vld [vmem:[%s1 + $0xbc] sm:$0xf]
      %v452 = vld [vmem:[%s2] sm:$0x1]
      %v454 = vperm.slane %v452, 0
      %v504 = vunpack.c.l.b16 %v404
      %v505 = vunpack.c.l.b16 %v405
      %v506 = vunpack.c.l.b16 %v406
      %v507 = vunpack.c.l.b16 %v407
      %v508 = vunpack.c.l.b16 %v408
      %v509 = vunpack.c.l.b16 %v409
      %v510 = vunpack.c.l.b16 %v410
      %v511 = vunpack.c.l.b16 %v411
      %v512 = vunpack.c.l.b16 %v412
      %v513 = vunpack.c.l.b16 %v413
      %v514 = vunpack.c.l.b16 %v414
      %v515 = vunpack.c.l.b16 %v415
      %v516 = vunpack.c.l.b16 %v416
      %v517 = vunpack.c.l.b16 %v417
      %v518 = vunpack.c.l.b16 %v418
      %v519 = vunpack.c.l.b16 %v419
      %v520 = vunpack.c.l.b16 %v420
      %v521 = vunpack.c.l.b16 %v421
      %v522 = vunpack.c.l.b16 %v422
      %v523 = vunpack.c.l.b16 %v423
      %v524 = vunpack.c.l.b16 %v424
      %v525 = vunpack.c.l.b16 %v425
      %v526 = vunpack.c.l.b16 %v426
      %v527 = vunpack.c.l.b16 %v427
      %v528 = vunpack.c.l.b16 %v428
      %v529 = vunpack.c.l.b16 %v429
      %v530 = vunpack.c.l.b16 %v430
      %v531 = vunpack.c.l.b16 %v431
      %v532 = vunpack.c.l.b16 %v432
      %v533 = vunpack.c.l.b16 %v433
      %v534 = vunpack.c.l.b16 %v434
      %v535 = vunpack.c.l.b16 %v435
      %v536 = vunpack.c.l.b16 %v436
      %v537 = vunpack.c.l.b16 %v437
      %v538 = vunpack.c.l.b16 %v438
      %v539 = vunpack.c.l.b16 %v439
      %v540 = vunpack.c.l.b16 %v440
      %v541 = vunpack.c.l.b16 %v441
      %v542 = vunpack.c.l.b16 %v442
      %v543 = vunpack.c.l.b16 %v443
      %v544 = vunpack.c.l.b16 %v444
      %v545 = vunpack.c.l.b16 %v445
      %v546 = vunpack.c.l.b16 %v446
      %v547 = vunpack.c.l.b16 %v447
      %v548 = vunpack.c.l.b16 %v448
      %v549 = vunpack.c.l.b16 %v449
      %v550 = vunpack.c.l.b16 %v450
      %v551 = vunpack.c.l.b16 %v451
      %v552 = vpack.c.b16 %v505, %v504
      %v553 = vpack.c.b16 %v507, %v506
      %v554 = vpack.c.b16 %v509, %v508
      %v555 = vpack.c.b16 %v511, %v510
      %v556 = vpack.c.b16 %v513, %v512
      %v557 = vpack.c.b16 %v515, %v514
      %v558 = vpack.c.b16 %v517, %v516
      %v559 = vpack.c.b16 %v519, %v518
      %v560 = vpack.c.b16 %v521, %v520
      %v561 = vpack.c.b16 %v523, %v522
      %v562 = vpack.c.b16 %v525, %v524
      %v563 = vpack.c.b16 %v527, %v526
      %v564 = vpack.c.b16 %v529, %v528
      %v565 = vpack.c.b16 %v531, %v530
      %v566 = vpack.c.b16 %v533, %v532
      %v567 = vpack.c.b16 %v535, %v534
      %v568 = vpack.c.b16 %v537, %v536
      %v569 = vpack.c.b16 %v539, %v538
      %v570 = vpack.c.b16 %v541, %v540
      %v571 = vpack.c.b16 %v543, %v542
      %v572 = vpack.c.b16 %v545, %v544
      %v573 = vpack.c.b16 %v547, %v546
      %v574 = vpack.c.b16 %v549, %v548
      %v575 = vpack.c.b16 %v551, %v550
      %600 = vmatpush.bf16.msra.mxu0 %v559
      %601 = vmatpush.bf16.msra.mxu0 %v558
      %602 = vmatpush.bf16.msra.mxu0 %v557
      %603 = vmatpush.bf16.msra.mxu0 %v556
      %604 = vmatpush.bf16.msra.mxu0 %v555
      %605 = vmatpush.bf16.msra.mxu0 %v554
      %606 = vmatpush.bf16.msra.mxu0 %v553
      %607 = vmatpush.bf16.msra.mxu0 %v552
      %608 = vmatmul.bf16.gmra.mxu0 %v401
      %v609 = vpop.f32.mrf.mxu0
      %v610 = vadd.f32 %v454, %v609
      %v611 = vpop.f32.mrf.mxu0
      %v612 = vadd.f32 %v454, %v611
      %613 = vdwg.mxu0
      %614 = vmatpush.bf16.msra.mxu0 %v567
      %615 = vmatpush.bf16.msra.mxu0 %v566
      %616 = vmatpush.bf16.msra.mxu0 %v565
      %617 = vmatpush.bf16.msra.mxu0 %v564
      %618 = vmatpush.bf16.msra.mxu0 %v563
      %619 = vmatpush.bf16.msra.mxu0 %v562
      %620 = vmatpush.bf16.msra.mxu0 %v561
      %621 = vmatpush.bf16.msra.mxu0 %v560
      %622 = vmatmul.bf16.gmra.mxu0 %v402
      %v623 = vpop.f32.mrf.mxu0
      %v624 = vadd.f32 %v610, %v623
      %v625 = vpop.f32.mrf.mxu0
      %v626 = vadd.f32 %v612, %v625
      %627 = vdwg.mxu0
      %628 = vmatpush.bf16.msra.mxu0 %v575
      %629 = vmatpush.bf16.msra.mxu0 %v574
      %630 = vmatpush.bf16.msra.mxu0 %v573
      %631 = vmatpush.bf16.msra.mxu0 %v572
      %632 = vmatpush.bf16.msra.mxu0 %v571
      %633 = vmatpush.bf16.msra.mxu0 %v570
      %634 = vmatpush.bf16.msra.mxu0 %v569
      %635 = vmatpush.bf16.msra.mxu0 %v568
      %636 = vmatmul.bf16.gmra.mxu0 %v403
      %v637 = vpop.f32.mrf.mxu0
      %v638 = vadd.f32 %v624, %v637
      %v639 = vpop.f32.mrf.mxu0
      %v640 = vadd.f32 %v626, %v639
      %641 = vdwg.mxu0
      %vm642 = vcmp.ge.f32.partialorder %v638, 0.0
      %vm643 = vcmp.ge.f32.partialorder %v640, 0.0
      %v644 = vmul.f32 %v638, 0.2
      %v645 = vmul.f32 %v640, 0.2
      %v646 = vsel %vm642, %v638, %v644
      %v647 = vsel %vm643, %v640, %v645
      %vm648 = vcmask 521216
      %649 = vst.msk [vmem:[#allocation4] sm:$0x3f] %vm648, 0.0
      %s650 = scalar_lea.vmem [#allocation4], 40
      %651 = vst.msk [vmem:[%s650] sm:$0x3f] %vm648, 0.0
      %652 = vst.msk [vmem:[#allocation4] sm:$0x1] %vm228, 0.0
      %653 = vst.msk [vmem:[#allocation4 + $0x8] sm:$0x1] %vm228, 0.0
      %654 = vst.msk [vmem:[#allocation4 + $0x10] sm:$0x1] %vm228, 0.0
      %655 = vst.msk [vmem:[#allocation4 + $0x18] sm:$0x1] %vm228, 0.0
      %656 = vst.msk [vmem:[#allocation4 + $0x20] sm:$0x1] %vm228, 0.0
      %657 = vst.msk [vmem:[#allocation4 + $0x28] sm:$0x1] %vm228, 0.0
      %658 = vst.msk [vmem:[#allocation4 + $0x5] sm:$0x1] %vm228, 0.0
      %659 = vst.msk [vmem:[#allocation4 + $0xd] sm:$0x1] %vm228, 0.0
      %660 = vst.msk [vmem:[#allocation4 + $0x15] sm:$0x1] %vm228, 0.0
      %661 = vst.msk [vmem:[#allocation4 + $0x1d] sm:$0x1] %vm228, 0.0
      %662 = vst.msk [vmem:[#allocation4 + $0x25] sm:$0x1] %vm228, 0.0
      %663 = vst.msk [vmem:[#allocation4 + $0x2d] sm:$0x1] %vm228, 0.0
      %v666 = vrot.slane %v646, 4
      %v667 = vrot.slane %v647, 4
      %s670 = scalar_lea.vmem [#allocation4], 8
      %671 = vst.msk [vmem:[%s670 + $0x1] sm:$0xf] %vm249, %v646
      %672 = vst.msk [vmem:[%s670 + $0x9] sm:$0xf] %vm249, %v666
      %673 = vst.msk [vmem:[%s670 + $0x11] sm:$0xf] %vm249, %v647
      %674 = vst.msk [vmem:[%s670 + $0x19] sm:$0xf] %vm249, %v667
      %v675 = vld [vmem:[#allocation4] sm:$0xf]
      %v676 = vld [vmem:[#allocation4 + $0x8] sm:$0xf]
      %v677 = vld [vmem:[#allocation4 + $0x10] sm:$0xf]
      %v678 = vld [vmem:[#allocation4 + $0x18] sm:$0xf]
      %v679 = vld [vmem:[#allocation4 + $0x1] sm:$0xf]
      %v680 = vld [vmem:[#allocation4 + $0x9] sm:$0xf]
      %v681 = vld [vmem:[#allocation4 + $0x11] sm:$0xf]
      %v682 = vld [vmem:[#allocation4 + $0x19] sm:$0xf]
      %v683 = vld [vmem:[#allocation4 + $0x2] sm:$0xf]
      %v684 = vld [vmem:[#allocation4 + $0xa] sm:$0xf]
      %v685 = vld [vmem:[#allocation4 + $0x12] sm:$0xf]
      %v686 = vld [vmem:[#allocation4 + $0x1a] sm:$0xf]
      %v687 = vld [vmem:[%s670] sm:$0xf]
      %v688 = vld [vmem:[%s670 + $0x8] sm:$0xf]
      %v689 = vld [vmem:[%s670 + $0x10] sm:$0xf]
      %v690 = vld [vmem:[%s670 + $0x18] sm:$0xf]
      %v691 = vld [vmem:[%s670 + $0x1] sm:$0xf]
      %v692 = vld [vmem:[%s670 + $0x9] sm:$0xf]
      %v693 = vld [vmem:[%s670 + $0x11] sm:$0xf]
      %v694 = vld [vmem:[%s670 + $0x19] sm:$0xf]
      %v695 = vld [vmem:[%s670 + $0x2] sm:$0xf]
      %v696 = vld [vmem:[%s670 + $0xa] sm:$0xf]
      %v697 = vld [vmem:[%s670 + $0x12] sm:$0xf]
      %v698 = vld [vmem:[%s670 + $0x1a] sm:$0xf]
      %s699 = scalar_lea.vmem [#allocation4], 16
      %v700 = vld [vmem:[%s699] sm:$0xf]
      %v701 = vld [vmem:[%s699 + $0x8] sm:$0xf]
      %v702 = vld [vmem:[%s699 + $0x10] sm:$0xf]
      %v703 = vld [vmem:[%s699 + $0x18] sm:$0xf]
      %v704 = vld [vmem:[%s699 + $0x1] sm:$0xf]
      %v705 = vld [vmem:[%s699 + $0x9] sm:$0xf]
      %v706 = vld [vmem:[%s699 + $0x11] sm:$0xf]
      %v707 = vld [vmem:[%s699 + $0x19] sm:$0xf]
      %v708 = vld [vmem:[%s699 + $0x2] sm:$0xf]
      %v709 = vld [vmem:[%s699 + $0xa] sm:$0xf]
      %v710 = vld [vmem:[%s699 + $0x12] sm:$0xf]
      %v711 = vld [vmem:[%s699 + $0x1a] sm:$0xf]
      %716 = vrot.lane.b32.xlu0 %v679, 64
      %v717 = vpop.permute.xlu0 %716
      %718 = vrot.lane.b32.xlu0 %v680, 64
      %v719 = vpop.permute.xlu0 %718
      %720 = vrot.lane.b32.xlu0 %v681, 64
      %v721 = vpop.permute.xlu0 %720
      %722 = vrot.lane.b32.xlu0 %v682, 64
      %v723 = vpop.permute.xlu0 %722
      %732 = vrot.lane.b32.xlu0 %v687, 64
      %v733 = vpop.permute.xlu0 %732
      %734 = vrot.lane.b32.xlu0 %v688, 64
      %v735 = vpop.permute.xlu0 %734
      %736 = vrot.lane.b32.xlu0 %v689, 64
      %v737 = vpop.permute.xlu0 %736
      %738 = vrot.lane.b32.xlu0 %v690, 64
      %v739 = vpop.permute.xlu0 %738
      %748 = vrot.lane.b32.xlu0 %v695, 64
      %v749 = vpop.permute.xlu0 %748
      %750 = vrot.lane.b32.xlu0 %v696, 64
      %v751 = vpop.permute.xlu0 %750
      %752 = vrot.lane.b32.xlu0 %v697, 64
      %v753 = vpop.permute.xlu0 %752
      %754 = vrot.lane.b32.xlu0 %v698, 64
      %v755 = vpop.permute.xlu0 %754
      %764 = vrot.lane.b32.xlu0 %v704, 64
      %v765 = vpop.permute.xlu0 %764
      %766 = vrot.lane.b32.xlu0 %v705, 64
      %v767 = vpop.permute.xlu0 %766
      %768 = vrot.lane.b32.xlu0 %v706, 64
      %v769 = vpop.permute.xlu0 %768
      %770 = vrot.lane.b32.xlu0 %v707, 64
      %v771 = vpop.permute.xlu0 %770
      %v776 = vsel %vm340, %v675, %v717
      %v777 = vsel %vm340, %v676, %v719
      %v778 = vsel %vm340, %v677, %v721
      %v779 = vsel %vm340, %v678, %v723
      %v780 = vsel %vm340, %v683, %v733
      %v781 = vsel %vm340, %v684, %v735
      %v782 = vsel %vm340, %v685, %v737
      %v783 = vsel %vm340, %v686, %v739
      %v784 = vsel %vm340, %v691, %v749
      %v785 = vsel %vm340, %v692, %v751
      %v786 = vsel %vm340, %v693, %v753
      %v787 = vsel %vm340, %v694, %v755
      %v788 = vsel %vm340, %v700, %v765
      %v789 = vsel %vm340, %v701, %v767
      %v790 = vsel %vm340, %v702, %v769
      %v791 = vsel %vm340, %v703, %v771
      %v812 = vrot.slane %v780, 4
      %v813 = vrot.slane %v788, 4
      %v814 = vrot.slane %v781, 4
      %v815 = vrot.slane %v789, 4
      %v816 = vrot.slane %v782, 4
      %v817 = vrot.slane %v790, 4
      %v818 = vrot.slane %v783, 4
      %v819 = vrot.slane %v791, 4
      %v820 = vsel %vm369, %v776, %v812
      %v821 = vsel %vm369, %v784, %v813
      %v822 = vsel %vm369, %v777, %v814
      %v823 = vsel %vm369, %v785, %v815
      %v824 = vsel %vm369, %v778, %v816
      %v825 = vsel %vm369, %v786, %v817
      %v826 = vsel %vm369, %v779, %v818
      %v827 = vsel %vm369, %v787, %v819
      %828 = vst [vmem:[#allocation1] ss:$2 sm:$0xff] %v820
      %s829 = scalar_lea.vmem [#allocation1], 1
      %830 = vst [vmem:[%s829] ss:$2 sm:$0xff] %v822
      %s831 = scalar_lea.vmem [#allocation1], 16
      %832 = vst [vmem:[%s831] ss:$2 sm:$0xff] %v821
      %s833 = scalar_lea.vmem [#allocation1], 17
      %834 = vst [vmem:[%s833] ss:$2 sm:$0xff] %v823
      %s835 = scalar_lea.vmem [#allocation1], 32
      %836 = vst [vmem:[%s835] ss:$2 sm:$0xff] %v708
      %s837 = scalar_lea.vmem [#allocation1], 33
      %838 = vst [vmem:[%s837] ss:$2 sm:$0xff] %v709
      %s839 = scalar_lea.vmem [#allocation1], 48
      %840 = vst [vmem:[%s839] ss:$2 sm:$0xff] %v824
      %s841 = scalar_lea.vmem [#allocation1], 49
      %842 = vst [vmem:[%s841] ss:$2 sm:$0xff] %v826
      %v843 = vld.sshfl [vmem:[#allocation1] sm:$0xff pattern:$0x75316420]
      %v844 = vld.sshfl [vmem:[#allocation1 + $0x8] sm:$0xff pattern:$0x75316420]
      %v845 = vld.sshfl [vmem:[#allocation1 + $0x10] sm:$0xff pattern:$0x75316420]
      %v846 = vld.sshfl [vmem:[#allocation1 + $0x18] sm:$0xff pattern:$0x75316420]
      %v847 = vld.sshfl [vmem:[#allocation1 + $0x20] sm:$0xff pattern:$0x75316420]
      %v848 = vld.sshfl [vmem:[#allocation1 + $0x30] sm:$0xff pattern:$0x75316420]
      %v849 = vld.sshfl [vmem:[#allocation1 + $0x38] sm:$0xff pattern:$0x75316420]
      %850 = vst [vmem:[#allocation1] ss:$2 sm:$0xff] %v825
      %851 = vst [vmem:[%s829] ss:$2 sm:$0xff] %v827
      %852 = vst [vmem:[%s831] ss:$2 sm:$0xff] %v710
      %853 = vst [vmem:[%s833] ss:$2 sm:$0xff] %v711
      %v854 = vld.sshfl [vmem:[#allocation1] sm:$0xff pattern:$0x75316420]
      %v855 = vld.sshfl [vmem:[#allocation1 + $0x8] sm:$0xff pattern:$0x75316420]
      %v856 = vld.sshfl [vmem:[#allocation1 + $0x10] sm:$0xff pattern:$0x75316420]
      %v867 = vpack.c.bf16 %v848, %v843
      %v868 = vpack.c.bf16 %v849, %v844
      %v869 = vpack.c.bf16 %v854, %v845
      %v870 = vpack.c.bf16 %v855, %v846
      %v871 = vpack.c.bf16 %v856, %v847
      %v872 = vld [vmem:[%s3] sm:$0xf]
      %v873 = vld [vmem:[%s3 + $0x4] sm:$0xf]
      %v874 = vld [vmem:[%s3 + $0x8] sm:$0xf]
      %v875 = vld [vmem:[%s3 + $0xc] sm:$0xf]
      %v876 = vld [vmem:[%s3 + $0x10] sm:$0xf]
      %v877 = vld [vmem:[%s3 + $0x14] sm:$0xf]
      %v878 = vld [vmem:[%s3 + $0x18] sm:$0xf]
      %v879 = vld [vmem:[%s3 + $0x1c] sm:$0xf]
      %v880 = vld [vmem:[%s3 + $0x20] sm:$0xf]
      %v881 = vld [vmem:[%s3 + $0x24] sm:$0xf]
      %v882 = vld [vmem:[%s3 + $0x28] sm:$0xf]
      %v883 = vld [vmem:[%s3 + $0x2c] sm:$0xf]
      %v884 = vld [vmem:[%s3 + $0x30] sm:$0xf]
      %v885 = vld [vmem:[%s3 + $0x34] sm:$0xf]
      %v886 = vld [vmem:[%s3 + $0x38] sm:$0xf]
      %v887 = vld [vmem:[%s3 + $0x3c] sm:$0xf]
      %v888 = vld [vmem:[%s3 + $0x40] sm:$0xf]
      %v889 = vld [vmem:[%s3 + $0x44] sm:$0xf]
      %v890 = vld [vmem:[%s3 + $0x48] sm:$0xf]
      %v891 = vld [vmem:[%s3 + $0x4c] sm:$0xf]
      %v892 = vld [vmem:[%s3 + $0x50] sm:$0xf]
      %v893 = vld [vmem:[%s3 + $0x54] sm:$0xf]
      %v894 = vld [vmem:[%s3 + $0x58] sm:$0xf]
      %v895 = vld [vmem:[%s3 + $0x5c] sm:$0xf]
      %v896 = vld [vmem:[%s3 + $0x60] sm:$0xf]
      %v897 = vld [vmem:[%s3 + $0x64] sm:$0xf]
      %v898 = vld [vmem:[%s3 + $0x68] sm:$0xf]
      %v899 = vld [vmem:[%s3 + $0x6c] sm:$0xf]
      %v900 = vld [vmem:[%s3 + $0x70] sm:$0xf]
      %v901 = vld [vmem:[%s3 + $0x74] sm:$0xf]
      %v902 = vld [vmem:[%s3 + $0x78] sm:$0xf]
      %v903 = vld [vmem:[%s3 + $0x7c] sm:$0xf]
      %v904 = vld [vmem:[%s3 + $0x80] sm:$0xf]
      %v905 = vld [vmem:[%s3 + $0x84] sm:$0xf]
      %v906 = vld [vmem:[%s3 + $0x88] sm:$0xf]
      %v907 = vld [vmem:[%s3 + $0x8c] sm:$0xf]
      %v908 = vld [vmem:[%s3 + $0x90] sm:$0xf]
      %v909 = vld [vmem:[%s3 + $0x94] sm:$0xf]
      %v910 = vld [vmem:[%s3 + $0x98] sm:$0xf]
      %v911 = vld [vmem:[%s3 + $0x9c] sm:$0xf]
      %v912 = vld [vmem:[%s3 + $0xa0] sm:$0xf]
      %v913 = vld [vmem:[%s3 + $0xa4] sm:$0xf]
      %v914 = vld [vmem:[%s3 + $0xa8] sm:$0xf]
      %v915 = vld [vmem:[%s3 + $0xac] sm:$0xf]
      %v916 = vld [vmem:[%s3 + $0xb0] sm:$0xf]
      %v917 = vld [vmem:[%s3 + $0xb4] sm:$0xf]
      %v918 = vld [vmem:[%s3 + $0xb8] sm:$0xf]
      %v919 = vld [vmem:[%s3 + $0xbc] sm:$0xf]
      %v920 = vld [vmem:[%s3 + $0xc0] sm:$0xf]
      %v921 = vld [vmem:[%s3 + $0xc4] sm:$0xf]
      %v922 = vld [vmem:[%s3 + $0xc8] sm:$0xf]
      %v923 = vld [vmem:[%s3 + $0xcc] sm:$0xf]
      %v924 = vld [vmem:[%s3 + $0xd0] sm:$0xf]
      %v925 = vld [vmem:[%s3 + $0xd4] sm:$0xf]
      %v926 = vld [vmem:[%s3 + $0xd8] sm:$0xf]
      %v927 = vld [vmem:[%s3 + $0xdc] sm:$0xf]
      %v928 = vld [vmem:[%s3 + $0xe0] sm:$0xf]
      %v929 = vld [vmem:[%s3 + $0xe4] sm:$0xf]
      %v930 = vld [vmem:[%s3 + $0xe8] sm:$0xf]
      %v931 = vld [vmem:[%s3 + $0xec] sm:$0xf]
      %v932 = vld [vmem:[%s3 + $0xf0] sm:$0xf]
      %v933 = vld [vmem:[%s3 + $0xf4] sm:$0xf]
      %v934 = vld [vmem:[%s3 + $0xf8] sm:$0xf]
      %v935 = vld [vmem:[%s3 + $0xfc] sm:$0xf]
      %v936 = vld [vmem:[%s3 + $0x100] sm:$0xf]
      %v937 = vld [vmem:[%s3 + $0x104] sm:$0xf]
      %v938 = vld [vmem:[%s3 + $0x108] sm:$0xf]
      %v939 = vld [vmem:[%s3 + $0x10c] sm:$0xf]
      %v940 = vld [vmem:[%s3 + $0x110] sm:$0xf]
      %v941 = vld [vmem:[%s3 + $0x114] sm:$0xf]
      %v942 = vld [vmem:[%s3 + $0x118] sm:$0xf]
      %v943 = vld [vmem:[%s3 + $0x11c] sm:$0xf]
      %v944 = vld [vmem:[%s4] sm:$0x1]
      %v946 = vperm.slane %v944, 0
      %v1020 = vunpack.c.l.b16 %v872
      %v1021 = vunpack.c.l.b16 %v873
      %v1022 = vunpack.c.l.b16 %v874
      %v1023 = vunpack.c.l.b16 %v875
      %v1024 = vunpack.c.l.b16 %v876
      %v1025 = vunpack.c.l.b16 %v877
      %v1026 = vunpack.c.l.b16 %v878
      %v1027 = vunpack.c.l.b16 %v879
      %v1028 = vunpack.c.l.b16 %v880
      %v1029 = vunpack.c.l.b16 %v881
      %v1030 = vunpack.c.l.b16 %v882
      %v1031 = vunpack.c.l.b16 %v883
      %v1032 = vunpack.c.l.b16 %v884
      %v1033 = vunpack.c.l.b16 %v885
      %v1034 = vunpack.c.l.b16 %v886
      %v1035 = vunpack.c.l.b16 %v887
      %v1036 = vunpack.c.l.b16 %v888
      %v1037 = vunpack.c.l.b16 %v889
      %v1038 = vunpack.c.l.b16 %v890
      %v1039 = vunpack.c.l.b16 %v891
      %v1040 = vunpack.c.l.b16 %v892
      %v1041 = vunpack.c.l.b16 %v893
      %v1042 = vunpack.c.l.b16 %v894
      %v1043 = vunpack.c.l.b16 %v895
      %v1044 = vunpack.c.l.b16 %v896
      %v1045 = vunpack.c.l.b16 %v897
      %v1046 = vunpack.c.l.b16 %v898
      %v1047 = vunpack.c.l.b16 %v899
      %v1048 = vunpack.c.l.b16 %v900
      %v1049 = vunpack.c.l.b16 %v901
      %v1050 = vunpack.c.l.b16 %v902
      %v1051 = vunpack.c.l.b16 %v903
      %v1052 = vunpack.c.l.b16 %v904
      %v1053 = vunpack.c.l.b16 %v905
      %v1054 = vunpack.c.l.b16 %v906
      %v1055 = vunpack.c.l.b16 %v907
      %v1056 = vunpack.c.l.b16 %v908
      %v1057 = vunpack.c.l.b16 %v909
      %v1058 = vunpack.c.l.b16 %v910
      %v1059 = vunpack.c.l.b16 %v911
      %v1060 = vunpack.c.l.b16 %v912
      %v1061 = vunpack.c.l.b16 %v913
      %v1062 = vunpack.c.l.b16 %v914
      %v1063 = vunpack.c.l.b16 %v915
      %v1064 = vunpack.c.l.b16 %v916
      %v1065 = vunpack.c.l.b16 %v917
      %v1066 = vunpack.c.l.b16 %v918
      %v1067 = vunpack.c.l.b16 %v919
      %v1068 = vunpack.c.l.b16 %v920
      %v1069 = vunpack.c.l.b16 %v921
      %v1070 = vunpack.c.l.b16 %v922
      %v1071 = vunpack.c.l.b16 %v923
      %v1072 = vunpack.c.l.b16 %v924
      %v1073 = vunpack.c.l.b16 %v925
      %v1074 = vunpack.c.l.b16 %v926
      %v1075 = vunpack.c.l.b16 %v927
      %v1076 = vunpack.c.l.b16 %v928
      %v1077 = vunpack.c.l.b16 %v929
      %v1078 = vunpack.c.l.b16 %v930
      %v1079 = vunpack.c.l.b16 %v931
      %v1080 = vunpack.c.l.b16 %v932
      %v1081 = vunpack.c.l.b16 %v933
      %v1082 = vunpack.c.l.b16 %v934
      %v1083 = vunpack.c.l.b16 %v935
      %v1084 = vunpack.c.l.b16 %v936
      %v1085 = vunpack.c.l.b16 %v937
      %v1086 = vunpack.c.l.b16 %v938
      %v1087 = vunpack.c.l.b16 %v939
      %v1088 = vunpack.c.l.b16 %v940
      %v1089 = vunpack.c.l.b16 %v941
      %v1090 = vunpack.c.l.b16 %v942
      %v1091 = vunpack.c.l.b16 %v943
      %v1092 = vpack.c.b16 %v1021, %v1020
      %v1093 = vpack.c.b16 %v1023, %v1022
      %v1094 = vpack.c.b16 %v1025, %v1024
      %v1095 = vpack.c.b16 %v1027, %v1026
      %v1096 = vpack.c.b16 %v1029, %v1028
      %v1097 = vpack.c.b16 %v1031, %v1030
      %v1098 = vpack.c.b16 %v1033, %v1032
      %v1099 = vpack.c.b16 %v1035, %v1034
      %v1100 = vpack.c.b16 %v1037, %v1036
      %v1101 = vpack.c.b16 %v1039, %v1038
      %v1102 = vpack.c.b16 %v1041, %v1040
      %v1103 = vpack.c.b16 %v1043, %v1042
      %v1104 = vpack.c.b16 %v1045, %v1044
      %v1105 = vpack.c.b16 %v1047, %v1046
      %v1106 = vpack.c.b16 %v1049, %v1048
      %v1107 = vpack.c.b16 %v1051, %v1050
      %v1108 = vpack.c.b16 %v1053, %v1052
      %v1109 = vpack.c.b16 %v1055, %v1054
      %v1110 = vpack.c.b16 %v1057, %v1056
      %v1111 = vpack.c.b16 %v1059, %v1058
      %v1112 = vpack.c.b16 %v1061, %v1060
      %v1113 = vpack.c.b16 %v1063, %v1062
      %v1114 = vpack.c.b16 %v1065, %v1064
      %v1115 = vpack.c.b16 %v1067, %v1066
      %v1116 = vpack.c.b16 %v1069, %v1068
      %v1117 = vpack.c.b16 %v1071, %v1070
      %v1118 = vpack.c.b16 %v1073, %v1072
      %v1119 = vpack.c.b16 %v1075, %v1074
      %v1120 = vpack.c.b16 %v1077, %v1076
      %v1121 = vpack.c.b16 %v1079, %v1078
      %v1122 = vpack.c.b16 %v1081, %v1080
      %v1123 = vpack.c.b16 %v1083, %v1082
      %v1124 = vpack.c.b16 %v1085, %v1084
      %v1125 = vpack.c.b16 %v1087, %v1086
      %v1126 = vpack.c.b16 %v1089, %v1088
      %v1127 = vpack.c.b16 %v1091, %v1090
      %v1165 = vsel %vm340, %v871, 0
      %1167 = vmatpush.bf16.msra.mxu0 %v1099
      %1168 = vmatpush.bf16.msra.mxu0 %v1098
      %1169 = vmatpush.bf16.msra.mxu0 %v1097
      %1170 = vmatpush.bf16.msra.mxu0 %v1096
      %1171 = vmatpush.bf16.msra.mxu0 %v1095
      %1172 = vmatpush.bf16.msra.mxu0 %v1094
      %1173 = vmatpush.bf16.msra.mxu0 %v1093
      %1174 = vmatpush.bf16.msra.mxu0 %v1092
      %1175 = vmatmul.bf16.gmra.mxu0 %v867
      %v1176 = vpop.f32.mrf.mxu0
      %v1177 = vadd.f32 %v946, %v1176
      %v1178 = vpop.f32.mrf.mxu0
      %v1179 = vadd.f32 %v946, %v1178
      %1180 = vdwg.mxu0
      %1181 = vmatpush.bf16.msra.mxu0 %v1107
      %1182 = vmatpush.bf16.msra.mxu0 %v1106
      %1183 = vmatpush.bf16.msra.mxu0 %v1105
      %1184 = vmatpush.bf16.msra.mxu0 %v1104
      %1185 = vmatpush.bf16.msra.mxu0 %v1103
      %1186 = vmatpush.bf16.msra.mxu0 %v1102
      %1187 = vmatpush.bf16.msra.mxu0 %v1101
      %1188 = vmatpush.bf16.msra.mxu0 %v1100
      %1189 = vmatmul.bf16.gmra.mxu0 %v868
      %v1190 = vpop.f32.mrf.mxu0
      %v1191 = vadd.f32 %v1177, %v1190
      %v1192 = vpop.f32.mrf.mxu0
      %v1193 = vadd.f32 %v1179, %v1192
      %1194 = vdwg.mxu0
      %1195 = vmatpush.bf16.msra.mxu0 %v1115
      %1196 = vmatpush.bf16.msra.mxu0 %v1114
      %1197 = vmatpush.bf16.msra.mxu0 %v1113
      %1198 = vmatpush.bf16.msra.mxu0 %v1112
      %1199 = vmatpush.bf16.msra.mxu0 %v1111
      %1200 = vmatpush.bf16.msra.mxu0 %v1110
      %1201 = vmatpush.bf16.msra.mxu0 %v1109
      %1202 = vmatpush.bf16.msra.mxu0 %v1108
      %1203 = vmatmul.bf16.gmra.mxu0 %v869
      %v1204 = vpop.f32.mrf.mxu0
      %v1205 = vadd.f32 %v1191, %v1204
      %v1206 = vpop.f32.mrf.mxu0
      %v1207 = vadd.f32 %v1193, %v1206
      %1208 = vdwg.mxu0
      %1209 = vmatpush.bf16.msra.mxu0 %v1123
      %1210 = vmatpush.bf16.msra.mxu0 %v1122
      %1211 = vmatpush.bf16.msra.mxu0 %v1121
      %1212 = vmatpush.bf16.msra.mxu0 %v1120
      %1213 = vmatpush.bf16.msra.mxu0 %v1119
      %1214 = vmatpush.bf16.msra.mxu0 %v1118
      %1215 = vmatpush.bf16.msra.mxu0 %v1117
      %1216 = vmatpush.bf16.msra.mxu0 %v1116
      %1217 = vmatmul.bf16.gmra.mxu0 %v870
      %v1218 = vpop.f32.mrf.mxu0
      %v1219 = vadd.f32 %v1205, %v1218
      %v1220 = vpop.f32.mrf.mxu0
      %v1221 = vadd.f32 %v1207, %v1220
      %1222 = vdwg.mxu0
      %1223 = vmatpush.bf16.msra.mxu0 0
      %1224 = vmatpush.bf16.msra.mxu0 0
      %1225 = vmatpush.bf16.msra.mxu0 0
      %1226 = vmatpush.bf16.msra.mxu0 0
      %1227 = vmatpush.bf16.msra.mxu0 %v1127
      %1228 = vmatpush.bf16.msra.mxu0 %v1126
      %1229 = vmatpush.bf16.msra.mxu0 %v1125
      %1230 = vmatpush.bf16.msra.mxu0 %v1124
      %1231 = vmatmul.bf16.gmra.mxu0 %v1165
      %v1232 = vpop.f32.mrf.mxu0
      %v1233 = vadd.f32 %v1219, %v1232
      %v1234 = vpop.f32.mrf.mxu0
      %v1235 = vadd.f32 %v1221, %v1234
      %1236 = vdwg.mxu0
      %vm1237 = vcmp.ge.f32.partialorder %v1233, 0.0
      %vm1238 = vcmp.ge.f32.partialorder %v1235, 0.0
      %v1239 = vmul.f32 %v1233, 0.2
      %v1240 = vmul.f32 %v1235, 0.2
      %v1241 = vsel %vm1237, %v1233, %v1239
      %v1242 = vsel %vm1238, %v1235, %v1240
      %v1245 = vrot.slane %v1241, 4
      %v1246 = vrot.slane %v1242, 4
      %v1249 = vpack.c.bf16 %v1241, %v1241
      %v1250 = vpack.c.bf16 %v1245, %v1245
      %v1251 = vpack.c.bf16 %v1242, %v1242
      %v1252 = vpack.c.bf16 %v1246, %v1246
      %vm1253 = vcmask 517120
      %1254 = vst.msk [vmem:[%s224] sm:$0x3] %vm1253, %v1249
      %1255 = vst.msk [vmem:[%s224 + $0x2] sm:$0x3] %vm1253, %v1250
      %1256 = vst.msk [vmem:[%s224 + $0x4] sm:$0x3] %vm1253, %v1251
      %1257 = vst.msk [vmem:[%s224 + $0x6] sm:$0x3] %vm1253, %v1252
      %p1258 = scmp.lt.s32.totalorder %s16, 1
      %s1259 = scalar_select %p1258, %s16, 1
      %s1260 = smul.addr %s1259, 4
      %s1261 = smul.addr %s1260, 2
      %s1262 = scalar_lea.vmem %s5, %s1261
      // Predicated region
      $region41: #{discriminator_forward.4} parent=39 // pred_check
        %p1263 = pneg %p144
      $region42: #{discriminator_forward.4} parent=39 // pred_check_branch
        %1265 = sbr.rel (%p1263) target = $region44
      $region43: #{discriminator_forward.4} parent=39 // pred_region
        _
      $region44: #{discriminator_forward.4} parent=39 // pred_fallthru
        _
    $region40: #{discriminator_forward.4} parent=5 // pred_fallthru
      _
    %p1266 = scmp.le.s32.totalorder 2, %s11
    // Predicated region
    $region45: #{discriminator_forward.4} parent=5 // pred_check
      %p1267 = pneg %p1266
    $region46: #{discriminator_forward.4} parent=5 // pred_check_branch
      %1269 = sbr.rel (%p1267) target = $region48
    $region47: #{discriminator_forward.4} parent=5 // pred_region
      %s1270 = ssub.s32 %s11, 2
      // Predicated region
      $region49: #{discriminator_forward.4} parent=47 // pred_check
        %p1271 = pneg %p150
      $region50: #{discriminator_forward.4} parent=47 // pred_check_branch
        %1273 = sbr.rel (%p1271) target = $region52
      $region51: #{discriminator_forward.4} parent=47 // pred_region
        %p1274 = scmp.lt.s32.totalorder %s17, 1
        %s1275 = scalar_select %p1274, %s17, 1
        %s1276 = smul.addr %s1275, 4
        %s1277 = smul.addr %s1276, 2
        %s1278 = scalar_lea.vmem %s5, %s1277
      $region52: #{discriminator_forward.4} parent=47 // pred_fallthru
        _
    $region48: #{discriminator_forward.4} parent=5 // pred_fallthru
      _
  $region6: #{discriminator_forward.4} parent=0 // loop_footer
    %s15 = sadd.s32 1, %s11
  $region7: #{discriminator_forward.4} parent=0 // loop_footer_branch
    %10 = sbr.rel target = $region3
  $region8: #{discriminator_forward.4} parent=0 // loop_exit
    _

// kernel: discriminator_forward.5
$region0: #{discriminator_forward.5}
  #allocation0 [shape = 'u32[]', space=smem, size = 0x4, offset = 0x4, fixed_abs, tag = 'smem constant byte address 0x4 - core index']
  #allocation1 [shape = 'u32[72,128]{1,0:T(1,128)}', space=vmem, size = 0x9000, scoped, tag = 'internal scratch']
  #allocation2 [shape = 'f32[3,3,128]{2,1,0:T(4,128)}', space=vmem, size = 0x1800, scoped, tag = 'scratch operand']
  #allocation3 [shape = 'f32[3,3,128]{2,1,0:T(4,128)}', space=vmem, size = 0x1800, scoped, tag = 'scratch operand']
  #allocation4 [shape = 'f32[4,4,128]{2,1,0:T(4,128)}', space=vmem, size = 0x2000, scoped, tag = 'scratch operand']
  #allocation5 [shape = 'f32[1,1]{1,0:T(1,128)S(1)}', space=vmem, size = 0x200, scoped, tag = 'scoped memory for discriminator_forward.5']
  %s0 = inlined_call_operand.vmem [shape: bf16[2,2,4,128], index: 0, kind: input, shape index: {}]
  %s1 = inlined_call_operand.vmem [shape: bf16[768,128], index: 1, kind: input, shape index: {}]
  %s2 = inlined_call_operand.vmem [shape: f32[1,128], index: 2, kind: input, shape index: {}]
  %s3 = inlined_call_operand.vmem [shape: bf16[1152,128], index: 3, kind: input, shape index: {}]
  %s4 = inlined_call_operand.vmem [shape: f32[1,128], index: 4, kind: input, shape index: {}]
  %s5 = inlined_call_operand.vmem [shape: f32[1,128], index: 5, kind: input, shape index: {}]
  %s6 = inlined_call_operand.<no memory space> [shape: f32[1,1], index: 6, kind: input, shape index: {}]
  %s7 = inlined_call_operand.hbm [shape: f32[2,2,2], index: 7, kind: output, shape index: {}]
  %s8 = sld [smem:[#allocation0]]
  $region61: #{discriminator_forward.5} parent=0
    _
  %s10 = ssub.s32 1, %s8
  %s11 = scalar_select 0, %s10, %s8
  %v12 = vstv %s6
  %13 = vst [vmem:[#allocation5] sm:$0x1] %v12
  $region1: #{discriminator_forward.5} parent=0
    #allocation6 [shape = 'u8[2048]{0}', space=vmem, size = 0x800, scoped, tag = 'output window, operand 0']
    #allocation7 [shape = 's32[2]{0}', space=sflag, size = 0x8, scoped, tag = 'scoped memory for discriminator_forward.5']
    %14 = vsyncpa [#allocation7], 0
    %s15 = scalar_lea.sflag [#allocation7], 1
    %16 = vsyncpa %s15, 0
    loop: start=0, step=1, limit=4
    $region2: #{discriminator_forward.5} parent=1 // loop_pre_header
      _
    $region3: #{discriminator_forward.5} parent=1 // loop_header
      %s18 = sphi 0, %s22
      %p19 = scmp.ge.s32.totalorder %s18, 4
      %s28 = sphi 0, %s30
      %s31 = sphi 0, %s28
      %s32 = sphi 0, %s31
      %s48 = sphi 0, %s32
      %s52 = sphi 0, %s52
      %s54 = sphi 0, %s52
      %s55 = sphi 0, %s54
      %s69 = sphi 0, %s55
      %s73 = sphi 0, %s73
      %s75 = sphi 0, %s73
      %s76 = sphi 0, %s75
      %s90 = sphi 0, %s76
      %s94 = sphi 0, %s94
      %s96 = sphi 0, %s94
      %s97 = sphi 0, %s96
      %s111 = sphi 0, %s97
      %s115 = sphi 0, %s115
      %s117 = sphi 0, %s115
      %s118 = sphi 0, %s117
      %s132 = sphi 0, %s118
      %s136 = sphi 0, %s136
      %s138 = sphi 0, %s136
      %s139 = sphi 0, %s138
      %s153 = sphi 0, %s139
      %s157 = sphi 0, %s157
      %s159 = sphi 0, %s157
      %s160 = sphi 0, %s159
      %s174 = sphi 0, %s160
      %s180 = sphi 0, %s182
      %s183 = sphi 0, %s180
      %s184 = sphi 0, %s183
      %s200 = sphi 0, %s184
    $region4: #{discriminator_forward.5} parent=1 // loop_header_branch
      %21 = sbr.rel (%p19) target = $region8
    $region5: #{discriminator_forward.5} parent=1 // loop_body
      %s23 = ssub.s32 %s18, 1
      %s24 = ssub.s32 %s18, 2
      %s25 = sadd.s32 %s18, 1
      %s26 = ssub.s32 %s18, %s25
      %p27 = scmp.eq.s32.totalorder %s26, 0
      %s29 = sadd.s32 %s28, 1
      %s30 = scalar_select %p27, %s28, %s29
      %p33 = pneg %p27
      %p34 = scmp.eq.s32.totalorder %s18, 1
      %p35 = por %p33, %p34
      %p36 = scmp.ne.s32.totalorder %s28, %s31
      %p37 = scmp.eq.s32.totalorder %s18, 0
      %p38 = por %p36, %p37
      %p39 = scmp.ne.s32.totalorder %s28, %s31
      %p40 = scmp.eq.s32.totalorder %s23, 1
      %p41 = por %p39, %p40
      %p42 = scmp.ne.s32.totalorder %s31, %s32
      %p43 = scmp.eq.s32.totalorder %s23, 0
      %p44 = por %p42, %p43
      %p45 = scmp.ne.s32.totalorder %s31, %s32
      %p46 = scmp.eq.s32.totalorder %s24, 1
      %p47 = por %p45, %p46
      %p49 = scmp.ne.s32.totalorder %s32, %s48
      %p50 = scmp.eq.s32.totalorder %s24, 0
      %p51 = por %p49, %p50
      %s53 = sadd.s32 %s52, 1
      %p56 = scmp.eq.s32.totalorder %s18, 1
      %p57 = scmp.ne.s32.totalorder %s52, %s54
      %p58 = scmp.eq.s32.totalorder %s18, 0
      %p59 = por %p57, %p58
      %p60 = scmp.ne.s32.totalorder %s52, %s54
      %p61 = scmp.eq.s32.totalorder %s23, 1
      %p62 = por %p60, %p61
      %p63 = scmp.ne.s32.totalorder %s54, %s55
      %p64 = scmp.eq.s32.totalorder %s23, 0
      %p65 = por %p63, %p64
      %p66 = scmp.ne.s32.totalorder %s54, %s55
      %p67 = scmp.eq.s32.totalorder %s24, 1
      %p68 = por %p66, %p67
      %p70 = scmp.ne.s32.totalorder %s55, %s69
      %p71 = scmp.eq.s32.totalorder %s24, 0
      %p72 = por %p70, %p71
      %s74 = sadd.s32 %s73, 1
      %p77 = scmp.eq.s32.totalorder %s18, 1
      %p78 = scmp.ne.s32.totalorder %s73, %s75
      %p79 = scmp.eq.s32.totalorder %s18, 0
      %p80 = por %p78, %p79
      %p81 = scmp.ne.s32.totalorder %s73, %s75
      %p82 = scmp.eq.s32.totalorder %s23, 1
      %p83 = por %p81, %p82
      %p84 = scmp.ne.s32.totalorder %s75, %s76
      %p85 = scmp.eq.s32.totalorder %s23, 0
      %p86 = por %p84, %p85
      %p87 = scmp.ne.s32.totalorder %s75, %s76
      %p88 = scmp.eq.s32.totalorder %s24, 1
      %p89 = por %p87, %p88
      %p91 = scmp.ne.s32.totalorder %s76, %s90
      %p92 = scmp.eq.s32.totalorder %s24, 0
      %p93 = por %p91, %p92
      %s95 = sadd.s32 %s94, 1
      %p98 = scmp.eq.s32.totalorder %s18, 1
      %p99 = scmp.ne.s32.totalorder %s94, %s96
      %p100 = scmp.eq.s32.totalorder %s18, 0
      %p101 = por %p99, %p100
      %p102 = scmp.ne.s32.totalorder %s94, %s96
      %p103 = scmp.eq.s32.totalorder %s23, 1
      %p104 = por %p102, %p103
      %p105 = scmp.ne.s32.totalorder %s96, %s97
      %p106 = scmp.eq.s32.totalorder %s23, 0
      %p107 = por %p105, %p106
      %p108 = scmp.ne.s32.totalorder %s96, %s97
      %p109 = scmp.eq.s32.totalorder %s24, 1
      %p110 = por %p108, %p109
      %p112 = scmp.ne.s32.totalorder %s97, %s111
      %p113 = scmp.eq.s32.totalorder %s24, 0
      %p114 = por %p112, %p113
      %s116 = sadd.s32 %s115, 1
      %p119 = scmp.eq.s32.totalorder %s18, 1
      %p120 = scmp.ne.s32.totalorder %s115, %s117
      %p121 = scmp.eq.s32.totalorder %s18, 0
      %p122 = por %p120, %p121
      %p123 = scmp.ne.s32.totalorder %s115, %s117
      %p124 = scmp.eq.s32.totalorder %s23, 1
      %p125 = por %p123, %p124
      %p126 = scmp.ne.s32.totalorder %s117, %s118
      %p127 = scmp.eq.s32.totalorder %s23, 0
      %p128 = por %p126, %p127
      %p129 = scmp.ne.s32.totalorder %s117, %s118
      %p130 = scmp.eq.s32.totalorder %s24, 1
      %p131 = por %p129, %p130
      %p133 = scmp.ne.s32.totalorder %s118, %s132
      %p134 = scmp.eq.s32.totalorder %s24, 0
      %p135 = por %p133, %p134
      %s137 = sadd.s32 %s136, 1
      %p140 = scmp.eq.s32.totalorder %s18, 1
      %p141 = scmp.ne.s32.totalorder %s136, %s138
      %p142 = scmp.eq.s32.totalorder %s18, 0
      %p143 = por %p141, %p142
      %p144 = scmp.ne.s32.totalorder %s136, %s138
      %p145 = scmp.eq.s32.totalorder %s23, 1
      %p146 = por %p144, %p145
      %p147 = scmp.ne.s32.totalorder %s138, %s139
      %p148 = scmp.eq.s32.totalorder %s23, 0
      %p149 = por %p147, %p148
      %p150 = scmp.ne.s32.totalorder %s138, %s139
      %p151 = scmp.eq.s32.totalorder %s24, 1
      %p152 = por %p150, %p151
      %p154 = scmp.ne.s32.totalorder %s139, %s153
      %p155 = scmp.eq.s32.totalorder %s24, 0
      %p156 = por %p154, %p155
      %s158 = sadd.s32 %s157, 1
      %p161 = scmp.eq.s32.totalorder %s18, 1
      %p162 = scmp.ne.s32.totalorder %s157, %s159
      %p163 = scmp.eq.s32.totalorder %s18, 0
      %p164 = por %p162, %p163
      %p165 = scmp.ne.s32.totalorder %s157, %s159
      %p166 = scmp.eq.s32.totalorder %s23, 1
      %p167 = por %p165, %p166
      %p168 = scmp.ne.s32.totalorder %s159, %s160
      %p169 = scmp.eq.s32.totalorder %s23, 0
      %p170 = por %p168, %p169
      %p171 = scmp.ne.s32.totalorder %s159, %s160
      %p172 = scmp.eq.s32.totalorder %s24, 1
      %p173 = por %p171, %p172
      %p175 = scmp.ne.s32.totalorder %s160, %s174
      %p176 = scmp.eq.s32.totalorder %s24, 0
      %p177 = por %p175, %p176
      %s178 = ssub.s32 %s18, %s25
      %p179 = scmp.eq.s32.totalorder %s178, 0
      %s181 = sadd.s32 %s180, 1
      %s182 = scalar_select %p179, %s180, %s181
      %p185 = pneg %p179
      %p186 = scmp.eq.s32.totalorder %s18, 1
      %p187 = por %p185, %p186
      %p188 = scmp.ne.s32.totalorder %s180, %s183
      %p189 = scmp.eq.s32.totalorder %s18, 0
      %p190 = por %p188, %p189
      %p191 = scmp.ne.s32.totalorder %s180, %s183
      %p192 = scmp.eq.s32.totalorder %s23, 1
      %p193 = por %p191, %p192
      %p194 = scmp.ne.s32.totalorder %s183, %s184
      %p195 = scmp.eq.s32.totalorder %s23, 0
      %p196 = por %p194, %p195
      %p197 = scmp.ne.s32.totalorder %s183, %s184
      %p198 = scmp.eq.s32.totalorder %s24, 1
      %p199 = por %p197, %p198
      %p201 = scmp.ne.s32.totalorder %s184, %s200
      %p202 = scmp.eq.s32.totalorder %s24, 0
      %p203 = por %p201, %p202
      %p204 = scmp.le.s32.totalorder 1, %s18
      %p205 = scmp.lt.s32.totalorder %s18, 3
      %p206 = pnand %p204, %p205
      %p207 = pneg %p206
      // Predicated region
      $region9: #{discriminator_forward.5} parent=5 // pred_check
        _
      $region10: #{discriminator_forward.5} parent=5 // pred_check_branch
        %209 = sbr.rel (%p206) target = $region12
      $region11: #{discriminator_forward.5} parent=5 // pred_region
        %s210 = ssub.s32 %s18, 1
        // Predicated region
        $region13: #{discriminator_forward.5} parent=11 // pred_check
          %p211 = pneg %p65
        $region14: #{discriminator_forward.5} parent=11 // pred_check_branch
          %213 = sbr.rel (%p211) target = $region16
        $region15: #{discriminator_forward.5} parent=11 // pred_region
          _
        $region16: #{discriminator_forward.5} parent=11 // pred_fallthru
          _
        // Predicated region
        $region17: #{discriminator_forward.5} parent=11 // pred_check
          %p214 = pneg %p86
        $region18: #{discriminator_forward.5} parent=11 // pred_check_branch
          %216 = sbr.rel (%p214) target = $region20
        $region19: #{discriminator_forward.5} parent=11 // pred_region
          _
        $region20: #{discriminator_forward.5} parent=11 // pred_fallthru
          _
        // Predicated region
        $region21: #{discriminator_forward.5} parent=11 // pred_check
          %p217 = pneg %p107
        $region22: #{discriminator_forward.5} parent=11 // pred_check_branch
          %219 = sbr.rel (%p217) target = $region24
        $region23: #{discriminator_forward.5} parent=11 // pred_region
          _
        $region24: #{discriminator_forward.5} parent=11 // pred_fallthru
          _
        // Predicated region
        $region25: #{discriminator_forward.5} parent=11 // pred_check
          %p220 = pneg %p128
        $region26: #{discriminator_forward.5} parent=11 // pred_check_branch
          %222 = sbr.rel (%p220) target = $region28
        $region27: #{discriminator_forward.5} parent=11 // pred_region
          _
        $region28: #{discriminator_forward.5} parent=11 // pred_fallthru
          _
        // Predicated region
        $region29: #{discriminator_forward.5} parent=11 // pred_check
          %p223 = pneg %p149
        $region30: #{discriminator_forward.5} parent=11 // pred_check_branch
          %225 = sbr.rel (%p223) target = $region32
        $region31: #{discriminator_forward.5} parent=11 // pred_region
          _
        $region32: #{discriminator_forward.5} parent=11 // pred_fallthru
          _
        // Predicated region
        $region33: #{discriminator_forward.5} parent=11 // pred_check
          %p226 = pneg %p170
        $region34: #{discriminator_forward.5} parent=11 // pred_check_branch
          %228 = sbr.rel (%p226) target = $region36
        $region35: #{discriminator_forward.5} parent=11 // pred_region
          _
        $region36: #{discriminator_forward.5} parent=11 // pred_fallthru
          _
      $region12: #{discriminator_forward.5} parent=5 // pred_fallthru
        _
      %p229 = scmp.lt.s32.totalorder %s18, 2
      // Predicated region
      $region37: #{discriminator_forward.5} parent=5 // pred_check
        %p230 = pneg %p229
      $region38: #{discriminator_forward.5} parent=5 // pred_check_branch
        %232 = sbr.rel (%p230) target = $region40
      $region39: #{discriminator_forward.5} parent=5 // pred_region
        // Predicated region
        $region41: #{discriminator_forward.5} parent=39 // pred_check
          %p233 = pneg %p38
        $region42: #{discriminator_forward.5} parent=39 // pred_check_branch
          %235 = sbr.rel (%p233) target = $region44
        $region43: #{discriminator_forward.5} parent=39 // pred_region
          %p236 = scmp.lt.s32.totalorder %s18, 1
          %s237 = scalar_select %p236, %s18, 1
          %s238 = smul.addr %s237, 2
          %s239 = smul.addr %s238, 2
          %s240 = scalar_lea.vmem %s0, %s239
        $region44: #{discriminator_forward.5} parent=39 // pred_fallthru
          _
      $region40: #{discriminator_forward.5} parent=5 // pred_fallthru
        _
      %p241 = scmp.le.s32.totalorder 1, %s18
      %p242 = scmp.lt.s32.totalorder %s18, 3
      %p243 = pnand %p241, %p242
      %p244 = pneg %p243
      // Predicated region
      $region45: #{discriminator_forward.5} parent=5 // pred_check
        _
      $region46: #{discriminator_forward.5} parent=5 // pred_check_branch
        %246 = sbr.rel (%p243) target = $region48
      $region47: #{discriminator_forward.5} parent=5 // pred_region
        %s247 = ssub.s32 %s18, 1
        %p248 = scmp.lt.s32.totalorder %s23, 1
        %s249 = scalar_select %p248, %s23, 1
        %s250 = smul.addr %s249, 2
        %s251 = smul.addr %s250, 2
        %s252 = scalar_lea.vmem %s0, %s251
        %p253 = pneg %p44
        %p254 = pneg %p41
        %p255 = pneg %p65
        %p256 = pneg %p62
        %p257 = pneg %p86
        %p258 = pneg %p83
        %p259 = pneg %p107
        %p260 = pneg %p104
        %p261 = pneg %p128
        %p262 = pneg %p125
        %p263 = pneg %p149
        %p264 = pneg %p146
        %p265 = pneg %p170
        %p266 = pneg %p167
        %p267 = pneg %p196
        %p268 = pneg %p193
        %s269 = sand.u32 %s183, 1
        %s270 = scalar_lea.sflag [#allocation7], %s269
        %s271 = sand.u32 %s183, 1
        %s272 = smul.addr %s271, 2
        %s273 = scalar_lea.vmem [#allocation6], %s272
        %p274 = scmp.lt.s32.totalorder %s23, 1
        %s275 = scalar_select %p274, %s23, 1
        %s276 = smul.addr %s275, 2
        %s277 = smul.addr %s276, 2
        %s278 = scalar_lea.vmem %s0, %s277
        %279 = vst [vmem:[#allocation2] sm:$0x7] 0.0
        %280 = vst [vmem:[#allocation2] sm:$0x1] 0.0
        %281 = vst [vmem:[#allocation2 + $0x4] sm:$0x1] 0.0
        %282 = vst [vmem:[#allocation2 + $0x8] sm:$0x1] 0.0
        %283 = vst [vmem:[#allocation3] sm:$0x7] 0.0
        %284 = vst [vmem:[#allocation3] sm:$0x1] 0.0
        %285 = vst [vmem:[#allocation3 + $0x4] sm:$0x1] 0.0
        %286 = vst [vmem:[#allocation3 + $0x8] sm:$0x1] 0.0
        %v287 = vld [vmem:[%s278] sm:$0x1]
        %v288 = vld [vmem:[%s278 + $0x2] sm:$0x1]
        %v289 = vunpack.c.l.bf16 %v287
        %v290 = vunpack.c.l.bf16 %v288
        %s291 = scalar_lea.vmem [#allocation2], 4
        %292 = vst [vmem:[%s291 + $0x1] sm:$0x3] %v289
        %293 = vst [vmem:[%s291 + $0x5] sm:$0x3] %v290
        %v294 = vld [vmem:[%s278] sm:$0x2]
        %v295 = vld [vmem:[%s278 + $0x2] sm:$0x2]
        %v296 = vunpack.c.l.bf16 %v294
        %v297 = vunpack.c.l.bf16 %v295
        %s298 = scalar_lea.vmem [#allocation3], 4
        %299 = vst [vmem:[%s298 - $0x1] sm:$0xc] %v296
        %300 = vst [vmem:[%s298 + $0x3] sm:$0xc] %v297
        %v301 = vld [vmem:[#allocation3] sm:$0x3]
        %v302 = vld [vmem:[#allocation3 + $0x4] sm:$0x3]
        %v303 = vld [vmem:[#allocation3 + $0x1] sm:$0x3]
        %v304 = vld [vmem:[#allocation3 + $0x5] sm:$0x3]
        %v305 = vld [vmem:[%s291] sm:$0x3]
        %v306 = vld [vmem:[%s291 + $0x4] sm:$0x3]
        %v307 = vld [vmem:[%s291 + $0x1] sm:$0x3]
        %v308 = vld [vmem:[%s291 + $0x5] sm:$0x3]
        %v309 = vld [vmem:[%s298] sm:$0x3]
        %v310 = vld [vmem:[%s298 + $0x4] sm:$0x3]
        %v311 = vld [vmem:[%s298 + $0x1] sm:$0x3]
        %v312 = vld [vmem:[%s298 + $0x5] sm:$0x3]
        %v325 = vrot.slane %v303, 6
        %v326 = vrot.slane %v305, 4
        %v327 = vrot.slane %v307, 2
        %v328 = vrot.slane %v311, 6
        %v329 = vrot.slane %v304, 6
        %v330 = vrot.slane %v306, 4
        %v331 = vrot.slane %v308, 2
        %v332 = vrot.slane %v312, 6
        %vm333 = vcmask 1041408
        %v334 = vsel %vm333, %v301, %v325
        %vm335 = vcmask 1045508
        %v336 = vsel %vm335, %v326, %v327
        %vm337 = vcmask 1043456
        %v338 = vsel %vm337, %v334, %v336
        %v339 = vsel %vm333, %v309, %v328
        %v340 = vsel %vm333, %v302, %v329
        %v341 = vsel %vm335, %v330, %v331
        %v342 = vsel %vm337, %v340, %v341
        %v343 = vsel %vm333, %v310, %v332
        %344 = vst [vmem:[#allocation1] ss:$4 sm:$0xff] %v338
        %s345 = scalar_lea.vmem [#allocation1], 1
        %346 = vst [vmem:[%s345] ss:$4 sm:$0xff] %v342
        %s347 = scalar_lea.vmem [#allocation1], 32
        %348 = vst [vmem:[%s347] ss:$4 sm:$0xff] %v339
        %s349 = scalar_lea.vmem [#allocation1], 33
        %350 = vst [vmem:[%s349] ss:$4 sm:$0xff] %v343
        %v351 = vld.sshfl [vmem:[#allocation1] sm:$0xff pattern:$0x73625140]
        %v352 = vld.sshfl [vmem:[#allocation1 + $0x8] sm:$0xff pattern:$0x73625140]
        %v353 = vld.sshfl [vmem:[#allocation1 + $0x10] sm:$0xff pattern:$0x73625140]
        %v354 = vld.sshfl [vmem:[#allocation1 + $0x18] sm:$0xff pattern:$0x73625140]
        %v355 = vld.sshfl [vmem:[#allocation1 + $0x20] sm:$0xff pattern:$0x73625140]
        %v356 = vld.sshfl [vmem:[#allocation1 + $0x28] sm:$0xff pattern:$0x73625140]
        %v363 = vpack.c.bf16 %v351, %v351
        %v364 = vpack.c.bf16 %v352, %v352
        %v365 = vpack.c.bf16 %v353, %v353
        %v366 = vpack.c.bf16 %v354, %v354
        %v367 = vpack.c.bf16 %v355, %v355
        %v368 = vpack.c.bf16 %v356, %v356
        %v369 = vld [vmem:[%s1] sm:$0xf]
        %v370 = vld [vmem:[%s1 + $0x4] sm:$0xf]
        %v371 = vld [vmem:[%s1 + $0x8] sm:$0xf]
        %v372 = vld [vmem:[%s1 + $0xc] sm:$0xf]
        %v373 = vld [vmem:[%s1 + $0x10] sm:$0xf]
        %v374 = vld [vmem:[%s1 + $0x14] sm:$0xf]
        %v375 = vld [vmem:[%s1 + $0x18] sm:$0xf]
        %v376 = vld [vmem:[%s1 + $0x1c] sm:$0xf]
        %v377 = vld [vmem:[%s1 + $0x20] sm:$0xf]
        %v378 = vld [vmem:[%s1 + $0x24] sm:$0xf]
        %v379 = vld [vmem:[%s1 + $0x28] sm:$0xf]
        %v380 = vld [vmem:[%s1 + $0x2c] sm:$0xf]
        %v381 = vld [vmem:[%s1 + $0x30] sm:$0xf]
        %v382 = vld [vmem:[%s1 + $0x34] sm:$0xf]
        %v383 = vld [vmem:[%s1 + $0x38] sm:$0xf]
        %v384 = vld [vmem:[%s1 + $0x3c] sm:$0xf]
        %v385 = vld [vmem:[%s1 + $0x40] sm:$0xf]
        %v386 = vld [vmem:[%s1 + $0x44] sm:$0xf]
        %v387 = vld [vmem:[%s1 + $0x48] sm:$0xf]
        %v388 = vld [vmem:[%s1 + $0x4c] sm:$0xf]
        %v389 = vld [vmem:[%s1 + $0x50] sm:$0xf]
        %v390 = vld [vmem:[%s1 + $0x54] sm:$0xf]
        %v391 = vld [vmem:[%s1 + $0x58] sm:$0xf]
        %v392 = vld [vmem:[%s1 + $0x5c] sm:$0xf]
        %v393 = vld [vmem:[%s1 + $0x60] sm:$0xf]
        %v394 = vld [vmem:[%s1 + $0x64] sm:$0xf]
        %v395 = vld [vmem:[%s1 + $0x68] sm:$0xf]
        %v396 = vld [vmem:[%s1 + $0x6c] sm:$0xf]
        %v397 = vld [vmem:[%s1 + $0x70] sm:$0xf]
        %v398 = vld [vmem:[%s1 + $0x74] sm:$0xf]
        %v399 = vld [vmem:[%s1 + $0x78] sm:$0xf]
        %v400 = vld [vmem:[%s1 + $0x7c] sm:$0xf]
        %v401 = vld [vmem:[%s1 + $0x80] sm:$0xf]
        %v402 = vld [vmem:[%s1 + $0x84] sm:$0xf]
        %v403 = vld [vmem:[%s1 + $0x88] sm:$0xf]
        %v404 = vld [vmem:[%s1 + $0x8c] sm:$0xf]
        %v405 = vld [vmem:[%s1 + $0x90] sm:$0xf]
        %v406 = vld [vmem:[%s1 + $0x94] sm:$0xf]
        %v407 = vld [vmem:[%s1 + $0x98] sm:$0xf]
        %v408 = vld [vmem:[%s1 + $0x9c] sm:$0xf]
        %v409 = vld [vmem:[%s1 + $0xa0] sm:$0xf]
        %v410 = vld [vmem:[%s1 + $0xa4] sm:$0xf]
        %v411 = vld [vmem:[%s1 + $0xa8] sm:$0xf]
        %v412 = vld [vmem:[%s1 + $0xac] sm:$0xf]
        %v413 = vld [vmem:[%s1 + $0xb0] sm:$0xf]
        %v414 = vld [vmem:[%s1 + $0xb4] sm:$0xf]
        %v415 = vld [vmem:[%s1 + $0xb8] sm:$0xf]
        %v416 = vld [vmem:[%s1 + $0xbc] sm:$0xf]
        %v417 = vld [vmem:[%s1 + $0xc0] sm:$0xf]
        %v418 = vld [vmem:[%s1 + $0xc4] sm:$0xf]
        %v419 = vld [vmem:[%s1 + $0xc8] sm:$0xf]
        %v420 = vld [vmem:[%s1 + $0xcc] sm:$0xf]
        %v421 = vld [vmem:[%s1 + $0xd0] sm:$0xf]
        %v422 = vld [vmem:[%s1 + $0xd4] sm:$0xf]
        %v423 = vld [vmem:[%s1 + $0xd8] sm:$0xf]
        %v424 = vld [vmem:[%s1 + $0xdc] sm:$0xf]
        %v425 = vld [vmem:[%s1 + $0xe0] sm:$0xf]
        %v426 = vld [vmem:[%s1 + $0xe4] sm:$0xf]
        %v427 = vld [vmem:[%s1 + $0xe8] sm:$0xf]
        %v428 = vld [vmem:[%s1 + $0xec] sm:$0xf]
        %v429 = vld [vmem:[%s1 + $0xf0] sm:$0xf]
        %v430 = vld [vmem:[%s1 + $0xf4] sm:$0xf]
        %v431 = vld [vmem:[%s1 + $0xf8] sm:$0xf]
        %v432 = vld [vmem:[%s1 + $0xfc] sm:$0xf]
        %v433 = vld [vmem:[%s1 + $0x100] sm:$0xf]
        %v434 = vld [vmem:[%s1 + $0x104] sm:$0xf]
        %v435 = vld [vmem:[%s1 + $0x108] sm:$0xf]
        %v436 = vld [vmem:[%s1 + $0x10c] sm:$0xf]
        %v437 = vld [vmem:[%s1 + $0x110] sm:$0xf]
        %v438 = vld [vmem:[%s1 + $0x114] sm:$0xf]
        %v439 = vld [vmem:[%s1 + $0x118] sm:$0xf]
        %v440 = vld [vmem:[%s1 + $0x11c] sm:$0xf]
        %v441 = vld [vmem:[%s1 + $0x120] sm:$0xf]
        %v442 = vld [vmem:[%s1 + $0x124] sm:$0xf]
        %v443 = vld [vmem:[%s1 + $0x128] sm:$0xf]
        %v444 = vld [vmem:[%s1 + $0x12c] sm:$0xf]
        %v445 = vld [vmem:[%s1 + $0x130] sm:$0xf]
        %v446 = vld [vmem:[%s1 + $0x134] sm:$0xf]
        %v447 = vld [vmem:[%s1 + $0x138] sm:$0xf]
        %v448 = vld [vmem:[%s1 + $0x13c] sm:$0xf]
        %v449 = vld [vmem:[%s1 + $0x140] sm:$0xf]
        %v450 = vld [vmem:[%s1 + $0x144] sm:$0xf]
        %v451 = vld [vmem:[%s1 + $0x148] sm:$0xf]
        %v452 = vld [vmem:[%s1 + $0x14c] sm:$0xf]
        %v453 = vld [vmem:[%s1 + $0x150] sm:$0xf]
        %v454 = vld [vmem:[%s1 + $0x154] sm:$0xf]
        %v455 = vld [vmem:[%s1 + $0x158] sm:$0xf]
        %v456 = vld [vmem:[%s1 + $0x15c] sm:$0xf]
        %v457 = vld [vmem:[%s1 + $0x160] sm:$0xf]
        %v458 = vld [vmem:[%s1 + $0x164] sm:$0xf]
        %v459 = vld [vmem:[%s1 + $0x168] sm:$0xf]
        %v460 = vld [vmem:[%s1 + $0x16c] sm:$0xf]
        %v461 = vld [vmem:[%s1 + $0x170] sm:$0xf]
        %v462 = vld [vmem:[%s1 + $0x174] sm:$0xf]
        %v463 = vld [vmem:[%s1 + $0x178] sm:$0xf]
        %v464 = vld [vmem:[%s1 + $0x17c] sm:$0xf]
        %v465 = vld [vmem:[%s2] sm:$0x1]
        %v467 = vperm.slane %v465, 0
        %v565 = vunpack.c.l.b16 %v369
        %v566 = vunpack.c.l.b16 %v370
        %v567 = vunpack.c.l.b16 %v371
        %v568 = vunpack.c.l.b16 %v372
        %v569 = vunpack.c.l.b16 %v373
        %v570 = vunpack.c.l.b16 %v374
        %v571 = vunpack.c.l.b16 %v375
        %v572 = vunpack.c.l.b16 %v376
        %v573 = vunpack.c.l.b16 %v377
        %v574 = vunpack.c.l.b16 %v378
        %v575 = vunpack.c.l.b16 %v379
        %v576 = vunpack.c.l.b16 %v380
        %v577 = vunpack.c.l.b16 %v381
        %v578 = vunpack.c.l.b16 %v382
        %v579 = vunpack.c.l.b16 %v383
        %v580 = vunpack.c.l.b16 %v384
        %v581 = vunpack.c.l.b16 %v385
        %v582 = vunpack.c.l.b16 %v386
        %v583 = vunpack.c.l.b16 %v387
        %v584 = vunpack.c.l.b16 %v388
        %v585 = vunpack.c.l.b16 %v389
        %v586 = vunpack.c.l.b16 %v390
        %v587 = vunpack.c.l.b16 %v391
        %v588 = vunpack.c.l.b16 %v392
        %v589 = vunpack.c.l.b16 %v393
        %v590 = vunpack.c.l.b16 %v394
        %v591 = vunpack.c.l.b16 %v395
        %v592 = vunpack.c.l.b16 %v396
        %v593 = vunpack.c.l.b16 %v397
        %v594 = vunpack.c.l.b16 %v398
        %v595 = vunpack.c.l.b16 %v399
        %v596 = vunpack.c.l.b16 %v400
        %v597 = vunpack.c.l.b16 %v401
        %v598 = vunpack.c.l.b16 %v402
        %v599 = vunpack.c.l.b16 %v403
        %v600 = vunpack.c.l.b16 %v404
        %v601 = vunpack.c.l.b16 %v405
        %v602 = vunpack.c.l.b16 %v406
        %v603 = vunpack.c.l.b16 %v407
        %v604 = vunpack.c.l.b16 %v408
        %v605 = vunpack.c.l.b16 %v409
        %v606 = vunpack.c.l.b16 %v410
        %v607 = vunpack.c.l.b16 %v411
        %v608 = vunpack.c.l.b16 %v412
        %v609 = vunpack.c.l.b16 %v413
        %v610 = vunpack.c.l.b16 %v414
        %v611 = vunpack.c.l.b16 %v415
        %v612 = vunpack.c.l.b16 %v416
        %v613 = vunpack.c.l.b16 %v417
        %v614 = vunpack.c.l.b16 %v418
        %v615 = vunpack.c.l.b16 %v419
        %v616 = vunpack.c.l.b16 %v420
        %v617 = vunpack.c.l.b16 %v421
        %v618 = vunpack.c.l.b16 %v422
        %v619 = vunpack.c.l.b16 %v423
        %v620 = vunpack.c.l.b16 %v424
        %v621 = vunpack.c.l.b16 %v425
        %v622 = vunpack.c.l.b16 %v426
        %v623 = vunpack.c.l.b16 %v427
        %v624 = vunpack.c.l.b16 %v428
        %v625 = vunpack.c.l.b16 %v429
        %v626 = vunpack.c.l.b16 %v430
        %v627 = vunpack.c.l.b16 %v431
        %v628 = vunpack.c.l.b16 %v432
        %v629 = vunpack.c.l.b16 %v433
        %v630 = vunpack.c.l.b16 %v434
        %v631 = vunpack.c.l.b16 %v435
        %v632 = vunpack.c.l.b16 %v436
        %v633 = vunpack.c.l.b16 %v437
        %v634 = vunpack.c.l.b16 %v438
        %v635 = vunpack.c.l.b16 %v439
        %v636 = vunpack.c.l.b16 %v440
        %v637 = vunpack.c.l.b16 %v441
        %v638 = vunpack.c.l.b16 %v442
        %v639 = vunpack.c.l.b16 %v443
        %v640 = vunpack.c.l.b16 %v444
        %v641 = vunpack.c.l.b16 %v445
        %v642 = vunpack.c.l.b16 %v446
        %v643 = vunpack.c.l.b16 %v447
        %v644 = vunpack.c.l.b16 %v448
        %v645 = vunpack.c.l.b16 %v449
        %v646 = vunpack.c.l.b16 %v450
        %v647 = vunpack.c.l.b16 %v451
        %v648 = vunpack.c.l.b16 %v452
        %v649 = vunpack.c.l.b16 %v453
        %v650 = vunpack.c.l.b16 %v454
        %v651 = vunpack.c.l.b16 %v455
        %v652 = vunpack.c.l.b16 %v456
        %v653 = vunpack.c.l.b16 %v457
        %v654 = vunpack.c.l.b16 %v458
        %v655 = vunpack.c.l.b16 %v459
        %v656 = vunpack.c.l.b16 %v460
        %v657 = vunpack.c.l.b16 %v461
        %v658 = vunpack.c.l.b16 %v462
        %v659 = vunpack.c.l.b16 %v463
        %v660 = vunpack.c.l.b16 %v464
        %v661 = vpack.c.b16 %v566, %v565
        %v662 = vpack.c.b16 %v568, %v567
        %v663 = vpack.c.b16 %v570, %v569
        %v664 = vpack.c.b16 %v572, %v571
        %v665 = vpack.c.b16 %v574, %v573
        %v666 = vpack.c.b16 %v576, %v575
        %v667 = vpack.c.b16 %v578, %v577
        %v668 = vpack.c.b16 %v580, %v579
        %v669 = vpack.c.b16 %v582, %v581
        %v670 = vpack.c.b16 %v584, %v583
        %v671 = vpack.c.b16 %v586, %v585
        %v672 = vpack.c.b16 %v588, %v587
        %v673 = vpack.c.b16 %v590, %v589
        %v674 = vpack.c.b16 %v592, %v591
        %v675 = vpack.c.b16 %v594, %v593
        %v676 = vpack.c.b16 %v596, %v595
        %v677 = vpack.c.b16 %v598, %v597
        %v678 = vpack.c.b16 %v600, %v599
        %v679 = vpack.c.b16 %v602, %v601
        %v680 = vpack.c.b16 %v604, %v603
        %v681 = vpack.c.b16 %v606, %v605
        %v682 = vpack.c.b16 %v608, %v607
        %v683 = vpack.c.b16 %v610, %v609
        %v684 = vpack.c.b16 %v612, %v611
        %v685 = vpack.c.b16 %v614, %v613
        %v686 = vpack.c.b16 %v616, %v615
        %v687 = vpack.c.b16 %v618, %v617
        %v688 = vpack.c.b16 %v620, %v619
        %v689 = vpack.c.b16 %v622, %v621
        %v690 = vpack.c.b16 %v624, %v623
        %v691 = vpack.c.b16 %v626, %v625
        %v692 = vpack.c.b16 %v628, %v627
        %v693 = vpack.c.b16 %v630, %v629
        %v694 = vpack.c.b16 %v632, %v631
        %v695 = vpack.c.b16 %v634, %v633
        %v696 = vpack.c.b16 %v636, %v635
        %v697 = vpack.c.b16 %v638, %v637
        %v698 = vpack.c.b16 %v640, %v639
        %v699 = vpack.c.b16 %v642, %v641
        %v700 = vpack.c.b16 %v644, %v643
        %v701 = vpack.c.b16 %v646, %v645
        %v702 = vpack.c.b16 %v648, %v647
        %v703 = vpack.c.b16 %v650, %v649
        %v704 = vpack.c.b16 %v652, %v651
        %v705 = vpack.c.b16 %v654, %v653
        %v706 = vpack.c.b16 %v656, %v655
        %v707 = vpack.c.b16 %v658, %v657
        %v708 = vpack.c.b16 %v660, %v659
        %757 = vmatpush.bf16.msra.mxu0 %v668
        %758 = vmatpush.bf16.msra.mxu0 %v667
        %759 = vmatpush.bf16.msra.mxu0 %v666
        %760 = vmatpush.bf16.msra.mxu0 %v665
        %761 = vmatpush.bf16.msra.mxu0 %v664
        %762 = vmatpush.bf16.msra.mxu0 %v663
        %763 = vmatpush.bf16.msra.mxu0 %v662
        %764 = vmatpush.bf16.msra.mxu0 %v661
        %765 = vmatmul.bf16.gmra.mxu0 %v363
        %v766 = vpop.f32.mrf.mxu0
        %v767 = vadd.f32 %v467, %v766
        %v768 = vpop.f32.mrf.mxu0
        %769 = vdwg.mxu0
        %770 = vmatpush.bf16.msra.mxu0 %v676
        %771 = vmatpush.bf16.msra.mxu0 %v675
        %772 = vmatpush.bf16.msra.mxu0 %v674
        %773 = vmatpush.bf16.msra.mxu0 %v673
        %774 = vmatpush.bf16.msra.mxu0 %v672
        %775 = vmatpush.bf16.msra.mxu0 %v671
        %776 = vmatpush.bf16.msra.mxu0 %v670
        %777 = vmatpush.bf16.msra.mxu0 %v669
        %778 = vmatmul.bf16.gmra.mxu0 %v364
        %v779 = vpop.f32.mrf.mxu0
        %v780 = vadd.f32 %v767, %v779
        %v781 = vpop.f32.mrf.mxu0
        %782 = vdwg.mxu0
        %783 = vmatpush.bf16.msra.mxu0 %v684
        %784 = vmatpush.bf16.msra.mxu0 %v683
        %785 = vmatpush.bf16.msra.mxu0 %v682
        %786 = vmatpush.bf16.msra.mxu0 %v681
        %787 = vmatpush.bf16.msra.mxu0 %v680
        %788 = vmatpush.bf16.msra.mxu0 %v679
        %789 = vmatpush.bf16.msra.mxu0 %v678
        %790 = vmatpush.bf16.msra.mxu0 %v677
        %791 = vmatmul.bf16.gmra.mxu0 %v365
        %v792 = vpop.f32.mrf.mxu0
        %v793 = vadd.f32 %v780, %v792
        %v794 = vpop.f32.mrf.mxu0
        %795 = vdwg.mxu0
        %796 = vmatpush.bf16.msra.mxu0 %v692
        %797 = vmatpush.bf16.msra.mxu0 %v691
        %798 = vmatpush.bf16.msra.mxu0 %v690
        %799 = vmatpush.bf16.msra.mxu0 %v689
        %800 = vmatpush.bf16.msra.mxu0 %v688
        %801 = vmatpush.bf16.msra.mxu0 %v687
        %802 = vmatpush.bf16.msra.mxu0 %v686
        %803 = vmatpush.bf16.msra.mxu0 %v685
        %804 = vmatmul.bf16.gmra.mxu0 %v366
        %v805 = vpop.f32.mrf.mxu0
        %v806 = vadd.f32 %v793, %v805
        %v807 = vpop.f32.mrf.mxu0
        %808 = vdwg.mxu0
        %809 = vmatpush.bf16.msra.mxu0 %v700
        %810 = vmatpush.bf16.msra.mxu0 %v699
        %811 = vmatpush.bf16.msra.mxu0 %v698
        %812 = vmatpush.bf16.msra.mxu0 %v697
        %813 = vmatpush.bf16.msra.mxu0 %v696
        %814 = vmatpush.bf16.msra.mxu0 %v695
        %815 = vmatpush.bf16.msra.mxu0 %v694
        %816 = vmatpush.bf16.msra.mxu0 %v693
        %817 = vmatmul.bf16.gmra.mxu0 %v367
        %v818 = vpop.f32.mrf.mxu0
        %v819 = vadd.f32 %v806, %v818
        %v820 = vpop.f32.mrf.mxu0
        %821 = vdwg.mxu0
        %822 = vmatpush.bf16.msra.mxu0 %v708
        %823 = vmatpush.bf16.msra.mxu0 %v707
        %824 = vmatpush.bf16.msra.mxu0 %v706
        %825 = vmatpush.bf16.msra.mxu0 %v705
        %826 = vmatpush.bf16.msra.mxu0 %v704
        %827 = vmatpush.bf16.msra.mxu0 %v703
        %828 = vmatpush.bf16.msra.mxu0 %v702
        %829 = vmatpush.bf16.msra.mxu0 %v701
        %830 = vmatmul.bf16.gmra.mxu0 %v368
        %v831 = vpop.f32.mrf.mxu0
        %v832 = vadd.f32 %v819, %v831
        %v833 = vpop.f32.mrf.mxu0
        %834 = vdwg.mxu0
        %vm835 = vcmp.ge.f32.partialorder %v832, 0.0
        %v836 = vmul.f32 %v832, 0.2
        %v837 = vsel %vm835, %v832, %v836
        %838 = vst [vmem:[#allocation4] sm:$0xf] 0.0
        %s839 = scalar_lea.vmem [#allocation4], 12
        %840 = vst [vmem:[%s839] sm:$0xf] 0.0
        %841 = vst [vmem:[#allocation4] sm:$0x1] 0.0
        %842 = vst [vmem:[#allocation4 + $0x4] sm:$0x1] 0.0
        %843 = vst [vmem:[#allocation4 + $0x8] sm:$0x1] 0.0
        %844 = vst [vmem:[#allocation4 + $0xc] sm:$0x1] 0.0
        %845 = vst [vmem:[#allocation4 + $0x3] sm:$0x1] 0.0
        %846 = vst [vmem:[#allocation4 + $0x7] sm:$0x1] 0.0
        %847 = vst [vmem:[#allocation4 + $0xb] sm:$0x1] 0.0
        %848 = vst [vmem:[#allocation4 + $0xf] sm:$0x1] 0.0
        %v850 = vrot.slane %v837, 2
        %s852 = scalar_lea.vmem [#allocation4], 4
        %853 = vst [vmem:[%s852 + $0x1] sm:$0x3] %v837
        %854 = vst [vmem:[%s852 + $0x5] sm:$0x3] %v850
        %v855 = vld [vmem:[#allocation4] sm:$0x3]
        %v856 = vld [vmem:[#allocation4 + $0x4] sm:$0x3]
        %v857 = vld [vmem:[#allocation4 + $0x1] sm:$0x3]
        %v858 = vld [vmem:[#allocation4 + $0x5] sm:$0x3]
        %v859 = vld [vmem:[#allocation4 + $0x2] sm:$0x3]
        %v860 = vld [vmem:[#allocation4 + $0x6] sm:$0x3]
        %v861 = vld [vmem:[%s852] sm:$0x3]
        %v862 = vld [vmem:[%s852 + $0x4] sm:$0x3]
        %v863 = vld [vmem:[%s852 + $0x1] sm:$0x3]
        %v864 = vld [vmem:[%s852 + $0x5] sm:$0x3]
        %v865 = vld [vmem:[%s852 + $0x2] sm:$0x3]
        %v866 = vld [vmem:[%s852 + $0x6] sm:$0x3]
        %s867 = scalar_lea.vmem [#allocation4], 8
        %v868 = vld [vmem:[%s867] sm:$0x3]
        %v869 = vld [vmem:[%s867 + $0x4] sm:$0x3]
        %v870 = vld [vmem:[%s867 + $0x1] sm:$0x3]
        %v871 = vld [vmem:[%s867 + $0x5] sm:$0x3]
        %v872 = vld [vmem:[%s867 + $0x2] sm:$0x3]
        %v873 = vld [vmem:[%s867 + $0x6] sm:$0x3]
        %v892 = vrot.slane %v857, 6
        %v893 = vrot.slane %v859, 4
        %v894 = vrot.slane %v861, 2
        %v895 = vrot.slane %v865, 6
        %v896 = vrot.slane %v868, 4
        %v897 = vrot.slane %v870, 2
        %v898 = vrot.slane %v858, 6
        %v899 = vrot.slane %v860, 4
        %v900 = vrot.slane %v862, 2
        %v901 = vrot.slane %v866, 6
        %v902 = vrot.slane %v869, 4
        %v903 = vrot.slane %v871, 2
        %v904 = vsel %vm333, %v855, %v892
        %v905 = vsel %vm335, %v893, %v894
        %v906 = vsel %vm337, %v904, %v905
        %v907 = vsel %vm333, %v863, %v895
        %v908 = vsel %vm335, %v896, %v897
        %v909 = vsel %vm337, %v907, %v908
        %v910 = vsel %vm333, %v856, %v898
        %v911 = vsel %vm335, %v899, %v900
        %v912 = vsel %vm337, %v910, %v911
        %v913 = vsel %vm333, %v864, %v901
        %v914 = vsel %vm335, %v902, %v903
        %v915 = vsel %vm337, %v913, %v914
        %916 = vst [vmem:[#allocation1] ss:$4 sm:$0xff] %v906
        %s917 = scalar_lea.vmem [#allocation1], 1
        %918 = vst [vmem:[%s917] ss:$4 sm:$0xff] %v912
        %s919 = scalar_lea.vmem [#allocation1], 32
        %920 = vst [vmem:[%s919] ss:$4 sm:$0xff] %v909
        %s921 = scalar_lea.vmem [#allocation1], 33
        %922 = vst [vmem:[%s921] ss:$4 sm:$0xff] %v915
        %v923 = vld.sshfl [vmem:[#allocation1] sm:$0xff pattern:$0x73625140]
        %v924 = vld.sshfl [vmem:[#allocation1 + $0x8] sm:$0xff pattern:$0x73625140]
        %v925 = vld.sshfl [vmem:[#allocation1 + $0x10] sm:$0xff pattern:$0x73625140]
        %v926 = vld.sshfl [vmem:[#allocation1 + $0x18] sm:$0xff pattern:$0x73625140]
        %v927 = vld.sshfl [vmem:[#allocation1 + $0x20] sm:$0xff pattern:$0x73625140]
        %v928 = vld.sshfl [vmem:[#allocation1 + $0x28] sm:$0xff pattern:$0x73625140]
        %v929 = vld.sshfl [vmem:[#allocation1 + $0x30] sm:$0xff pattern:$0x73625140]
        %v930 = vld.sshfl [vmem:[#allocation1 + $0x38] sm:$0xff pattern:$0x73625140]
        %931 = vst [vmem:[#allocation1] ss:$4 sm:$0xff] %v872
        %932 = vst [vmem:[%s917] ss:$4 sm:$0xff] %v873
        %v933 = vld.sshfl [vmem:[#allocation1] sm:$0xff pattern:$0x73625140]
        %v943 = vpack.c.bf16 %v923, %v923
        %v944 = vpack.c.bf16 %v924, %v924
        %v945 = vpack.c.bf16 %v925, %v925
        %v946 = vpack.c.bf16 %v926, %v926
        %v947 = vpack.c.bf16 %v927, %v927
        %v948 = vpack.c.bf16 %v928, %v928
        %v949 = vpack.c.bf16 %v929, %v929
        %v950 = vpack.c.bf16 %v930, %v930
        %v951 = vpack.c.bf16 %v933, %v933
        %v952 = vld [vmem:[%s3] sm:$0xf]
        %v953 = vld [vmem:[%s3 + $0x4] sm:$0xf]
        %v954 = vld [vmem:[%s3 + $0x8] sm:$0xf]
        %v955 = vld [vmem:[%s3 + $0xc] sm:$0xf]
        %v956 = vld [vmem:[%s3 + $0x10] sm:$0xf]
        %v957 = vld [vmem:[%s3 + $0x14] sm:$0xf]
        %v958 = vld [vmem:[%s3 + $0x18] sm:$0xf]
        %v959 = vld [vmem:[%s3 + $0x1c] sm:$0xf]
        %v960 = vld [vmem:[%s3 + $0x20] sm:$0xf]
        %v961 = vld [vmem:[%s3 + $0x24] sm:$0xf]
        %v962 = vld [vmem:[%s3 + $0x28] sm:$0xf]
        %v963 = vld [vmem:[%s3 + $0x2c] sm:$0xf]
        %v964 = vld [vmem:[%s3 + $0x30] sm:$0xf]
        %v965 = vld [vmem:[%s3 + $0x34] sm:$0xf]
        %v966 = vld [vmem:[%s3 + $0x38] sm:$0xf]
        %v967 = vld [vmem:[%s3 + $0x3c] sm:$0xf]
        %v968 = vld [vmem:[%s3 + $0x40] sm:$0xf]
        %v969 = vld [vmem:[%s3 + $0x44] sm:$0xf]
        %v970 = vld [vmem:[%s3 + $0x48] sm:$0xf]
        %v971 = vld [vmem:[%s3 + $0x4c] sm:$0xf]
        %v972 = vld [vmem:[%s3 + $0x50] sm:$0xf]
        %v973 = vld [vmem:[%s3 + $0x54] sm:$0xf]
        %v974 = vld [vmem:[%s3 + $0x58] sm:$0xf]
        %v975 = vld [vmem:[%s3 + $0x5c] sm:$0xf]
        %v976 = vld [vmem:[%s3 + $0x60] sm:$0xf]
        %v977 = vld [vmem:[%s3 + $0x64] sm:$0xf]
        %v978 = vld [vmem:[%s3 + $0x68] sm:$0xf]
        %v979 = vld [vmem:[%s3 + $0x6c] sm:$0xf]
        %v980 = vld [vmem:[%s3 + $0x70] sm:$0xf]
        %v981 = vld [vmem:[%s3 + $0x74] sm:$0xf]
        %v982 = vld [vmem:[%s3 + $0x78] sm:$0xf]
        %v983 = vld [vmem:[%s3 + $0x7c] sm:$0xf]
        %v984 = vld [vmem:[%s3 + $0x80] sm:$0xf]
        %v985 = vld [vmem:[%s3 + $0x84] sm:$0xf]
        %v986 = vld [vmem:[%s3 + $0x88] sm:$0xf]
        %v987 = vld [vmem:[%s3 + $0x8c] sm:$0xf]
        %v988 = vld [vmem:[%s3 + $0x90] sm:$0xf]
        %v989 = vld [vmem:[%s3 + $0x94] sm:$0xf]
        %v990 = vld [vmem:[%s3 + $0x98] sm:$0xf]
        %v991 = vld [vmem:[%s3 + $0x9c] sm:$0xf]
        %v992 = vld [vmem:[%s3 + $0xa0] sm:$0xf]
        %v993 = vld [vmem:[%s3 + $0xa4] sm:$0xf]
        %v994 = vld [vmem:[%s3 + $0xa8] sm:$0xf]
        %v995 = vld [vmem:[%s3 + $0xac] sm:$0xf]
        %v996 = vld [vmem:[%s3 + $0xb0] sm:$0xf]
        %v997 = vld [vmem:[%s3 + $0xb4] sm:$0xf]
        %v998 = vld [vmem:[%s3 + $0xb8] sm:$0xf]
        %v999 = vld [vmem:[%s3 + $0xbc] sm:$0xf]
        %v1000 = vld [vmem:[%s3 + $0xc0] sm:$0xf]
        %v1001 = vld [vmem:[%s3 + $0xc4] sm:$0xf]
        %v1002 = vld [vmem:[%s3 + $0xc8] sm:$0xf]
        %v1003 = vld [vmem:[%s3 + $0xcc] sm:$0xf]
        %v1004 = vld [vmem:[%s3 + $0xd0] sm:$0xf]
        %v1005 = vld [vmem:[%s3 + $0xd4] sm:$0xf]
        %v1006 = vld [vmem:[%s3 + $0xd8] sm:$0xf]
        %v1007 = vld [vmem:[%s3 + $0xdc] sm:$0xf]
        %v1008 = vld [vmem:[%s3 + $0xe0] sm:$0xf]
        %v1009 = vld [vmem:[%s3 + $0xe4] sm:$0xf]
        %v1010 = vld [vmem:[%s3 + $0xe8] sm:$0xf]
        %v1011 = vld [vmem:[%s3 + $0xec] sm:$0xf]
        %v1012 = vld [vmem:[%s3 + $0xf0] sm:$0xf]
        %v1013 = vld [vmem:[%s3 + $0xf4] sm:$0xf]
        %v1014 = vld [vmem:[%s3 + $0xf8] sm:$0xf]
        %v1015 = vld [vmem:[%s3 + $0xfc] sm:$0xf]
        %v1016 = vld [vmem:[%s3 + $0x100] sm:$0xf]
        %v1017 = vld [vmem:[%s3 + $0x104] sm:$0xf]
        %v1018 = vld [vmem:[%s3 + $0x108] sm:$0xf]
        %v1019 = vld [vmem:[%s3 + $0x10c] sm:$0xf]
        %v1020 = vld [vmem:[%s3 + $0x110] sm:$0xf]
        %v1021 = vld [vmem:[%s3 + $0x114] sm:$0xf]
        %v1022 = vld [vmem:[%s3 + $0x118] sm:$0xf]
        %v1023 = vld [vmem:[%s3 + $0x11c] sm:$0xf]
        %v1024 = vld [vmem:[%s3 + $0x120] sm:$0xf]
        %v1025 = vld [vmem:[%s3 + $0x124] sm:$0xf]
        %v1026 = vld [vmem:[%s3 + $0x128] sm:$0xf]
        %v1027 = vld [vmem:[%s3 + $0x12c] sm:$0xf]
        %v1028 = vld [vmem:[%s3 + $0x130] sm:$0xf]
        %v1029 = vld [vmem:[%s3 + $0x134] sm:$0xf]
        %v1030 = vld [vmem:[%s3 + $0x138] sm:$0xf]
        %v1031 = vld [vmem:[%s3 + $0x13c] sm:$0xf]
        %v1032 = vld [vmem:[%s3 + $0x140] sm:$0xf]
        %v1033 = vld [vmem:[%s3 + $0x144] sm:$0xf]
        %v1034 = vld [vmem:[%s3 + $0x148] sm:$0xf]
        %v1035 = vld [vmem:[%s3 + $0x14c] sm:$0xf]
        %v1036 = vld [vmem:[%s3 + $0x150] sm:$0xf]
        %v1037 = vld [vmem:[%s3 + $0x154] sm:$0xf]
        %v1038 = vld [vmem:[%s3 + $0x158] sm:$0xf]
        %v1039 = vld [vmem:[%s3 + $0x15c] sm:$0xf]
        %v1040 = vld [vmem:[%s3 + $0x160] sm:$0xf]
        %v1041 = vld [vmem:[%s3 + $0x164] sm:$0xf]
        %v1042 = vld [vmem:[%s3 + $0x168] sm:$0xf]
        %v1043 = vld [vmem:[%s3 + $0x16c] sm:$0xf]
        %v1044 = vld [vmem:[%s3 + $0x170] sm:$0xf]
        %v1045 = vld [vmem:[%s3 + $0x174] sm:$0xf]
        %v1046 = vld [vmem:[%s3 + $0x178] sm:$0xf]
        %v1047 = vld [vmem:[%s3 + $0x17c] sm:$0xf]
        %v1048 = vld [vmem:[%s3 + $0x180] sm:$0xf]
        %v1049 = vld [vmem:[%s3 + $0x184] sm:$0xf]
        %v1050 = vld [vmem:[%s3 + $0x188] sm:$0xf]
        %v1051 = vld [vmem:[%s3 + $0x18c] sm:$0xf]
        %v1052 = vld [vmem:[%s3 + $0x190] sm:$0xf]
        %v1053 = vld [vmem:[%s3 + $0x194] sm:$0xf]
        %v1054 = vld [vmem:[%s3 + $0x198] sm:$0xf]
        %v1055 = vld [vmem:[%s3 + $0x19c] sm:$0xf]
        %v1056 = vld [vmem:[%s3 + $0x1a0] sm:$0xf]
        %v1057 = vld [vmem:[%s3 + $0x1a4] sm:$0xf]
        %v1058 = vld [vmem:[%s3 + $0x1a8] sm:$0xf]
        %v1059 = vld [vmem:[%s3 + $0x1ac] sm:$0xf]
        %v1060 = vld [vmem:[%s3 + $0x1b0] sm:$0xf]
        %v1061 = vld [vmem:[%s3 + $0x1b4] sm:$0xf]
        %v1062 = vld [vmem:[%s3 + $0x1b8] sm:$0xf]
        %v1063 = vld [vmem:[%s3 + $0x1bc] sm:$0xf]
        %v1064 = vld [vmem:[%s3 + $0x1c0] sm:$0xf]
        %v1065 = vld [vmem:[%s3 + $0x1c4] sm:$0xf]
        %v1066 = vld [vmem:[%s3 + $0x1c8] sm:$0xf]
        %v1067 = vld [vmem:[%s3 + $0x1cc] sm:$0xf]
        %v1068 = vld [vmem:[%s3 + $0x1d0] sm:$0xf]
        %v1069 = vld [vmem:[%s3 + $0x1d4] sm:$0xf]
        %v1070 = vld [vmem:[%s3 + $0x1d8] sm:$0xf]
        %v1071 = vld [vmem:[%s3 + $0x1dc] sm:$0xf]
        %v1072 = vld [vmem:[%s3 + $0x1e0] sm:$0xf]
        %v1073 = vld [vmem:[%s3 + $0x1e4] sm:$0xf]
        %v1074 = vld [vmem:[%s3 + $0x1e8] sm:$0xf]
        %v1075 = vld [vmem:[%s3 + $0x1ec] sm:$0xf]
        %v1076 = vld [vmem:[%s3 + $0x1f0] sm:$0xf]
        %v1077 = vld [vmem:[%s3 + $0x1f4] sm:$0xf]
        %v1078 = vld [vmem:[%s3 + $0x1f8] sm:$0xf]
        %v1079 = vld [vmem:[%s3 + $0x1fc] sm:$0xf]
        %v1080 = vld [vmem:[%s3 + $0x200] sm:$0xf]
        %v1081 = vld [vmem:[%s3 + $0x204] sm:$0xf]
        %v1082 = vld [vmem:[%s3 + $0x208] sm:$0xf]
        %v1083 = vld [vmem:[%s3 + $0x20c] sm:$0xf]
        %v1084 = vld [vmem:[%s3 + $0x210] sm:$0xf]
        %v1085 = vld [vmem:[%s3 + $0x214] sm:$0xf]
        %v1086 = vld [vmem:[%s3 + $0x218] sm:$0xf]
        %v1087 = vld [vmem:[%s3 + $0x21c] sm:$0xf]
        %v1088 = vld [vmem:[%s3 + $0x220] sm:$0xf]
        %v1089 = vld [vmem:[%s3 + $0x224] sm:$0xf]
        %v1090 = vld [vmem:[%s3 + $0x228] sm:$0xf]
        %v1091 = vld [vmem:[%s3 + $0x22c] sm:$0xf]
        %v1092 = vld [vmem:[%s3 + $0x230] sm:$0xf]
        %v1093 = vld [vmem:[%s3 + $0x234] sm:$0xf]
        %v1094 = vld [vmem:[%s3 + $0x238] sm:$0xf]
        %v1095 = vld [vmem:[%s3 + $0x23c] sm:$0xf]
        %v1096 = vld [vmem:[%s4] sm:$0x1]
        %v1098 = vperm.slane %v1096, 0
        %v1244 = vunpack.c.l.b16 %v952
        %v1245 = vunpack.c.l.b16 %v953
        %v1246 = vunpack.c.l.b16 %v954
        %v1247 = vunpack.c.l.b16 %v955
        %v1248 = vunpack.c.l.b16 %v956
        %v1249 = vunpack.c.l.b16 %v957
        %v1250 = vunpack.c.l.b16 %v958
        %v1251 = vunpack.c.l.b16 %v959
        %v1252 = vunpack.c.l.b16 %v960
        %v1253 = vunpack.c.l.b16 %v961
        %v1254 = vunpack.c.l.b16 %v962
        %v1255 = vunpack.c.l.b16 %v963
        %v1256 = vunpack.c.l.b16 %v964
        %v1257 = vunpack.c.l.b16 %v965
        %v1258 = vunpack.c.l.b16 %v966
        %v1259 = vunpack.c.l.b16 %v967
        %v1260 = vunpack.c.l.b16 %v968
        %v1261 = vunpack.c.l.b16 %v969
        %v1262 = vunpack.c.l.b16 %v970
        %v1263 = vunpack.c.l.b16 %v971
        %v1264 = vunpack.c.l.b16 %v972
        %v1265 = vunpack.c.l.b16 %v973
        %v1266 = vunpack.c.l.b16 %v974
        %v1267 = vunpack.c.l.b16 %v975
        %v1268 = vunpack.c.l.b16 %v976
        %v1269 = vunpack.c.l.b16 %v977
        %v1270 = vunpack.c.l.b16 %v978
        %v1271 = vunpack.c.l.b16 %v979
        %v1272 = vunpack.c.l.b16 %v980
        %v1273 = vunpack.c.l.b16 %v981
        %v1274 = vunpack.c.l.b16 %v982
        %v1275 = vunpack.c.l.b16 %v983
        %v1276 = vunpack.c.l.b16 %v984
        %v1277 = vunpack.c.l.b16 %v985
        %v1278 = vunpack.c.l.b16 %v986
        %v1279 = vunpack.c.l.b16 %v987
        %v1280 = vunpack.c.l.b16 %v988
        %v1281 = vunpack.c.l.b16 %v989
        %v1282 = vunpack.c.l.b16 %v990
        %v1283 = vunpack.c.l.b16 %v991
        %v1284 = vunpack.c.l.b16 %v992
        %v1285 = vunpack.c.l.b16 %v993
        %v1286 = vunpack.c.l.b16 %v994
        %v1287 = vunpack.c.l.b16 %v995
        %v1288 = vunpack.c.l.b16 %v996
        %v1289 = vunpack.c.l.b16 %v997
        %v1290 = vunpack.c.l.b16 %v998
        %v1291 = vunpack.c.l.b16 %v999
        %v1292 = vunpack.c.l.b16 %v1000
        %v1293 = vunpack.c.l.b16 %v1001
        %v1294 = vunpack.c.l.b16 %v1002
        %v1295 = vunpack.c.l.b16 %v1003
        %v1296 = vunpack.c.l.b16 %v1004
        %v1297 = vunpack.c.l.b16 %v1005
        %v1298 = vunpack.c.l.b16 %v1006
        %v1299 = vunpack.c.l.b16 %v1007
        %v1300 = vunpack.c.l.b16 %v1008
        %v1301 = vunpack.c.l.b16 %v1009
        %v1302 = vunpack.c.l.b16 %v1010
        %v1303 = vunpack.c.l.b16 %v1011
        %v1304 = vunpack.c.l.b16 %v1012
        %v1305 = vunpack.c.l.b16 %v1013
        %v1306 = vunpack.c.l.b16 %v1014
        %v1307 = vunpack.c.l.b16 %v1015
        %v1308 = vunpack.c.l.b16 %v1016
        %v1309 = vunpack.c.l.b16 %v1017
        %v1310 = vunpack.c.l.b16 %v1018
        %v1311 = vunpack.c.l.b16 %v1019
        %v1312 = vunpack.c.l.b16 %v1020
        %v1313 = vunpack.c.l.b16 %v1021
        %v1314 = vunpack.c.l.b16 %v1022
        %v1315 = vunpack.c.l.b16 %v1023
        %v1316 = vunpack.c.l.b16 %v1024
        %v1317 = vunpack.c.l.b16 %v1025
        %v1318 = vunpack.c.l.b16 %v1026
        %v1319 = vunpack.c.l.b16 %v1027
        %v1320 = vunpack.c.l.b16 %v1028
        %v1321 = vunpack.c.l.b16 %v1029
        %v1322 = vunpack.c.l.b16 %v1030
        %v1323 = vunpack.c.l.b16 %v1031
        %v1324 = vunpack.c.l.b16 %v1032
        %v1325 = vunpack.c.l.b16 %v1033
        %v1326 = vunpack.c.l.b16 %v1034
        %v1327 = vunpack.c.l.b16 %v1035
        %v1328 = vunpack.c.l.b16 %v1036
        %v1329 = vunpack.c.l.b16 %v1037
        %v1330 = vunpack.c.l.b16 %v1038
        %v1331 = vunpack.c.l.b16 %v1039
        %v1332 = vunpack.c.l.b16 %v1040
        %v1333 = vunpack.c.l.b16 %v1041
        %v1334 = vunpack.c.l.b16 %v1042
        %v1335 = vunpack.c.l.b16 %v1043
        %v1336 = vunpack.c.l.b16 %v1044
        %v1337 = vunpack.c.l.b16 %v1045
        %v1338 = vunpack.c.l.b16 %v1046
        %v1339 = vunpack.c.l.b16 %v1047
        %v1340 = vunpack.c.l.b16 %v1048
        %v1341 = vunpack.c.l.b16 %v1049
        %v1342 = vunpack.c.l.b16 %v1050
        %v1343 = vunpack.c.l.b16 %v1051
        %v1344 = vunpack.c.l.b16 %v1052
        %v1345 = vunpack.c.l.b16 %v1053
        %v1346 = vunpack.c.l.b16 %v1054
        %v1347 = vunpack.c.l.b16 %v1055
        %v1348 = vunpack.c.l.b16 %v1056
        %v1349 = vunpack.c.l.b16 %v1057
        %v1350 = vunpack.c.l.b16 %v1058
        %v1351 = vunpack.c.l.b16 %v1059
        %v1352 = vunpack.c.l.b16 %v1060
        %v1353 = vunpack.c.l.b16 %v1061
        %v1354 = vunpack.c.l.b16 %v1062
        %v1355 = vunpack.c.l.b16 %v1063
        %v1356 = vunpack.c.l.b16 %v1064
        %v1357 = vunpack.c.l.b16 %v1065
        %v1358 = vunpack.c.l.b16 %v1066
        %v1359 = vunpack.c.l.b16 %v1067
        %v1360 = vunpack.c.l.b16 %v1068
        %v1361 = vunpack.c.l.b16 %v1069
        %v1362 = vunpack.c.l.b16 %v1070
        %v1363 = vunpack.c.l.b16 %v1071
        %v1364 = vunpack.c.l.b16 %v1072
        %v1365 = vunpack.c.l.b16 %v1073
        %v1366 = vunpack.c.l.b16 %v1074
        %v1367 = vunpack.c.l.b16 %v1075
        %v1368 = vunpack.c.l.b16 %v1076
        %v1369 = vunpack.c.l.b16 %v1077
        %v1370 = vunpack.c.l.b16 %v1078
        %v1371 = vunpack.c.l.b16 %v1079
        %v1372 = vunpack.c.l.b16 %v1080
        %v1373 = vunpack.c.l.b16 %v1081
        %v1374 = vunpack.c.l.b16 %v1082
        %v1375 = vunpack.c.l.b16 %v1083
        %v1376 = vunpack.c.l.b16 %v1084
        %v1377 = vunpack.c.l.b16 %v1085
        %v1378 = vunpack.c.l.b16 %v1086
        %v1379 = vunpack.c.l.b16 %v1087
        %v1380 = vunpack.c.l.b16 %v1088
        %v1381 = vunpack.c.l.b16 %v1089
        %v1382 = vunpack.c.l.b16 %v1090
        %v1383 = vunpack.c.l.b16 %v1091
        %v1384 = vunpack.c.l.b16 %v1092
        %v1385 = vunpack.c.l.b16 %v1093
        %v1386 = vunpack.c.l.b16 %v1094
        %v1387 = vunpack.c.l.b16 %v1095
        %v1388 = vpack.c.b16 %v1245, %v1244
        %v1389 = vpack.c.b16 %v1247, %v1246
        %v1390 = vpack.c.b16 %v1249, %v1248
        %v1391 = vpack.c.b16 %v1251, %v1250
        %v1392 = vpack.c.b16 %v1253, %v1252
        %v1393 = vpack.c.b16 %v1255, %v1254
        %v1394 = vpack.c.b16 %v1257, %v1256
        %v1395 = vpack.c.b16 %v1259, %v1258
        %v1396 = vpack.c.b16 %v1261, %v1260
        %v1397 = vpack.c.b16 %v1263, %v1262
        %v1398 = vpack.c.b16 %v1265, %v1264
        %v1399 = vpack.c.b16 %v1267, %v1266
        %v1400 = vpack.c.b16 %v1269, %v1268
        %v1401 = vpack.c.b16 %v1271, %v1270
        %v1402 = vpack.c.b16 %v1273, %v1272
        %v1403 = vpack.c.b16 %v1275, %v1274
        %v1404 = vpack.c.b16 %v1277, %v1276
        %v1405 = vpack.c.b16 %v1279, %v1278
        %v1406 = vpack.c.b16 %v1281, %v1280
        %v1407 = vpack.c.b16 %v1283, %v1282
        %v1408 = vpack.c.b16 %v1285, %v1284
        %v1409 = vpack.c.b16 %v1287, %v1286
        %v1410 = vpack.c.b16 %v1289, %v1288
        %v1411 = vpack.c.b16 %v1291, %v1290
        %v1412 = vpack.c.b16 %v1293, %v1292
        %v1413 = vpack.c.b16 %v1295, %v1294
        %v1414 = vpack.c.b16 %v1297, %v1296
        %v1415 = vpack.c.b16 %v1299, %v1298
        %v1416 = vpack.c.b16 %v1301, %v1300
        %v1417 = vpack.c.b16 %v1303, %v1302
        %v1418 = vpack.c.b16 %v1305, %v1304
        %v1419 = vpack.c.b16 %v1307, %v1306
        %v1420 = vpack.c.b16 %v1309, %v1308
        %v1421 = vpack.c.b16 %v1311, %v1310
        %v1422 = vpack.c.b16 %v1313, %v1312
        %v1423 = vpack.c.b16 %v1315, %v1314
        %v1424 = vpack.c.b16 %v1317, %v1316
        %v1425 = vpack.c.b16 %v1319, %v1318
        %v1426 = vpack.c.b16 %v1321, %v1320
        %v1427 = vpack.c.b16 %v1323, %v1322
        %v1428 = vpack.c.b16 %v1325, %v1324
        %v1429 = vpack.c.b16 %v1327, %v1326
        %v1430 = vpack.c.b16 %v1329, %v1328
        %v1431 = vpack.c.b16 %v1331, %v1330
        %v1432 = vpack.c.b16 %v1333, %v1332
        %v1433 = vpack.c.b16 %v1335, %v1334
        %v1434 = vpack.c.b16 %v1337, %v1336
        %v1435 = vpack.c.b16 %v1339, %v1338
        %v1436 = vpack.c.b16 %v1341, %v1340
        %v1437 = vpack.c.b16 %v1343, %v1342
        %v1438 = vpack.c.b16 %v1345, %v1344
        %v1439 = vpack.c.b16 %v1347, %v1346
        %v1440 = vpack.c.b16 %v1349, %v1348
        %v1441 = vpack.c.b16 %v1351, %v1350
        %v1442 = vpack.c.b16 %v1353, %v1352
        %v1443 = vpack.c.b16 %v1355, %v1354
        %v1444 = vpack.c.b16 %v1357, %v1356
        %v1445 = vpack.c.b16 %v1359, %v1358
        %v1446 = vpack.c.b16 %v1361, %v1360
        %v1447 = vpack.c.b16 %v1363, %v1362
        %v1448 = vpack.c.b16 %v1365, %v1364
        %v1449 = vpack.c.b16 %v1367, %v1366
        %v1450 = vpack.c.b16 %v1369, %v1368
        %v1451 = vpack.c.b16 %v1371, %v1370
        %v1452 = vpack.c.b16 %v1373, %v1372
        %v1453 = vpack.c.b16 %v1375, %v1374
        %v1454 = vpack.c.b16 %v1377, %v1376
        %v1455 = vpack.c.b16 %v1379, %v1378
        %v1456 = vpack.c.b16 %v1381, %v1380
        %v1457 = vpack.c.b16 %v1383, %v1382
        %v1458 = vpack.c.b16 %v1385, %v1384
        %v1459 = vpack.c.b16 %v1387, %v1386
        %1532 = vmatpush.bf16.msra.mxu0 %v1395
        %1533 = vmatpush.bf16.msra.mxu0 %v1394
        %1534 = vmatpush.bf16.msra.mxu0 %v1393
        %1535 = vmatpush.bf16.msra.mxu0 %v1392
        %1536 = vmatpush.bf16.msra.mxu0 %v1391
        %1537 = vmatpush.bf16.msra.mxu0 %v1390
        %1538 = vmatpush.bf16.msra.mxu0 %v1389
        %1539 = vmatpush.bf16.msra.mxu0 %v1388
        %1540 = vmatmul.bf16.gmra.mxu0 %v943
        %v1541 = vpop.f32.mrf.mxu0
        %v1542 = vadd.f32 %v1098, %v1541
        %v1543 = vpop.f32.mrf.mxu0
        %1544 = vdwg.mxu0
        %1545 = vmatpush.bf16.msra.mxu0 %v1403
        %1546 = vmatpush.bf16.msra.mxu0 %v1402
        %1547 = vmatpush.bf16.msra.mxu0 %v1401
        %1548 = vmatpush.bf16.msra.mxu0 %v1400
        %1549 = vmatpush.bf16.msra.mxu0 %v1399
        %1550 = vmatpush.bf16.msra.mxu0 %v1398
        %1551 = vmatpush.bf16.msra.mxu0 %v1397
        %1552 = vmatpush.bf16.msra.mxu0 %v1396
        %1553 = vmatmul.bf16.gmra.mxu0 %v944
        %v1554 = vpop.f32.mrf.mxu0
        %v1555 = vadd.f32 %v1542, %v1554
        %v1556 = vpop.f32.mrf.mxu0
        %1557 = vdwg.mxu0
        %1558 = vmatpush.bf16.msra.mxu0 %v1411
        %1559 = vmatpush.bf16.msra.mxu0 %v1410
        %1560 = vmatpush.bf16.msra.mxu0 %v1409
        %1561 = vmatpush.bf16.msra.mxu0 %v1408
        %1562 = vmatpush.bf16.msra.mxu0 %v1407
        %1563 = vmatpush.bf16.msra.mxu0 %v1406
        %1564 = vmatpush.bf16.msra.mxu0 %v1405
        %1565 = vmatpush.bf16.msra.mxu0 %v1404
        %1566 = vmatmul.bf16.gmra.mxu0 %v945
        %v1567 = vpop.f32.mrf.mxu0
        %v1568 = vadd.f32 %v1555, %v1567
        %v1569 = vpop.f32.mrf.mxu0
        %1570 = vdwg.mxu0
        %1571 = vmatpush.bf16.msra.mxu0 %v1419
        %1572 = vmatpush.bf16.msra.mxu0 %v1418
        %1573 = vmatpush.bf16.msra.mxu0 %v1417
        %1574 = vmatpush.bf16.msra.mxu0 %v1416
        %1575 = vmatpush.bf16.msra.mxu0 %v1415
        %1576 = vmatpush.bf16.msra.mxu0 %v1414
        %1577 = vmatpush.bf16.msra.mxu0 %v1413
        %1578 = vmatpush.bf16.msra.mxu0 %v1412
        %1579 = vmatmul.bf16.gmra.mxu0 %v946
        %v1580 = vpop.f32.mrf.mxu0
        %v1581 = vadd.f32 %v1568, %v1580
        %v1582 = vpop.f32.mrf.mxu0
        %1583 = vdwg.mxu0
        %1584 = vmatpush.bf16.msra.mxu0 %v1427
        %1585 = vmatpush.bf16.msra.mxu0 %v1426
        %1586 = vmatpush.bf16.msra.mxu0 %v1425
        %1587 = vmatpush.bf16.msra.mxu0 %v1424
        %1588 = vmatpush.bf16.msra.mxu0 %v1423
        %1589 = vmatpush.bf16.msra.mxu0 %v1422
        %1590 = vmatpush.bf16.msra.mxu0 %v1421
        %1591 = vmatpush.bf16.msra.mxu0 %v1420
        %1592 = vmatmul.bf16.gmra.mxu0 %v947
        %v1593 = vpop.f32.mrf.mxu0
        %v1594 = vadd.f32 %v1581, %v1593
        %v1595 = vpop.f32.mrf.mxu0
        %1596 = vdwg.mxu0
        %1597 = vmatpush.bf16.msra.mxu0 %v1435
        %1598 = vmatpush.bf16.msra.mxu0 %v1434
        %1599 = vmatpush.bf16.msra.mxu0 %v1433
        %1600 = vmatpush.bf16.msra.mxu0 %v1432
        %1601 = vmatpush.bf16.msra.mxu0 %v1431
        %1602 = vmatpush.bf16.msra.mxu0 %v1430
        %1603 = vmatpush.bf16.msra.mxu0 %v1429
        %1604 = vmatpush.bf16.msra.mxu0 %v1428
        %1605 = vmatmul.bf16.gmra.mxu0 %v948
        %v1606 = vpop.f32.mrf.mxu0
        %v1607 = vadd.f32 %v1594, %v1606
        %v1608 = vpop.f32.mrf.mxu0
        %1609 = vdwg.mxu0
        %1610 = vmatpush.bf16.msra.mxu0 %v1443
        %1611 = vmatpush.bf16.msra.mxu0 %v1442
        %1612 = vmatpush.bf16.msra.mxu0 %v1441
        %1613 = vmatpush.bf16.msra.mxu0 %v1440
        %1614 = vmatpush.bf16.msra.mxu0 %v1439
        %1615 = vmatpush.bf16.msra.mxu0 %v1438
        %1616 = vmatpush.bf16.msra.mxu0 %v1437
        %1617 = vmatpush.bf16.msra.mxu0 %v1436
        %1618 = vmatmul.bf16.gmra.mxu0 %v949
        %v1619 = vpop.f32.mrf.mxu0
        %v1620 = vadd.f32 %v1607, %v1619
        %v1621 = vpop.f32.mrf.mxu0
        %1622 = vdwg.mxu0
        %1623 = vmatpush.bf16.msra.mxu0 %v1451
        %1624 = vmatpush.bf16.msra.mxu0 %v1450
        %1625 = vmatpush.bf16.msra.mxu0 %v1449
        %1626 = vmatpush.bf16.msra.mxu0 %v1448
        %1627 = vmatpush.bf16.msra.mxu0 %v1447
        %1628 = vmatpush.bf16.msra.mxu0 %v1446
        %1629 = vmatpush.bf16.msra.mxu0 %v1445
        %1630 = vmatpush.bf16.msra.mxu0 %v1444
        %1631 = vmatmul.bf16.gmra.mxu0 %v950
        %v1632 = vpop.f32.mrf.mxu0
        %v1633 = vadd.f32 %v1620, %v1632
        %v1634 = vpop.f32.mrf.mxu0
        %1635 = vdwg.mxu0
        %1636 = vmatpush.bf16.msra.mxu0 %v1459
        %1637 = vmatpush.bf16.msra.mxu0 %v1458
        %1638 = vmatpush.bf16.msra.mxu0 %v1457
        %1639 = vmatpush.bf16.msra.mxu0 %v1456
        %1640 = vmatpush.bf16.msra.mxu0 %v1455
        %1641 = vmatpush.bf16.msra.mxu0 %v1454
        %1642 = vmatpush.bf16.msra.mxu0 %v1453
        %1643 = vmatpush.bf16.msra.mxu0 %v1452
        %1644 = vmatmul.bf16.gmra.mxu0 %v951
        %v1645 = vpop.f32.mrf.mxu0
        %v1646 = vadd.f32 %v1633, %v1645
        %v1647 = vpop.f32.mrf.mxu0
        %1648 = vdwg.mxu0
        %vm1649 = vcmp.ge.f32.partialorder %v1646, 0.0
        %v1650 = vmul.f32 %v1646, 0.2
        %v1651 = vsel %vm1649, %v1646, %v1650
        %v1653 = vrot.slane %v1651, 2
        %v1655 = vld [vmem:[%s5] sm:$0x1]
        %v1657 = vperm.slane %v1655, 0
        %v1659 = vmul.f32 %v1651, %v1657
        %v1660 = vmul.f32 %v1653, %v1657
        %v1661 = vsel %vm333, %v1659, 0.0
        %1662 = vadd.xlane.f32.xlu0 %v1661
        %v1663 = vpop.xlane.xlu0 %1662
        %v1664 = vsel %vm333, %v1660, 0.0
        %1665 = vadd.xlane.f32.xlu0 %v1664
        %v1666 = vpop.xlane.xlu0 %1665
        %v1667 = vld [vmem:[#allocation5] sm:$0x1]
        %v1669 = vperm.slane %v1667, 0
        %1670 = vset.pattern.permute.xlu0 0
        %1671 = vperm.xlu0 %1670, %v1669
        %v1672 = vpop.permute.xlu0 %1671
        %v1674 = vadd.f32 %v1663, %v1672
        %v1675 = vadd.f32 %v1666, %v1672
        %v1678 = vlaneseq
        %v1679 = vand.u32 %v1678, 127
        %v1680 = vperm.slane %v1674, %v1679
        %v1681 = vperm.slane %v1675, %v1679
        %vm1682 = vcmask 1041409
        %v1683 = vsel %vm1682, %v1681, %v1680
        %vm1685 = vcmask 9216
        %1686 = vst.msk [vmem:[%s273] sm:$0x3] %vm1685, %v1683
        %s1687 = sand.u32 %s183, 1
        %s1688 = scalar_lea.sflag [#allocation7], %s1687
        %s1689 = sand.u32 %s183, 1
        %s1690 = smul.addr %s1689, 2
        %s1691 = scalar_lea.vmem [#allocation6], %s1690
        // Predicated region
        $region49: #{discriminator_forward.5} parent=47 // pred_check
          %p1692 = pneg %p193
        $region50: #{discriminator_forward.5} parent=47 // pred_check_branch
          %1694 = sbr.rel (%p1692) target = $region52
        $region51: #{discriminator_forward.5} parent=47 // pred_region
          %1696 = vsyncadd %s1688, 0
          %s1697 = smul.addr %s23, 2
          %s1698 = scalar_lea.hbm %s7, %s1697
          %s1700 = sshll.u32 %s1691, 4
          %s1701 = int_to_ptr.vmem [resolvable:$true] %s1700
          %s1702 = sshll.u32 %s1698, 4
          %s1703 = int_to_ptr.hbm [resolvable:$true] %s1702
          %1705 = dma.vmem_to_hbm [thread:$0]  %s1701, 32, %s1703, %s1688
        $region52: #{discriminator_forward.5} parent=47 // pred_fallthru
          _
      $region48: #{discriminator_forward.5} parent=5 // pred_fallthru
        _
      %p1706 = scmp.le.s32.totalorder 2, %s18
      // Predicated region
      $region53: #{discriminator_forward.5} parent=5 // pred_check
        %p1707 = pneg %p1706
      $region54: #{discriminator_forward.5} parent=5 // pred_check_branch
        %1709 = sbr.rel (%p1707) target = $region56
      $region55: #{discriminator_forward.5} parent=5 // pred_region
        %s1710 = ssub.s32 %s18, 2
        // Predicated region
        $region57: #{discriminator_forward.5} parent=55 // pred_check
          %p1711 = pneg %p199
        $region58: #{discriminator_forward.5} parent=55 // pred_check_branch
          %1713 = sbr.rel (%p1711) target = $region60
        $region59: #{discriminator_forward.5} parent=55 // pred_region
          %s1714 = sand.u32 %s184, 1
          %s1715 = scalar_lea.sflag [#allocation7], %s1714
          %s1716 = sand.u32 %s184, 1
          %s1717 = smul.addr %s1716, 2
          %s1718 = scalar_lea.vmem [#allocation6], %s1717
          %1720 = dma.done %s1715, 32
        $region60: #{discriminator_forward.5} parent=55 // pred_fallthru
          _
      $region56: #{discriminator_forward.5} parent=5 // pred_fallthru
        _
    $region6: #{discriminator_forward.5} parent=1 // loop_footer
      %s22 = sadd.s32 1, %s18
    $region7: #{discriminator_forward.5} parent=1 // loop_footer_branch
      %17 = sbr.rel target = $region3
    $region8: #{discriminator_forward.5} parent=1 // loop_exit
      _
    %1721 = vsyncpa [#allocation7], 1
    %s1722 = scalar_lea.sflag [#allocation7], 1
    %1723 = vsyncpa %s1722, 1

</llo_original>
